<compile_context>
chip_gen: v5e
topology: v5e:2x2
jax: 0.10.0
libtpu: 0.0.40
codegen_flags: <defaults>
</compile_context>

<pallas_src>
import functools

import jax
import jax.numpy as jnp
from jax.experimental import pallas as pl
from jax.experimental.pallas import tpu as pltpu

COMPLEX_SIZE = 2          # real/imag channels
LN_EPS = 1e-5             # nn.LayerNorm default
USE_TANH_GELU = False     # set True on v5e if the MLP is VALU-bound (moves GELU to EUP)


# ----------------------------------------------------------------------------
# In-kernel helpers
# ----------------------------------------------------------------------------
def _ln(x, g, b, eps=LN_EPS):
    """LayerNorm over the last axis. g, b are (1, E) and broadcast over rows."""
    mu = jnp.mean(x, axis=-1, keepdims=True)
    var = jnp.mean(jnp.square(x - mu), axis=-1, keepdims=True)
    return (x - mu) * jax.lax.rsqrt(var + eps) * g + b


def _erf(x):
    """erf via Abramowitz & Stegun 7.1.26 (|abs err| < 1.5e-7): exp + VPU only."""
    a1, a2, a3, a4, a5 = 0.254829592, -0.284496736, 1.421413741, -1.453152027, 1.061405429
    p = 0.3275911
    ax = jnp.abs(x)
    t = 1.0 / (1.0 + p * ax)
    poly = ((((a5 * t + a4) * t + a3) * t + a2) * t + a1) * t
    y = 1.0 - poly * jnp.exp(-ax * ax)
    return jnp.where(x >= 0, y, -y)


def _gelu(x):
    """GELU. Exact (erf) by default to match torch.nn.GELU; tanh variant optional."""
    if USE_TANH_GELU:
        return 0.5 * x * (1.0 + jnp.tanh(0.7978845608028654 * (x + 0.044715 * x * x * x)))
    return 0.5 * x * (1.0 + _erf(x * 0.7071067811865476))


# ----------------------------------------------------------------------------
# Spec / tiling helpers
# ----------------------------------------------------------------------------
def _const_spec(shape):
    """Grid-invariant operand (weights / biases). Index map is constant, so the
    DMA only fires once per outer index change; block stays VMEM-resident.
    (Single-buffering via pl.Buffered(1) intentionally not used here.)"""
    return pl.BlockSpec(shape, lambda *idx: (0,) * len(shape))


def _pick_tile(n, unit, max_tile):
    """Largest divisor of n that is <= max_tile and a multiple of `unit`; falls back to n."""
    if n <= max_tile:
        return n
    t = (max_tile // unit) * unit
    while t >= unit:
        if n % t == 0:
            return t
        t -= unit
    return n


_VMEM_CEILING_CACHE = [None]


def _vmem_ceiling():
    """85% of this generation's physical VMEM (v7x: ~54 MiB, v5e/v6e: ~108 MiB)."""
    if _VMEM_CEILING_CACHE[0] is None:
        cap = 128 << 20
        try:
            cap = int(getattr(pltpu.get_tpu_info(), "vmem_capacity_bytes", cap))
        except Exception:
            pass
        _VMEM_CEILING_CACHE[0] = max(int(cap * 0.85), 16 << 20)
    return _VMEM_CEILING_CACHE[0]


def _mosaic_params(semantics, block_bytes):
    """CompilerParams with a generation-aware VMEM limit derived from the footprint."""
    limit = int(min(max(block_bytes + (4 << 20), 32 << 20), _vmem_ceiling()))
    return pltpu.CompilerParams(dimension_semantics=semantics,
                                vmem_limit_bytes=limit)


# ----------------------------------------------------------------------------
# Kernels
# ----------------------------------------------------------------------------
def coil_combine_kernel(ir_ref, ii_ref, sr_ref, si_ref, o_ref):
    """reduce_operator: sum_coil conj(S) * img on a flattened spatial tile.
    Output block is (1, 2, thw): real plane then imaginary plane."""
    ir = ir_ref[0]          # (C, THW)
    ii = ii_ref[0]
    sr = sr_ref[0]
    si = si_ref[0]
    o_ref[0, :1] = jnp.sum(sr * ir + si * ii, axis=0, keepdims=True)
    o_ref[0, 1:] = jnp.sum(sr * ii - si * ir, axis=0, keepdims=True)


def patch_embed_kernel(x_ref, w_ref, b_ref, pos_ref, o_ref):
    """Patch matmul (bf16 MXU) + bias + positional embedding for a token tile."""
    o_ref[0] = (jnp.dot(x_ref[0].astype(jnp.bfloat16), w_ref[...],
                        preferred_element_type=jnp.float32)
                + b_ref[...] + pos_ref[...])


def block_kernel(xf_ref, g1_ref, b1_ref, wq_ref, wk_ref, wv_ref,
                 wproj_ref, bproj_ref, g2_ref, b2_ref, w1_ref, fb1_ref,
                 w2_ref, fb2_ref, o_ref, *, num_heads, q_tile, kv_tile):
    """Fused transformer block for one (batch, q-tile) grid point:
    LN1 -> MHSA (KV-tiled online softmax, per-head accumulation into the output
    projection) -> residual -> LN2 -> fc1 -> GELU -> fc2 -> residual.

    xf_ref holds the FULL token sequence for this batch element (constant block
    index along the q-tile grid axis, so it is DMA'd only once per batch
    element); K and V are recomputed from it per q-tile, which is cheap
    compared to the attention and MLP matmuls and avoids any extra HBM traffic.
    """
    xf = xf_ref[0]                              # (S, E) f32
    S, E = xf.shape
    hd = E // num_heads
    nk = S // kv_tile

    # K / V from the full sequence (attention scale is folded into wq at init).
    hf = _ln(xf, g1_ref[...], b1_ref[...]).astype(jnp.bfloat16)
    kb = jnp.dot(hf, wk_ref[...], preferred_element_type=jnp.float32).astype(jnp.bfloat16)
    vb = jnp.dot(hf, wv_ref[...], preferred_element_type=jnp.float32).astype(jnp.bfloat16)

    # Q for this q-tile only.
    qi = pl.program_id(1)
    off = pl.multiple_of(qi * q_tile, q_tile)
    xq = xf_ref[0, pl.ds(off, q_tile), :]       # (Tq, E) f32
    hq = _ln(xq, g1_ref[...], b1_ref[...]).astype(jnp.bfloat16)
    qb = jnp.dot(hq, wq_ref[...], preferred_element_type=jnp.float32).astype(jnp.bfloat16)

    # ---- attention: per-head flash loop, accumulate directly into the proj ----
    a = jnp.zeros((q_tile, E), jnp.float32)
    for i in range(num_heads):
        sl = slice(i * hd, (i + 1) * hd)
        q_h = qb[:, sl]                                             # (Tq, hd) bf16
        m = jnp.full((q_tile, 1), -jnp.inf, jnp.float32)
        l = jnp.zeros((q_tile, 1), jnp.float32)
        acc = jnp.zeros((q_tile, hd), jnp.float32)
        for t in range(nk):
            rows = slice(t * kv_tile, (t + 1) * kv_tile)
            k_t = kb[rows, sl]                                      # (Tk, hd) bf16
            v_t = vb[rows, sl]
            s = jax.lax.dot_general(q_h, k_t, (((1,), (1,)), ((), ())),
                                    preferred_element_type=jnp.float32)  # (Tq, Tk)
            m_new = jnp.maximum(m, jnp.max(s, axis=-1, keepdims=True))
            alpha = jnp.exp(m - m_new)
            p = jnp.exp(s - m_new)
            l = alpha * l + jnp.sum(p, axis=-1, keepdims=True)
            acc = alpha * acc + jnp.dot(p.astype(jnp.bfloat16), v_t,
                                        preferred_element_type=jnp.float32)
            m = m_new
        o_h = acc * pl.reciprocal(l, approx=True)                   # (Tq, hd)
        a = a + jnp.dot(o_h.astype(jnp.bfloat16), wproj_ref[i],
                        preferred_element_type=jnp.float32)         # (Tq, E)

    x1 = xq + a + bproj_ref[...]

    # ---- MLP (fc1 -> GELU -> fc2) + residual --------------------------------
    h2 = _ln(x1, g2_ref[...], b2_ref[...]).astype(jnp.bfloat16)
    h1 = (jnp.dot(h2, w1_ref[...], preferred_element_type=jnp.float32)
          + fb1_ref[...])                                            # (Tq, hidden)
    g = _gelu(h1)
    y = x1 + (jnp.dot(g.astype(jnp.bfloat16), w2_ref[...],
                      preferred_element_type=jnp.float32) + fb2_ref[...])
    o_ref[0] = y


def head_kernel(x_ref, g_ref, b_ref, wh_ref, bh_ref, o_ref):
    """Final LayerNorm + head linear for a token tile.
    Output is TRANSPOSED to (D, tokens) so the lane axis is the (long) token axis
    instead of the sub-128 head width D = C*ph*pw -> unmasked stores."""
    h = _ln(x_ref[0], g_ref[...], b_ref[...]).astype(jnp.bfloat16)   # (ts, E)
    y = jax.lax.dot_general(wh_ref[...], h, (((0,), (1,)), ((), ())),
                            preferred_element_type=jnp.float32)      # (D, ts)
    o_ref[0] = y + bh_ref[...]


# ----------------------------------------------------------------------------
# pallas_call wrappers
# ----------------------------------------------------------------------------
def coil_combine(ir, ii, sr, si):
    """Inputs (N, C, H*W) f32 planes; output (N, 2, H*W) interleaved real/imag."""
    N, C, HW = ir.shape
    thw = _pick_tile(HW, 128, 8192)
    nt = HW // thw
    in_spec = pl.BlockSpec((1, C, thw), lambda n, t: (n, 0, t))
    out_spec = pl.BlockSpec((1, 2, thw), lambda n, t: (n, 0, t))
    block_bytes = 2 * 4 * (4 * C * thw + 2 * thw)
    return pl.pallas_call(
        coil_combine_kernel,
        grid=(N, nt),
        in_specs=[in_spec, in_spec, in_spec, in_spec],
        out_specs=out_spec,
        out_shape=jax.ShapeDtypeStruct((N, 2, HW), jnp.float32),
        compiler_params=_mosaic_params(("parallel", "parallel"), block_bytes),
    )(ir, ii, sr, si)


def patch_embed(x, w, b, pos):
    """x: (N, S, P) f32, w: (P, E) bf16, b: (1, E) f32, pos: (S, E) f32."""
    N, S, P = x.shape
    E = w.shape[1]
    ts = _pick_tile(S, 8, 512)
    nt = S // ts
    block_bytes = 2 * (4 * ts * P + 2 * P * E + 4 * E + 4 * ts * E + 4 * ts * E)
    return pl.pallas_call(
        patch_embed_kernel,
        grid=(N, nt),
        in_specs=[pl.BlockSpec((1, ts, P), lambda n, s: (n, s, 0)),
                  _const_spec((P, E)),
                  _const_spec((1, E)),
                  pl.BlockSpec((ts, E), lambda n, s: (s, 0))],
        out_specs=pl.BlockSpec((1, ts, E), lambda n, s: (n, s, 0)),
        out_shape=jax.ShapeDtypeStruct((N, S, E), jnp.float32),
        compiler_params=_mosaic_params(("parallel", "parallel"), block_bytes),
    )(x, w, b, pos)


def transformer_block(x, blk, *, num_heads):
    """One fused ViT block; grid over (batch, q-tiles), KV-tiled inside."""
    N, S, E = x.shape
    Hd = blk["fc1_w"].shape[1]
    hd = E // num_heads
    tq = _pick_tile(S, 8, 512)
    nq = S // tq
    tk = _pick_tile(S, 128, 1024)

    kern = functools.partial(block_kernel, num_heads=num_heads, q_tile=tq, kv_tile=tk)

    bf, f32 = 2, 4
    w_bytes = bf * (3 * E * E + E * E + E * Hd + Hd * E) + f32 * (7 * E + Hd)
    io_bytes = f32 * (S * E + tq * E)                      # x (full seq) in + out tile
    live = (f32 * S * E + bf * S * E                       # LN1(x) f32 + bf16
            + 2 * bf * S * E                               # k, v (bf16)
            + f32 * tq * E + bf * tq * E                   # LN1(xq), q
            + f32 * tq * tk + bf * tq * tk                 # scores + probs (one head)
            + f32 * (3 * tq * E)                           # a, x1, LN2(x1)
            + f32 * 2 * tq * Hd + bf * tq * Hd)            # fc1 out, GELU, bf16 copy
    block_bytes = 2 * (io_bytes + w_bytes) + live          # 2x for pipeline buffers

    return pl.pallas_call(
        kern,
        grid=(N, nq),
        in_specs=[pl.BlockSpec((1, S, E), lambda n, q: (n, 0, 0)),   # full sequence
                  _const_spec((1, E)), _const_spec((1, E)),          # ln1 gamma/beta
                  _const_spec((E, E)),                               # wq (scale folded)
                  _const_spec((E, E)),                               # wk
                  _const_spec((E, E)),                               # wv
                  _const_spec((num_heads, hd, E)),                   # proj weight, per head
                  _const_spec((1, E)),                               # proj bias
                  _const_spec((1, E)), _const_spec((1, E)),          # ln2 gamma/beta
                  _const_spec((E, Hd)), _const_spec((1, Hd)),        # fc1 weight/bias
                  _const_spec((Hd, E)), _const_spec((1, E))],        # fc2 weight/bias
        out_specs=pl.BlockSpec((1, tq, E), lambda n, q: (n, q, 0)),
        out_shape=jax.ShapeDtypeStruct((N, S, E), jnp.float32),
        compiler_params=_mosaic_params(("parallel", "parallel"), block_bytes),
    )(x, blk["ln1_g"], blk["ln1_b"], blk["q_w"], blk["k_w"], blk["v_w"],
      blk["proj_w"], blk["proj_b"], blk["ln2_g"], blk["ln2_b"],
      blk["fc1_w"], blk["fc1_b"], blk["fc2_w"], blk["fc2_b"])


def head_proj(x, g, b, wh, bh):
    """Final LN + head. Returns TRANSPOSED tokens (N, D, S), D = C*ph*pw."""
    N, S, E = x.shape
    D = wh.shape[1]
    ts = _pick_tile(S, 128, 512)
    nt = S // ts
    block_bytes = 2 * (4 * ts * E + 2 * E * D + 4 * D + 4 * D * ts) + 4 * ts * E
    return pl.pallas_call(
        head_kernel,
        grid=(N, nt),
        in_specs=[pl.BlockSpec((1, ts, E), lambda n, s: (n, s, 0)),
                  _const_spec((1, E)), _const_spec((1, E)),
                  _const_spec((E, D)), _const_spec((D, 1))],
        out_specs=pl.BlockSpec((1, D, ts), lambda n, s: (n, 0, s)),
        out_shape=jax.ShapeDtypeStruct((N, D, S), jnp.float32),
        compiler_params=_mosaic_params(("parallel", "parallel"), block_bytes),
    )(x, g, b, wh, bh)


# ----------------------------------------------------------------------------
# Parameters (deterministic synthetic init mirroring the PyTorch shapes)
# ----------------------------------------------------------------------------
def init_params(key, *, in_ch, embed, depth, num_heads, mlp_ratio, patch, grid_hw):
    assert embed % num_heads == 0, "embedding_dim must be divisible by num_heads"
    ph = pw = patch
    hidden = int(embed * mlp_ratio)
    hd = embed // num_heads
    scale = hd ** -0.5                                       # qk_scale=None default
    keys = list(jax.random.split(key, 128))
    kit = iter(keys)

    def w(shape, s=0.02):
        return (s * jax.random.normal(next(kit), shape)).astype(jnp.float32)

    def mm(x):   # matmul operands in bf16 (MXU rate + half the weight HBM traffic)
        return x.astype(jnp.bfloat16)

    params = {}
    # PatchEmbedding: Conv2d(in_ch, embed, kernel=patch, stride=patch) -> matmul
    conv_w = w((embed, in_ch, ph, pw))                               # torch layout
    params["patch_w"] = mm(conv_w.reshape(embed, in_ch * ph * pw).T)  # (P, E) bf16
    params["patch_b"] = w((1, embed))
    params["pos_emb"] = w((1, embed, grid_hw[0], grid_hw[1]))

    blocks = []
    for _ in range(depth):
        wq = w((embed, embed)).T          # (E_in, E_out)
        wk = w((embed, embed)).T
        wv = w((embed, embed)).T
        wp = w((embed, embed)).T
        blocks.append({
            "ln1_g": jnp.ones((1, embed), jnp.float32),
            "ln1_b": jnp.zeros((1, embed), jnp.float32),
            "q_w": mm(wq * scale),                                   # scale folded (f32)
            "k_w": mm(wk),
            "v_w": mm(wv),
            "proj_w": mm(wp).reshape(num_heads, hd, embed),          # per-head rows
            "proj_b": w((1, embed)),
            "ln2_g": jnp.ones((1, embed), jnp.float32),
            "ln2_b": jnp.zeros((1, embed), jnp.float32),
            "fc1_w": mm(w((hidden, embed)).T),                       # (E, hidden)
            "fc1_b": w((1, hidden)),
            "fc2_w": mm(w((embed, hidden)).T),                       # (hidden, E)
            "fc2_b": w((1, embed)),
        })
    params["blocks"] = blocks
    params["norm_g"] = jnp.ones((1, embed), jnp.float32)
    params["norm_b"] = jnp.zeros((1, embed), jnp.float32)
    params["head_w"] = mm(w((in_ch * ph * pw, embed)).T)             # (E, D)
    params["head_b"] = w((in_ch * ph * pw, 1))                       # (D, 1) for (D, ts) out
    return params


# ----------------------------------------------------------------------------
# VisionTransformer2D forward (MHSA blocks; use_gpsa=(-1,-1) => no GPSA blocks)
# ----------------------------------------------------------------------------
def vit2d_forward(image_nchw, params, *, patch, num_heads):
    N, C, H, W = image_nchw.shape
    ph = pw = patch
    Hp, Wp = H // ph, W // pw
    S = Hp * Wp
    E = params["patch_b"].shape[1]

    # TODO(synk): padding to a multiple of patch_size and bilinear resize of the
    # positional embedding are skipped (demo shapes: H,W divisible, grid == avg grid).

    # normalized=True : per-sample whitening (torch std is unbiased, ddof=1)
    flat = image_nchw.reshape(N, -1)
    mean = flat.mean(axis=-1)
    std = flat.std(axis=-1, ddof=1)
    xn = (image_nchw - mean[:, None, None, None]) / std[:, None, None, None]

    # patchify: (N, C, Hp, ph, Wp, pw) -> (N, S, C*ph*pw)   (cheap XLA glue; image is tiny)
    patches = xn.reshape(N, C, Hp, ph, Wp, pw).transpose(0, 2, 4, 1, 3, 5)
    patches = patches.reshape(N, S, C * ph * pw)

    # positional embedding stored as (1, E, Hp, Wp); added before flatten in torch
    pos = params["pos_emb"].reshape(E, S).T                          # (S, E)
    tokens = patch_embed(patches, params["patch_w"], params["patch_b"], pos)

    for blk in params["blocks"]:
        tokens = transformer_block(tokens, blk, num_heads=num_heads)

    out_t = head_proj(tokens, params["norm_g"], params["norm_b"],
                      params["head_w"], params["head_b"])            # (N, D, S), D=C*ph*pw

    # seq2img from the transposed head output: d indexes (c, i, j), s indexes (hp, wp)
    out = out_t.reshape(N, C, ph, pw, Hp, Wp).transpose(0, 1, 4, 2, 5, 3)
    out = out.reshape(N, C, H, W)

    # unnorm
    out = out * std[:, None, None, None] + mean[:, None, None, None]
    return out


# ----------------------------------------------------------------------------
# Full ImageDomainMRIViT2D forward
# ----------------------------------------------------------------------------
def image_domain_mri_vit2d_forward(masked_kspace, sensitivity_map, params, *,
                                   patch=4, num_heads=4):
    N, C, H, W, _ = masked_kspace.shape
    # backward operator: centered, orthonormal 2D inverse FFT over spatial dims (2, 3).
    # (pure JAX glue — there is no Pallas FFT primitive.)
    kc = masked_kspace[..., 0] + 1j * masked_kspace[..., 1]
    kc = jnp.fft.ifftshift(kc, axes=(2, 3))
    img = jnp.fft.ifftn(kc, axes=(2, 3), norm="ortho")
    img = jnp.fft.fftshift(img, axes=(2, 3))
    ir = jnp.real(img).astype(jnp.float32).reshape(N, C, H * W)
    ii = jnp.imag(img).astype(jnp.float32).reshape(N, C, H * W)
    sr = sensitivity_map[..., 0].astype(jnp.float32).reshape(N, C, H * W)
    si = sensitivity_map[..., 1].astype(jnp.float32).reshape(N, C, H * W)

    # reduce_operator over coils (Pallas kernel): sum_coil conj(S) * img
    image = coil_combine(ir, ii, sr, si).reshape(N, 2, H, W)         # (N, 2, H, W)

    out_chw = vit2d_forward(image, params, patch=patch, num_heads=num_heads)
    return jnp.transpose(out_chw, (0, 2, 3, 1))                      # (N, H, W, 2)


# ----------------------------------------------------------------------------
# Demo
# ----------------------------------------------------------------------------
if __name__ == "__main__":
    key = jax.random.PRNGKey(0)
    k_ksp, k_sens, k_par = jax.random.split(key, 3)

    N, COIL, H, W = 2, 3, 16, 16
    PATCH = 4
    EMBED = 32
    DEPTH = 2
    HEADS = 4
    MLP_RATIO = 4.0

    masked_kspace = jax.random.normal(k_ksp, (N, COIL, H, W, 2), dtype=jnp.float32)
    sensitivity_map = jax.random.normal(k_sens, (N, COIL, H, W, 2), dtype=jnp.float32)

    params = init_params(k_par, in_ch=COMPLEX_SIZE, embed=EMBED, depth=DEPTH,
                         num_heads=HEADS, mlp_ratio=MLP_RATIO, patch=PATCH,
                         grid_hw=(H // PATCH, W // PATCH))

    fwd = jax.jit(functools.partial(image_domain_mri_vit2d_forward,
                                    patch=PATCH, num_heads=HEADS))
    out = fwd(masked_kspace, sensitivity_map, params)
    out = jax.block_until_ready(out)
    assert out.shape == (N, H, W, 2) and out.dtype == jnp.float32
    print("KERNEL_OK")
</pallas_src>

<mosaic_0001>
module attributes {stable_mosaic.version = 11 : i64} {
  func.func @coil_combine_kernel(%arg0: i32, %arg1: i32, %arg2: memref<1x3x256xf32, #tpu.memory_space<vmem>>, %arg3: memref<1x3x256xf32, #tpu.memory_space<vmem>>, %arg4: memref<1x3x256xf32, #tpu.memory_space<vmem>>, %arg5: memref<1x3x256xf32, #tpu.memory_space<vmem>>, %arg6: memref<1x2x256xf32, #tpu.memory_space<vmem>>) attributes {dimension_semantics = [#tpu.dimension_semantics<parallel>, #tpu.dimension_semantics<parallel>], iteration_bounds = array<i64: 2, 1>, scalar_prefetch = 0 : i64, scratch_operands = 0 : i64, tpu.core_type = #tpu.core_type<tc>, window_params = [{transform_indices = @transform_0, window_bounds = array<i64: 1, 3, 256>}, {transform_indices = @transform_1, window_bounds = array<i64: 1, 3, 256>}, {transform_indices = @transform_2, window_bounds = array<i64: 1, 3, 256>}, {transform_indices = @transform_3, window_bounds = array<i64: 1, 3, 256>}, {transform_indices = @transform_4, window_bounds = array<i64: 1, 2, 256>}]} {
    %c0 = arith.constant 0 : index
    %c0_0 = arith.constant 0 : index
    %c0_1 = arith.constant 0 : index
    %0 = vector.load %arg2[%c0, %c0_0, %c0_1] : memref<1x3x256xf32, #tpu.memory_space<vmem>>, vector<1x3x256xf32>
    %1 = vector.shape_cast %0 : vector<1x3x256xf32> to vector<3x256xf32>
    %c0_2 = arith.constant 0 : index
    %c0_3 = arith.constant 0 : index
    %c0_4 = arith.constant 0 : index
    %2 = vector.load %arg3[%c0_2, %c0_3, %c0_4] : memref<1x3x256xf32, #tpu.memory_space<vmem>>, vector<1x3x256xf32>
    %3 = vector.shape_cast %2 : vector<1x3x256xf32> to vector<3x256xf32>
    %c0_5 = arith.constant 0 : index
    %c0_6 = arith.constant 0 : index
    %c0_7 = arith.constant 0 : index
    %4 = vector.load %arg4[%c0_5, %c0_6, %c0_7] : memref<1x3x256xf32, #tpu.memory_space<vmem>>, vector<1x3x256xf32>
    %5 = vector.shape_cast %4 : vector<1x3x256xf32> to vector<3x256xf32>
    %c0_8 = arith.constant 0 : index
    %c0_9 = arith.constant 0 : index
    %c0_10 = arith.constant 0 : index
    %6 = vector.load %arg5[%c0_8, %c0_9, %c0_10] : memref<1x3x256xf32, #tpu.memory_space<vmem>>, vector<1x3x256xf32>
    %7 = vector.shape_cast %6 : vector<1x3x256xf32> to vector<3x256xf32>
    %8 = arith.mulf %5, %1 : vector<3x256xf32>
    %9 = arith.mulf %7, %3 : vector<3x256xf32>
    %10 = arith.addf %8, %9 : vector<3x256xf32>
    %cst = arith.constant dense<0.000000e+00> : vector<256xf32>
    %11 = vector.multi_reduction <add>, %10, %cst [0] : vector<3x256xf32> to vector<256xf32>
    %12 = vector.shape_cast %11 : vector<256xf32> to vector<1x256xf32>
    %c0_11 = arith.constant 0 : index
    %c0_12 = arith.constant 0 : index
    %c0_13 = arith.constant 0 : index
    %13 = vector.load %arg6[%c0_11, %c0_12, %c0_13] : memref<1x2x256xf32, #tpu.memory_space<vmem>>, vector<1x1x256xf32>
    %14 = vector.shape_cast %13 : vector<1x1x256xf32> to vector<1x256xf32>
    %15 = vector.shape_cast %12 : vector<1x256xf32> to vector<1x1x256xf32>
    tpu.vector_store %arg6[%c0_11, %c0_12, %c0_13], %15 {strides = array<i32>} : memref<1x2x256xf32, #tpu.memory_space<vmem>>, vector<1x1x256xf32>,
    %16 = arith.mulf %5, %3 : vector<3x256xf32>
    %17 = arith.mulf %7, %1 : vector<3x256xf32>
    %18 = arith.subf %16, %17 : vector<3x256xf32>
    %cst_14 = arith.constant dense<0.000000e+00> : vector<256xf32>
    %19 = vector.multi_reduction <add>, %18, %cst_14 [0] : vector<3x256xf32> to vector<256xf32>
    %20 = vector.shape_cast %19 : vector<256xf32> to vector<1x256xf32>
    %c0_15 = arith.constant 0 : index
    %c1 = arith.constant 1 : index
    %c0_16 = arith.constant 0 : index
    %21 = vector.load %arg6[%c0_15, %c1, %c0_16] : memref<1x2x256xf32, #tpu.memory_space<vmem>>, vector<1x1x256xf32>
    %22 = vector.shape_cast %21 : vector<1x1x256xf32> to vector<1x256xf32>
    %23 = vector.shape_cast %20 : vector<1x256xf32> to vector<1x1x256xf32>
    tpu.vector_store %arg6[%c0_15, %c1, %c0_16], %23 {strides = array<i32>} : memref<1x2x256xf32, #tpu.memory_space<vmem>>, vector<1x1x256xf32>,
    return
  }
  func.func @transform_0(%arg0: i32, %arg1: i32) -> (i32, i32, i32) {
    %c0_i32 = arith.constant 0 : i32
    %c0_i32_0 = arith.constant 0 : i32
    return %arg0, %c0_i32, %arg1 : i32, i32, i32
  }
  func.func @transform_1(%arg0: i32, %arg1: i32) -> (i32, i32, i32) {
    %c0_i32 = arith.constant 0 : i32
    %c0_i32_0 = arith.constant 0 : i32
    return %arg0, %c0_i32, %arg1 : i32, i32, i32
  }
  func.func @transform_2(%arg0: i32, %arg1: i32) -> (i32, i32, i32) {
    %c0_i32 = arith.constant 0 : i32
    %c0_i32_0 = arith.constant 0 : i32
    return %arg0, %c0_i32, %arg1 : i32, i32, i32
  }
  func.func @transform_3(%arg0: i32, %arg1: i32) -> (i32, i32, i32) {
    %c0_i32 = arith.constant 0 : i32
    %c0_i32_0 = arith.constant 0 : i32
    return %arg0, %c0_i32, %arg1 : i32, i32, i32
  }
  func.func @transform_4(%arg0: i32, %arg1: i32) -> (i32, i32, i32) {
    %c0_i32 = arith.constant 0 : i32
    %c0_i32_0 = arith.constant 0 : i32
    return %arg0, %c0_i32, %arg1 : i32, i32, i32
  }
}

module attributes {stable_mosaic.version = 11 : i64} {
  func.func @patch_embed_kernel(%arg0: i32, %arg1: i32, %arg2: memref<1x16x32xf32, #tpu.memory_space<vmem>>, %arg3: memref<32x32xbf16, #tpu.memory_space<vmem>>, %arg4: memref<1x32xf32, #tpu.memory_space<vmem>>, %arg5: memref<16x32xf32, #tpu.memory_space<vmem>>, %arg6: memref<1x16x32xf32, #tpu.memory_space<vmem>>) attributes {dimension_semantics = [#tpu.dimension_semantics<parallel>, #tpu.dimension_semantics<parallel>], iteration_bounds = array<i64: 2, 1>, scalar_prefetch = 0 : i64, scratch_operands = 0 : i64, tpu.core_type = #tpu.core_type<tc>, window_params = [{transform_indices = @transform_0, window_bounds = array<i64: 1, 16, 32>}, {pipeline_mode = #tpu.pipeline_mode<synchronous>, transform_indices = @transform_1, window_bounds = array<i64: 32, 32>}, {pipeline_mode = #tpu.pipeline_mode<synchronous>, transform_indices = @transform_2, window_bounds = array<i64: 1, 32>}, {transform_indices = @transform_3, window_bounds = array<i64: 16, 32>}, {transform_indices = @transform_4, window_bounds = array<i64: 1, 16, 32>}]} {
    %c0 = arith.constant 0 : index
    %c0_0 = arith.constant 0 : index
    %c0_1 = arith.constant 0 : index
    %0 = vector.load %arg2[%c0, %c0_0, %c0_1] : memref<1x16x32xf32, #tpu.memory_space<vmem>>, vector<1x16x32xf32>
    %1 = vector.shape_cast %0 : vector<1x16x32xf32> to vector<16x32xf32>
    %2 = arith.truncf %1 : vector<16x32xf32> to vector<16x32xbf16>
    %c0_2 = arith.constant 0 : index
    %c0_3 = arith.constant 0 : index
    %3 = vector.load %arg3[%c0_2, %c0_3] : memref<32x32xbf16, #tpu.memory_space<vmem>>, vector<32x32xbf16>
    %cst = arith.constant dense<0.000000e+00> : vector<16x32xf32>
    %4 = tpu.matmul %2, %3, %cst {dimension_numbers = #tpu.dot_dimension_numbers<[1], [0], [0], [1], [0, 0, 1, 1], [], []>} : vector<16x32xbf16>, vector<32x32xbf16>, vector<16x32xf32> -> vector<16x32xf32>
    %c0_4 = arith.constant 0 : index
    %c0_5 = arith.constant 0 : index
    %5 = vector.load %arg4[%c0_4, %c0_5] : memref<1x32xf32, #tpu.memory_space<vmem>>, vector<1x32xf32>
    %6 = vector.broadcast %5 : vector<1x32xf32> to vector<16x32xf32>
    %7 = arith.addf %4, %6 : vector<16x32xf32>
    %c0_6 = arith.constant 0 : index
    %c0_7 = arith.constant 0 : index
    %8 = vector.load %arg5[%c0_6, %c0_7] : memref<16x32xf32, #tpu.memory_space<vmem>>, vector<16x32xf32>
    %9 = arith.addf %7, %8 : vector<16x32xf32>
    %c0_8 = arith.constant 0 : index
    %c0_9 = arith.constant 0 : index
    %c0_10 = arith.constant 0 : index
    %10 = vector.load %arg6[%c0_8, %c0_9, %c0_10] : memref<1x16x32xf32, #tpu.memory_space<vmem>>, vector<1x16x32xf32>
    %11 = vector.shape_cast %10 : vector<1x16x32xf32> to vector<16x32xf32>
    %12 = vector.shape_cast %9 : vector<16x32xf32> to vector<1x16x32xf32>
    tpu.vector_store %arg6[%c0_8, %c0_9, %c0_10], %12 {strides = array<i32>} : memref<1x16x32xf32, #tpu.memory_space<vmem>>, vector<1x16x32xf32>,
    return
  }
  func.func @transform_0(%arg0: i32, %arg1: i32) -> (i32, i32, i32) {
    %c0_i32 = arith.constant 0 : i32
    %c0_i32_0 = arith.constant 0 : i32
    return %arg0, %arg1, %c0_i32 : i32, i32, i32
  }
  func.func @transform_1(%arg0: i32, %arg1: i32) -> (i32, i32) {
    %c0_i32 = arith.constant 0 : i32
    %c0_i32_0 = arith.constant 0 : i32
    %c0_i32_1 = arith.constant 0 : i32
    return %c0_i32, %c0_i32_0 : i32, i32
  }
  func.func @transform_2(%arg0: i32, %arg1: i32) -> (i32, i32) {
    %c0_i32 = arith.constant 0 : i32
    %c0_i32_0 = arith.constant 0 : i32
    %c0_i32_1 = arith.constant 0 : i32
    return %c0_i32, %c0_i32_0 : i32, i32
  }
  func.func @transform_3(%arg0: i32, %arg1: i32) -> (i32, i32) {
    %c0_i32 = arith.constant 0 : i32
    %c0_i32_0 = arith.constant 0 : i32
    return %arg1, %c0_i32 : i32, i32
  }
  func.func @transform_4(%arg0: i32, %arg1: i32) -> (i32, i32, i32) {
    %c0_i32 = arith.constant 0 : i32
    %c0_i32_0 = arith.constant 0 : i32
    return %arg0, %arg1, %c0_i32 : i32, i32, i32
  }
}

module attributes {stable_mosaic.version = 11 : i64} {
  func.func @block_kernel(%arg0: i32, %arg1: i32, %arg2: memref<1x16x32xf32, #tpu.memory_space<vmem>>, %arg3: memref<1x32xf32, #tpu.memory_space<vmem>>, %arg4: memref<1x32xf32, #tpu.memory_space<vmem>>, %arg5: memref<32x32xbf16, #tpu.memory_space<vmem>>, %arg6: memref<32x32xbf16, #tpu.memory_space<vmem>>, %arg7: memref<32x32xbf16, #tpu.memory_space<vmem>>, %arg8: memref<4x8x32xbf16, #tpu.memory_space<vmem>>, %arg9: memref<1x32xf32, #tpu.memory_space<vmem>>, %arg10: memref<1x32xf32, #tpu.memory_space<vmem>>, %arg11: memref<1x32xf32, #tpu.memory_space<vmem>>, %arg12: memref<32x128xbf16, #tpu.memory_space<vmem>>, %arg13: memref<1x128xf32, #tpu.memory_space<vmem>>, %arg14: memref<128x32xbf16, #tpu.memory_space<vmem>>, %arg15: memref<1x32xf32, #tpu.memory_space<vmem>>, %arg16: memref<1x16x32xf32, #tpu.memory_space<vmem>>) attributes {dimension_semantics = [#tpu.dimension_semantics<parallel>, #tpu.dimension_semantics<parallel>], iteration_bounds = array<i64: 2, 1>, scalar_prefetch = 0 : i64, scratch_operands = 0 : i64, tpu.core_type = #tpu.core_type<tc>, window_params = [{transform_indices = @transform_0, window_bounds = array<i64: 1, 16, 32>}, {pipeline_mode = #tpu.pipeline_mode<synchronous>, transform_indices = @transform_1, window_bounds = array<i64: 1, 32>}, {pipeline_mode = #tpu.pipeline_mode<synchronous>, transform_indices = @transform_2, window_bounds = array<i64: 1, 32>}, {pipeline_mode = #tpu.pipeline_mode<synchronous>, transform_indices = @transform_3, window_bounds = array<i64: 32, 32>}, {pipeline_mode = #tpu.pipeline_mode<synchronous>, transform_indices = @transform_4, window_bounds = array<i64: 32, 32>}, {pipeline_mode = #tpu.pipeline_mode<synchronous>, transform_indices = @transform_5, window_bounds = array<i64: 32, 32>}, {pipeline_mode = #tpu.pipeline_mode<synchronous>, transform_indices = @transform_6, window_bounds = array<i64: 4, 8, 32>}, {pipeline_mode = #tpu.pipeline_mode<synchronous>, transform_indices = @transform_7, window_bounds = array<i64: 1, 32>}, {pipeline_mode = #tpu.pipeline_mode<synchronous>, transform_indices = @transform_8, window_bounds = array<i64: 1, 32>}, {pipeline_mode = #tpu.pipeline_mode<synchronous>, transform_indices = @transform_9, window_bounds = array<i64: 1, 32>}, {pipeline_mode = #tpu.pipeline_mode<synchronous>, transform_indices = @transform_10, window_bounds = array<i64: 32, 128>}, {pipeline_mode = #tpu.pipeline_mode<synchronous>, transform_indices = @transform_11, window_bounds = array<i64: 1, 128>}, {pipeline_mode = #tpu.pipeline_mode<synchronous>, transform_indices = @transform_12, window_bounds = array<i64: 128, 32>}, {pipeline_mode = #tpu.pipeline_mode<synchronous>, transform_indices = @transform_13, window_bounds = array<i64: 1, 32>}, {transform_indices = @transform_14, window_bounds = array<i64: 1, 16, 32>}]} {
    %c0 = arith.constant 0 : index
    %c0_0 = arith.constant 0 : index
    %c0_1 = arith.constant 0 : index
    %0 = vector.load %arg2[%c0, %c0_0, %c0_1] : memref<1x16x32xf32, #tpu.memory_space<vmem>>, vector<1x16x32xf32>
    %1 = vector.shape_cast %0 : vector<1x16x32xf32> to vector<16x32xf32>
    %c0_2 = arith.constant 0 : index
    %c0_3 = arith.constant 0 : index
    %2 = vector.load %arg3[%c0_2, %c0_3] : memref<1x32xf32, #tpu.memory_space<vmem>>, vector<1x32xf32>
    %c0_4 = arith.constant 0 : index
    %c0_5 = arith.constant 0 : index
    %3 = vector.load %arg4[%c0_4, %c0_5] : memref<1x32xf32, #tpu.memory_space<vmem>>, vector<1x32xf32>
    %cst = arith.constant dense<0.000000e+00> : vector<16xf32>
    %4 = vector.multi_reduction <add>, %1, %cst [1] : vector<16x32xf32> to vector<16xf32>
    %5 = vector.shape_cast %4 : vector<16xf32> to vector<16x1xf32>
    %cst_6 = arith.constant 3.200000e+01 : f32
    %6 = vector.broadcast %cst_6 : f32 to vector<16x1xf32>
    %7 = arith.divf %5, %6 : vector<16x1xf32>
    %8 = vector.broadcast %7 : vector<16x1xf32> to vector<16x32xf32>
    %9 = arith.subf %1, %8 : vector<16x32xf32>
    %10 = arith.mulf %9, %9 : vector<16x32xf32>
    %cst_7 = arith.constant dense<0.000000e+00> : vector<16xf32>
    %11 = vector.multi_reduction <add>, %10, %cst_7 [1] : vector<16x32xf32> to vector<16xf32>
    %12 = vector.shape_cast %11 : vector<16xf32> to vector<16x1xf32>
    %cst_8 = arith.constant 3.200000e+01 : f32
    %13 = vector.broadcast %cst_8 : f32 to vector<16x1xf32>
    %14 = arith.divf %12, %13 : vector<16x1xf32>
    %15 = vector.broadcast %7 : vector<16x1xf32> to vector<16x32xf32>
    %16 = arith.subf %1, %15 : vector<16x32xf32>
    %cst_9 = arith.constant 9.99999974E-6 : f32
    %17 = vector.broadcast %cst_9 : f32 to vector<16x1xf32>
    %18 = arith.addf %14, %17 : vector<16x1xf32>
    %19 = math.rsqrt %18 : vector<16x1xf32>
    %20 = vector.broadcast %19 : vector<16x1xf32> to vector<16x32xf32>
    %21 = arith.mulf %16, %20 : vector<16x32xf32>
    %22 = vector.broadcast %2 : vector<1x32xf32> to vector<16x32xf32>
    %23 = arith.mulf %21, %22 : vector<16x32xf32>
    %24 = vector.broadcast %3 : vector<1x32xf32> to vector<16x32xf32>
    %25 = arith.addf %23, %24 : vector<16x32xf32>
    %26 = arith.truncf %25 : vector<16x32xf32> to vector<16x32xbf16>
    %c0_10 = arith.constant 0 : index
    %c0_11 = arith.constant 0 : index
    %27 = vector.load %arg6[%c0_10, %c0_11] : memref<32x32xbf16, #tpu.memory_space<vmem>>, vector<32x32xbf16>
    %cst_12 = arith.constant dense<0.000000e+00> : vector<16x32xf32>
    %28 = tpu.matmul %26, %27, %cst_12 {dimension_numbers = #tpu.dot_dimension_numbers<[1], [0], [0], [1], [0, 0, 1, 1], [], []>} : vector<16x32xbf16>, vector<32x32xbf16>, vector<16x32xf32> -> vector<16x32xf32>
    %29 = arith.truncf %28 : vector<16x32xf32> to vector<16x32xbf16>
    %c0_13 = arith.constant 0 : index
    %c0_14 = arith.constant 0 : index
    %30 = vector.load %arg7[%c0_13, %c0_14] : memref<32x32xbf16, #tpu.memory_space<vmem>>, vector<32x32xbf16>
    %cst_15 = arith.constant dense<0.000000e+00> : vector<16x32xf32>
    %31 = tpu.matmul %26, %30, %cst_15 {dimension_numbers = #tpu.dot_dimension_numbers<[1], [0], [0], [1], [0, 0, 1, 1], [], []>} : vector<16x32xbf16>, vector<32x32xbf16>, vector<16x32xf32> -> vector<16x32xf32>
    %32 = arith.truncf %31 : vector<16x32xf32> to vector<16x32xbf16>
    %c16_i32 = arith.constant 16 : i32
    %33 = arith.muli %arg1, %c16_i32 : i32
    %34 = tpu.assume_multiple %33, 16 : i32
    %c0_16 = arith.constant 0 : index
    %35 = arith.index_cast %34 : i32 to index
    %c0_17 = arith.constant 0 : index
    %36 = vector.load %arg2[%c0_16, %35, %c0_17] : memref<1x16x32xf32, #tpu.memory_space<vmem>>, vector<1x16x32xf32>
    %37 = vector.shape_cast %36 : vector<1x16x32xf32> to vector<16x32xf32>
    %c0_18 = arith.constant 0 : index
    %c0_19 = arith.constant 0 : index
    %38 = vector.load %arg3[%c0_18, %c0_19] : memref<1x32xf32, #tpu.memory_space<vmem>>, vector<1x32xf32>
    %c0_20 = arith.constant 0 : index
    %c0_21 = arith.constant 0 : index
    %39 = vector.load %arg4[%c0_20, %c0_21] : memref<1x32xf32, #tpu.memory_space<vmem>>, vector<1x32xf32>
    %cst_22 = arith.constant dense<0.000000e+00> : vector<16xf32>
    %40 = vector.multi_reduction <add>, %37, %cst_22 [1] : vector<16x32xf32> to vector<16xf32>
    %41 = vector.shape_cast %40 : vector<16xf32> to vector<16x1xf32>
    %cst_23 = arith.constant 3.200000e+01 : f32
    %42 = vector.broadcast %cst_23 : f32 to vector<16x1xf32>
    %43 = arith.divf %41, %42 : vector<16x1xf32>
    %44 = vector.broadcast %43 : vector<16x1xf32> to vector<16x32xf32>
    %45 = arith.subf %37, %44 : vector<16x32xf32>
    %46 = arith.mulf %45, %45 : vector<16x32xf32>
    %cst_24 = arith.constant dense<0.000000e+00> : vector<16xf32>
    %47 = vector.multi_reduction <add>, %46, %cst_24 [1] : vector<16x32xf32> to vector<16xf32>
    %48 = vector.shape_cast %47 : vector<16xf32> to vector<16x1xf32>
    %cst_25 = arith.constant 3.200000e+01 : f32
    %49 = vector.broadcast %cst_25 : f32 to vector<16x1xf32>
    %50 = arith.divf %48, %49 : vector<16x1xf32>
    %51 = vector.broadcast %43 : vector<16x1xf32> to vector<16x32xf32>
    %52 = arith.subf %37, %51 : vector<16x32xf32>
    %cst_26 = arith.constant 9.99999974E-6 : f32
    %53 = vector.broadcast %cst_26 : f32 to vector<16x1xf32>
    %54 = arith.addf %50, %53 : vector<16x1xf32>
    %55 = math.rsqrt %54 : vector<16x1xf32>
    %56 = vector.broadcast %55 : vector<16x1xf32> to vector<16x32xf32>
    %57 = arith.mulf %52, %56 : vector<16x32xf32>
    %58 = vector.broadcast %38 : vector<1x32xf32> to vector<16x32xf32>
    %59 = arith.mulf %57, %58 : vector<16x32xf32>
    %60 = vector.broadcast %39 : vector<1x32xf32> to vector<16x32xf32>
    %61 = arith.addf %59, %60 : vector<16x32xf32>
    %62 = arith.truncf %61 : vector<16x32xf32> to vector<16x32xbf16>
    %c0_27 = arith.constant 0 : index
    %c0_28 = arith.constant 0 : index
    %63 = vector.load %arg5[%c0_27, %c0_28] : memref<32x32xbf16, #tpu.memory_space<vmem>>, vector<32x32xbf16>
    %cst_29 = arith.constant dense<0.000000e+00> : vector<16x32xf32>
    %64 = tpu.matmul %62, %63, %cst_29 {dimension_numbers = #tpu.dot_dimension_numbers<[1], [0], [0], [1], [0, 0, 1, 1], [], []>} : vector<16x32xbf16>, vector<32x32xbf16>, vector<16x32xf32> -> vector<16x32xf32>
    %65 = arith.truncf %64 : vector<16x32xf32> to vector<16x32xbf16>
    %cst_30 = arith.constant 0.000000e+00 : f32
    %66 = vector.broadcast %cst_30 : f32 to vector<16x32xf32>
    %67 = vector.extract_strided_slice %65 {offsets = [0, 0], sizes = [16, 8], strides = [1, 1]} : vector<16x32xbf16> to vector<16x8xbf16>
    %cst_31 = arith.constant 0xFF800000 : f32
    %68 = vector.broadcast %cst_31 : f32 to vector<16x1xf32>
    %cst_32 = arith.constant 0.000000e+00 : f32
    %69 = vector.broadcast %cst_32 : f32 to vector<16x1xf32>
    %cst_33 = arith.constant 0.000000e+00 : f32
    %70 = vector.broadcast %cst_33 : f32 to vector<16x8xf32>
    %71 = vector.extract_strided_slice %29 {offsets = [0, 0], sizes = [16, 8], strides = [1, 1]} : vector<16x32xbf16> to vector<16x8xbf16>
    %72 = vector.extract_strided_slice %32 {offsets = [0, 0], sizes = [16, 8], strides = [1, 1]} : vector<16x32xbf16> to vector<16x8xbf16>
    %cst_34 = arith.constant dense<0.000000e+00> : vector<16x16xf32>
    %73 = tpu.matmul %67, %71, %cst_34 {dimension_numbers = #tpu.dot_dimension_numbers<[1], [1], [0], [0], [0, 0, 1, 0], [], []>} : vector<16x8xbf16>, vector<16x8xbf16>, vector<16x16xf32> -> vector<16x16xf32>
    %cst_35 = arith.constant dense<0xFF800000> : vector<16xf32>
    %74 = vector.multi_reduction <maximumf>, %73, %cst_35 [1] : vector<16x16xf32> to vector<16xf32>
    %75 = vector.shape_cast %74 : vector<16xf32> to vector<16x1xf32>
    %76 = arith.maximumf %68, %75 : vector<16x1xf32>
    %77 = arith.subf %68, %76 : vector<16x1xf32>
    %78 = math.exp %77 : vector<16x1xf32>
    %79 = vector.broadcast %76 : vector<16x1xf32> to vector<16x16xf32>
    %80 = arith.subf %73, %79 : vector<16x16xf32>
    %81 = math.exp %80 : vector<16x16xf32>
    %82 = arith.mulf %78, %69 : vector<16x1xf32>
    %cst_36 = arith.constant dense<0.000000e+00> : vector<16xf32>
    %83 = vector.multi_reduction <add>, %81, %cst_36 [1] : vector<16x16xf32> to vector<16xf32>
    %84 = vector.shape_cast %83 : vector<16xf32> to vector<16x1xf32>
    %85 = arith.addf %82, %84 : vector<16x1xf32>
    %86 = vector.broadcast %78 : vector<16x1xf32> to vector<16x8xf32>
    %87 = arith.mulf %86, %70 : vector<16x8xf32>
    %88 = arith.truncf %81 : vector<16x16xf32> to vector<16x16xbf16>
    %cst_37 = arith.constant dense<0.000000e+00> : vector<16x8xf32>
    %89 = tpu.matmul %88, %72, %cst_37 {dimension_numbers = #tpu.dot_dimension_numbers<[1], [0], [0], [1], [0, 0, 1, 1], [], []>} : vector<16x16xbf16>, vector<16x8xbf16>, vector<16x8xf32> -> vector<16x8xf32>
    %90 = arith.addf %87, %89 : vector<16x8xf32>
    %91 = tpu.reciprocal %85 {approx = true} : vector<16x1xf32> -> vector<16x1xf32>
    %92 = vector.broadcast %91 : vector<16x1xf32> to vector<16x8xf32>
    %93 = arith.mulf %90, %92 : vector<16x8xf32>
    %94 = arith.truncf %93 : vector<16x8xf32> to vector<16x8xbf16>
    %c0_38 = arith.constant 0 : index
    %c0_39 = arith.constant 0 : index
    %c0_40 = arith.constant 0 : index
    %95 = vector.load %arg8[%c0_38, %c0_39, %c0_40] : memref<4x8x32xbf16, #tpu.memory_space<vmem>>, vector<1x8x32xbf16>
    %96 = vector.shape_cast %95 : vector<1x8x32xbf16> to vector<8x32xbf16>
    %cst_41 = arith.constant dense<0.000000e+00> : vector<16x32xf32>
    %97 = tpu.matmul %94, %96, %cst_41 {dimension_numbers = #tpu.dot_dimension_numbers<[1], [0], [0], [1], [0, 0, 1, 1], [], []>} : vector<16x8xbf16>, vector<8x32xbf16>, vector<16x32xf32> -> vector<16x32xf32>
    %98 = arith.addf %66, %97 : vector<16x32xf32>
    %99 = vector.extract_strided_slice %65 {offsets = [0, 8], sizes = [16, 8], strides = [1, 1]} : vector<16x32xbf16> to vector<16x8xbf16>
    %cst_42 = arith.constant 0xFF800000 : f32
    %100 = vector.broadcast %cst_42 : f32 to vector<16x1xf32>
    %cst_43 = arith.constant 0.000000e+00 : f32
    %101 = vector.broadcast %cst_43 : f32 to vector<16x1xf32>
    %cst_44 = arith.constant 0.000000e+00 : f32
    %102 = vector.broadcast %cst_44 : f32 to vector<16x8xf32>
    %103 = vector.extract_strided_slice %29 {offsets = [0, 8], sizes = [16, 8], strides = [1, 1]} : vector<16x32xbf16> to vector<16x8xbf16>
    %104 = vector.extract_strided_slice %32 {offsets = [0, 8], sizes = [16, 8], strides = [1, 1]} : vector<16x32xbf16> to vector<16x8xbf16>
    %cst_45 = arith.constant dense<0.000000e+00> : vector<16x16xf32>
    %105 = tpu.matmul %99, %103, %cst_45 {dimension_numbers = #tpu.dot_dimension_numbers<[1], [1], [0], [0], [0, 0, 1, 0], [], []>} : vector<16x8xbf16>, vector<16x8xbf16>, vector<16x16xf32> -> vector<16x16xf32>
    %cst_46 = arith.constant dense<0xFF800000> : vector<16xf32>
    %106 = vector.multi_reduction <maximumf>, %105, %cst_46 [1] : vector<16x16xf32> to vector<16xf32>
    %107 = vector.shape_cast %106 : vector<16xf32> to vector<16x1xf32>
    %108 = arith.maximumf %100, %107 : vector<16x1xf32>
    %109 = arith.subf %100, %108 : vector<16x1xf32>
    %110 = math.exp %109 : vector<16x1xf32>
    %111 = vector.broadcast %108 : vector<16x1xf32> to vector<16x16xf32>
    %112 = arith.subf %105, %111 : vector<16x16xf32>
    %113 = math.exp %112 : vector<16x16xf32>
    %114 = arith.mulf %110, %101 : vector<16x1xf32>
    %cst_47 = arith.constant dense<0.000000e+00> : vector<16xf32>
    %115 = vector.multi_reduction <add>, %113, %cst_47 [1] : vector<16x16xf32> to vector<16xf32>
    %116 = vector.shape_cast %115 : vector<16xf32> to vector<16x1xf32>
    %117 = arith.addf %114, %116 : vector<16x1xf32>
    %118 = vector.broadcast %110 : vector<16x1xf32> to vector<16x8xf32>
    %119 = arith.mulf %118, %102 : vector<16x8xf32>
    %120 = arith.truncf %113 : vector<16x16xf32> to vector<16x16xbf16>
    %cst_48 = arith.constant dense<0.000000e+00> : vector<16x8xf32>
    %121 = tpu.matmul %120, %104, %cst_48 {dimension_numbers = #tpu.dot_dimension_numbers<[1], [0], [0], [1], [0, 0, 1, 1], [], []>} : vector<16x16xbf16>, vector<16x8xbf16>, vector<16x8xf32> -> vector<16x8xf32>
    %122 = arith.addf %119, %121 : vector<16x8xf32>
    %123 = tpu.reciprocal %117 {approx = true} : vector<16x1xf32> -> vector<16x1xf32>
    %124 = vector.broadcast %123 : vector<16x1xf32> to vector<16x8xf32>
    %125 = arith.mulf %122, %124 : vector<16x8xf32>
    %126 = arith.truncf %125 : vector<16x8xf32> to vector<16x8xbf16>
    %c1 = arith.constant 1 : index
    %c0_49 = arith.constant 0 : index
    %c0_50 = arith.constant 0 : index
    %127 = vector.load %arg8[%c1, %c0_49, %c0_50] : memref<4x8x32xbf16, #tpu.memory_space<vmem>>, vector<1x8x32xbf16>
    %128 = vector.shape_cast %127 : vector<1x8x32xbf16> to vector<8x32xbf16>
    %cst_51 = arith.constant dense<0.000000e+00> : vector<16x32xf32>
    %129 = tpu.matmul %126, %128, %cst_51 {dimension_numbers = #tpu.dot_dimension_numbers<[1], [0], [0], [1], [0, 0, 1, 1], [], []>} : vector<16x8xbf16>, vector<8x32xbf16>, vector<16x32xf32> -> vector<16x32xf32>
    %130 = arith.addf %98, %129 : vector<16x32xf32>
    %131 = vector.extract_strided_slice %65 {offsets = [0, 16], sizes = [16, 8], strides = [1, 1]} : vector<16x32xbf16> to vector<16x8xbf16>
    %cst_52 = arith.constant 0xFF800000 : f32
    %132 = vector.broadcast %cst_52 : f32 to vector<16x1xf32>
    %cst_53 = arith.constant 0.000000e+00 : f32
    %133 = vector.broadcast %cst_53 : f32 to vector<16x1xf32>
    %cst_54 = arith.constant 0.000000e+00 : f32
    %134 = vector.broadcast %cst_54 : f32 to vector<16x8xf32>
    %135 = vector.extract_strided_slice %29 {offsets = [0, 16], sizes = [16, 8], strides = [1, 1]} : vector<16x32xbf16> to vector<16x8xbf16>
    %136 = vector.extract_strided_slice %32 {offsets = [0, 16], sizes = [16, 8], strides = [1, 1]} : vector<16x32xbf16> to vector<16x8xbf16>
    %cst_55 = arith.constant dense<0.000000e+00> : vector<16x16xf32>
    %137 = tpu.matmul %131, %135, %cst_55 {dimension_numbers = #tpu.dot_dimension_numbers<[1], [1], [0], [0], [0, 0, 1, 0], [], []>} : vector<16x8xbf16>, vector<16x8xbf16>, vector<16x16xf32> -> vector<16x16xf32>
    %cst_56 = arith.constant dense<0xFF800000> : vector<16xf32>
    %138 = vector.multi_reduction <maximumf>, %137, %cst_56 [1] : vector<16x16xf32> to vector<16xf32>
    %139 = vector.shape_cast %138 : vector<16xf32> to vector<16x1xf32>
    %140 = arith.maximumf %132, %139 : vector<16x1xf32>
    %141 = arith.subf %132, %140 : vector<16x1xf32>
    %142 = math.exp %141 : vector<16x1xf32>
    %143 = vector.broadcast %140 : vector<16x1xf32> to vector<16x16xf32>
    %144 = arith.subf %137, %143 : vector<16x16xf32>
    %145 = math.exp %144 : vector<16x16xf32>
    %146 = arith.mulf %142, %133 : vector<16x1xf32>
    %cst_57 = arith.constant dense<0.000000e+00> : vector<16xf32>
    %147 = vector.multi_reduction <add>, %145, %cst_57 [1] : vector<16x16xf32> to vector<16xf32>
    %148 = vector.shape_cast %147 : vector<16xf32> to vector<16x1xf32>
    %149 = arith.addf %146, %148 : vector<16x1xf32>
    %150 = vector.broadcast %142 : vector<16x1xf32> to vector<16x8xf32>
    %151 = arith.mulf %150, %134 : vector<16x8xf32>
    %152 = arith.truncf %145 : vector<16x16xf32> to vector<16x16xbf16>
    %cst_58 = arith.constant dense<0.000000e+00> : vector<16x8xf32>
    %153 = tpu.matmul %152, %136, %cst_58 {dimension_numbers = #tpu.dot_dimension_numbers<[1], [0], [0], [1], [0, 0, 1, 1], [], []>} : vector<16x16xbf16>, vector<16x8xbf16>, vector<16x8xf32> -> vector<16x8xf32>
    %154 = arith.addf %151, %153 : vector<16x8xf32>
    %155 = tpu.reciprocal %149 {approx = true} : vector<16x1xf32> -> vector<16x1xf32>
    %156 = vector.broadcast %155 : vector<16x1xf32> to vector<16x8xf32>
    %157 = arith.mulf %154, %156 : vector<16x8xf32>
    %158 = arith.truncf %157 : vector<16x8xf32> to vector<16x8xbf16>
    %c2 = arith.constant 2 : index
    %c0_59 = arith.constant 0 : index
    %c0_60 = arith.constant 0 : index
    %159 = vector.load %arg8[%c2, %c0_59, %c0_60] : memref<4x8x32xbf16, #tpu.memory_space<vmem>>, vector<1x8x32xbf16>
    %160 = vector.shape_cast %159 : vector<1x8x32xbf16> to vector<8x32xbf16>
    %cst_61 = arith.constant dense<0.000000e+00> : vector<16x32xf32>
    %161 = tpu.matmul %158, %160, %cst_61 {dimension_numbers = #tpu.dot_dimension_numbers<[1], [0], [0], [1], [0, 0, 1, 1], [], []>} : vector<16x8xbf16>, vector<8x32xbf16>, vector<16x32xf32> -> vector<16x32xf32>
    %162 = arith.addf %130, %161 : vector<16x32xf32>
    %163 = vector.extract_strided_slice %65 {offsets = [0, 24], sizes = [16, 8], strides = [1, 1]} : vector<16x32xbf16> to vector<16x8xbf16>
    %cst_62 = arith.constant 0xFF800000 : f32
    %164 = vector.broadcast %cst_62 : f32 to vector<16x1xf32>
    %cst_63 = arith.constant 0.000000e+00 : f32
    %165 = vector.broadcast %cst_63 : f32 to vector<16x1xf32>
    %cst_64 = arith.constant 0.000000e+00 : f32
    %166 = vector.broadcast %cst_64 : f32 to vector<16x8xf32>
    %167 = vector.extract_strided_slice %29 {offsets = [0, 24], sizes = [16, 8], strides = [1, 1]} : vector<16x32xbf16> to vector<16x8xbf16>
    %168 = vector.extract_strided_slice %32 {offsets = [0, 24], sizes = [16, 8], strides = [1, 1]} : vector<16x32xbf16> to vector<16x8xbf16>
    %cst_65 = arith.constant dense<0.000000e+00> : vector<16x16xf32>
    %169 = tpu.matmul %163, %167, %cst_65 {dimension_numbers = #tpu.dot_dimension_numbers<[1], [1], [0], [0], [0, 0, 1, 0], [], []>} : vector<16x8xbf16>, vector<16x8xbf16>, vector<16x16xf32> -> vector<16x16xf32>
    %cst_66 = arith.constant dense<0xFF800000> : vector<16xf32>
    %170 = vector.multi_reduction <maximumf>, %169, %cst_66 [1] : vector<16x16xf32> to vector<16xf32>
    %171 = vector.shape_cast %170 : vector<16xf32> to vector<16x1xf32>
    %172 = arith.maximumf %164, %171 : vector<16x1xf32>
    %173 = arith.subf %164, %172 : vector<16x1xf32>
    %174 = math.exp %173 : vector<16x1xf32>
    %175 = vector.broadcast %172 : vector<16x1xf32> to vector<16x16xf32>
    %176 = arith.subf %169, %175 : vector<16x16xf32>
    %177 = math.exp %176 : vector<16x16xf32>
    %178 = arith.mulf %174, %165 : vector<16x1xf32>
    %cst_67 = arith.constant dense<0.000000e+00> : vector<16xf32>
    %179 = vector.multi_reduction <add>, %177, %cst_67 [1] : vector<16x16xf32> to vector<16xf32>
    %180 = vector.shape_cast %179 : vector<16xf32> to vector<16x1xf32>
    %181 = arith.addf %178, %180 : vector<16x1xf32>
    %182 = vector.broadcast %174 : vector<16x1xf32> to vector<16x8xf32>
    %183 = arith.mulf %182, %166 : vector<16x8xf32>
    %184 = arith.truncf %177 : vector<16x16xf32> to vector<16x16xbf16>
    %cst_68 = arith.constant dense<0.000000e+00> : vector<16x8xf32>
    %185 = tpu.matmul %184, %168, %cst_68 {dimension_numbers = #tpu.dot_dimension_numbers<[1], [0], [0], [1], [0, 0, 1, 1], [], []>} : vector<16x16xbf16>, vector<16x8xbf16>, vector<16x8xf32> -> vector<16x8xf32>
    %186 = arith.addf %183, %185 : vector<16x8xf32>
    %187 = tpu.reciprocal %181 {approx = true} : vector<16x1xf32> -> vector<16x1xf32>
    %188 = vector.broadcast %187 : vector<16x1xf32> to vector<16x8xf32>
    %189 = arith.mulf %186, %188 : vector<16x8xf32>
    %190 = arith.truncf %189 : vector<16x8xf32> to vector<16x8xbf16>
    %c3 = arith.constant 3 : index
    %c0_69 = arith.constant 0 : index
    %c0_70 = arith.constant 0 : index
    %191 = vector.load %arg8[%c3, %c0_69, %c0_70] : memref<4x8x32xbf16, #tpu.memory_space<vmem>>, vector<1x8x32xbf16>
    %192 = vector.shape_cast %191 : vector<1x8x32xbf16> to vector<8x32xbf16>
    %cst_71 = arith.constant dense<0.000000e+00> : vector<16x32xf32>
    %193 = tpu.matmul %190, %192, %cst_71 {dimension_numbers = #tpu.dot_dimension_numbers<[1], [0], [0], [1], [0, 0, 1, 1], [], []>} : vector<16x8xbf16>, vector<8x32xbf16>, vector<16x32xf32> -> vector<16x32xf32>
    %194 = arith.addf %162, %193 : vector<16x32xf32>
    %195 = arith.addf %37, %194 : vector<16x32xf32>
    %c0_72 = arith.constant 0 : index
    %c0_73 = arith.constant 0 : index
    %196 = vector.load %arg9[%c0_72, %c0_73] : memref<1x32xf32, #tpu.memory_space<vmem>>, vector<1x32xf32>
    %197 = vector.broadcast %196 : vector<1x32xf32> to vector<16x32xf32>
    %198 = arith.addf %195, %197 : vector<16x32xf32>
    %c0_74 = arith.constant 0 : index
    %c0_75 = arith.constant 0 : index
    %199 = vector.load %arg10[%c0_74, %c0_75] : memref<1x32xf32, #tpu.memory_space<vmem>>, vector<1x32xf32>
    %c0_76 = arith.constant 0 : index
    %c0_77 = arith.constant 0 : index
    %200 = vector.load %arg11[%c0_76, %c0_77] : memref<1x32xf32, #tpu.memory_space<vmem>>, vector<1x32xf32>
    %cst_78 = arith.constant dense<0.000000e+00> : vector<16xf32>
    %201 = vector.multi_reduction <add>, %198, %cst_78 [1] : vector<16x32xf32> to vector<16xf32>
    %202 = vector.shape_cast %201 : vector<16xf32> to vector<16x1xf32>
    %cst_79 = arith.constant 3.200000e+01 : f32
    %203 = vector.broadcast %cst_79 : f32 to vector<16x1xf32>
    %204 = arith.divf %202, %203 : vector<16x1xf32>
    %205 = vector.broadcast %204 : vector<16x1xf32> to vector<16x32xf32>
    %206 = arith.subf %198, %205 : vector<16x32xf32>
    %207 = arith.mulf %206, %206 : vector<16x32xf32>
    %cst_80 = arith.constant dense<0.000000e+00> : vector<16xf32>
    %208 = vector.multi_reduction <add>, %207, %cst_80 [1] : vector<16x32xf32> to vector<16xf32>
    %209 = vector.shape_cast %208 : vector<16xf32> to vector<16x1xf32>
    %cst_81 = arith.constant 3.200000e+01 : f32
    %210 = vector.broadcast %cst_81 : f32 to vector<16x1xf32>
    %211 = arith.divf %209, %210 : vector<16x1xf32>
    %212 = vector.broadcast %204 : vector<16x1xf32> to vector<16x32xf32>
    %213 = arith.subf %198, %212 : vector<16x32xf32>
    %cst_82 = arith.constant 9.99999974E-6 : f32
    %214 = vector.broadcast %cst_82 : f32 to vector<16x1xf32>
    %215 = arith.addf %211, %214 : vector<16x1xf32>
    %216 = math.rsqrt %215 : vector<16x1xf32>
    %217 = vector.broadcast %216 : vector<16x1xf32> to vector<16x32xf32>
    %218 = arith.mulf %213, %217 : vector<16x32xf32>
    %219 = vector.broadcast %199 : vector<1x32xf32> to vector<16x32xf32>
    %220 = arith.mulf %218, %219 : vector<16x32xf32>
    %221 = vector.broadcast %200 : vector<1x32xf32> to vector<16x32xf32>
    %222 = arith.addf %220, %221 : vector<16x32xf32>
    %223 = arith.truncf %222 : vector<16x32xf32> to vector<16x32xbf16>
    %c0_83 = arith.constant 0 : index
    %c0_84 = arith.constant 0 : index
    %224 = vector.load %arg12[%c0_83, %c0_84] : memref<32x128xbf16, #tpu.memory_space<vmem>>, vector<32x128xbf16>
    %cst_85 = arith.constant dense<0.000000e+00> : vector<16x128xf32>
    %225 = tpu.matmul %223, %224, %cst_85 {dimension_numbers = #tpu.dot_dimension_numbers<[1], [0], [0], [1], [0, 0, 1, 1], [], []>} : vector<16x32xbf16>, vector<32x128xbf16>, vector<16x128xf32> -> vector<16x128xf32>
    %c0_86 = arith.constant 0 : index
    %c0_87 = arith.constant 0 : index
    %226 = vector.load %arg13[%c0_86, %c0_87] : memref<1x128xf32, #tpu.memory_space<vmem>>, vector<1x128xf32>
    %227 = vector.broadcast %226 : vector<1x128xf32> to vector<16x128xf32>
    %228 = arith.addf %225, %227 : vector<16x128xf32>
    %cst_88 = arith.constant 5.000000e-01 : f32
    %229 = vector.broadcast %cst_88 : f32 to vector<16x128xf32>
    %230 = arith.mulf %229, %228 : vector<16x128xf32>
    %cst_89 = arith.constant 0.707106769 : f32
    %231 = vector.broadcast %cst_89 : f32 to vector<16x128xf32>
    %232 = arith.mulf %228, %231 : vector<16x128xf32>
    %233 = math.absf %232 : vector<16x128xf32>
    %cst_90 = arith.constant 0.327591091 : f32
    %234 = vector.broadcast %cst_90 : f32 to vector<16x128xf32>
    %235 = arith.mulf %234, %233 : vector<16x128xf32>
    %cst_91 = arith.constant 1.000000e+00 : f32
    %236 = vector.broadcast %cst_91 : f32 to vector<16x128xf32>
    %237 = arith.addf %236, %235 : vector<16x128xf32>
    %cst_92 = arith.constant 1.000000e+00 : f32
    %238 = vector.broadcast %cst_92 : f32 to vector<16x128xf32>
    %239 = arith.divf %238, %237 : vector<16x128xf32>
    %cst_93 = arith.constant 1.06140542 : f32
    %240 = vector.broadcast %cst_93 : f32 to vector<16x128xf32>
    %241 = arith.mulf %240, %239 : vector<16x128xf32>
    %cst_94 = arith.constant -1.45315206 : f32
    %242 = vector.broadcast %cst_94 : f32 to vector<16x128xf32>
    %243 = arith.addf %241, %242 : vector<16x128xf32>
    %244 = arith.mulf %243, %239 : vector<16x128xf32>
    %cst_95 = arith.constant 1.42141378 : f32
    %245 = vector.broadcast %cst_95 : f32 to vector<16x128xf32>
    %246 = arith.addf %244, %245 : vector<16x128xf32>
    %247 = arith.mulf %246, %239 : vector<16x128xf32>
    %cst_96 = arith.constant -0.284496725 : f32
    %248 = vector.broadcast %cst_96 : f32 to vector<16x128xf32>
    %249 = arith.addf %247, %248 : vector<16x128xf32>
    %250 = arith.mulf %249, %239 : vector<16x128xf32>
    %cst_97 = arith.constant 0.254829586 : f32
    %251 = vector.broadcast %cst_97 : f32 to vector<16x128xf32>
    %252 = arith.addf %250, %251 : vector<16x128xf32>
    %253 = arith.mulf %252, %239 : vector<16x128xf32>
    %cst_98 = arith.constant 0.000000e+00 : f32
    %254 = vector.broadcast %cst_98 : f32 to vector<16x128xf32>
    %255 = arith.subf %254, %233 : vector<16x128xf32>
    %256 = arith.mulf %255, %233 : vector<16x128xf32>
    %257 = math.exp %256 : vector<16x128xf32>
    %258 = arith.mulf %253, %257 : vector<16x128xf32>
    %cst_99 = arith.constant 1.000000e+00 : f32
    %259 = vector.broadcast %cst_99 : f32 to vector<16x128xf32>
    %260 = arith.subf %259, %258 : vector<16x128xf32>
    %cst_100 = arith.constant 0.000000e+00 : f32
    %261 = vector.broadcast %cst_100 : f32 to vector<16x128xf32>
    %262 = arith.cmpf oge, %232, %261 : vector<16x128xf32>
    %cst_101 = arith.constant 0.000000e+00 : f32
    %263 = vector.broadcast %cst_101 : f32 to vector<16x128xf32>
    %264 = arith.subf %263, %260 : vector<16x128xf32>
    %265 = arith.select %262, %260, %264 : vector<16x128xi1>, vector<16x128xf32>
    %cst_102 = arith.constant 1.000000e+00 : f32
    %266 = vector.broadcast %cst_102 : f32 to vector<16x128xf32>
    %267 = arith.addf %266, %265 : vector<16x128xf32>
    %268 = arith.mulf %230, %267 : vector<16x128xf32>
    %269 = arith.truncf %268 : vector<16x128xf32> to vector<16x128xbf16>
    %c0_103 = arith.constant 0 : index
    %c0_104 = arith.constant 0 : index
    %270 = vector.load %arg14[%c0_103, %c0_104] : memref<128x32xbf16, #tpu.memory_space<vmem>>, vector<128x32xbf16>
    %cst_105 = arith.constant dense<0.000000e+00> : vector<16x32xf32>
    %271 = tpu.matmul %269, %270, %cst_105 {dimension_numbers = #tpu.dot_dimension_numbers<[1], [0], [0], [1], [0, 0, 1, 1], [], []>} : vector<16x128xbf16>, vector<128x32xbf16>, vector<16x32xf32> -> vector<16x32xf32>
    %c0_106 = arith.constant 0 : index
    %c0_107 = arith.constant 0 : index
    %272 = vector.load %arg15[%c0_106, %c0_107] : memref<1x32xf32, #tpu.memory_space<vmem>>, vector<1x32xf32>
    %273 = vector.broadcast %272 : vector<1x32xf32> to vector<16x32xf32>
    %274 = arith.addf %271, %273 : vector<16x32xf32>
    %275 = arith.addf %198, %274 : vector<16x32xf32>
    %c0_108 = arith.constant 0 : index
    %c0_109 = arith.constant 0 : index
    %c0_110 = arith.constant 0 : index
    %276 = vector.load %arg16[%c0_108, %c0_109, %c0_110] : memref<1x16x32xf32, #tpu.memory_space<vmem>>, vector<1x16x32xf32>
    %277 = vector.shape_cast %276 : vector<1x16x32xf32> to vector<16x32xf32>
    %278 = vector.shape_cast %275 : vector<16x32xf32> to vector<1x16x32xf32>
    tpu.vector_store %arg16[%c0_108, %c0_109, %c0_110], %278 {strides = array<i32>} : memref<1x16x32xf32, #tpu.memory_space<vmem>>, vector<1x16x32xf32>,
    return
  }
  func.func @transform_0(%arg0: i32, %arg1: i32) -> (i32, i32, i32) {
    %c0_i32 = arith.constant 0 : i32
    %c0_i32_0 = arith.constant 0 : i32
    %c0_i32_1 = arith.constant 0 : i32
    return %arg0, %c0_i32, %c0_i32_0 : i32, i32, i32
  }
  func.func @transform_1(%arg0: i32, %arg1: i32) -> (i32, i32) {
    %c0_i32 = arith.constant 0 : i32
    %c0_i32_0 = arith.constant 0 : i32
    %c0_i32_1 = arith.constant 0 : i32
    return %c0_i32, %c0_i32_0 : i32, i32
  }
  func.func @transform_2(%arg0: i32, %arg1: i32) -> (i32, i32) {
    %c0_i32 = arith.constant 0 : i32
    %c0_i32_0 = arith.constant 0 : i32
    %c0_i32_1 = arith.constant 0 : i32
    return %c0_i32, %c0_i32_0 : i32, i32
  }
  func.func @transform_3(%arg0: i32, %arg1: i32) -> (i32, i32) {
    %c0_i32 = arith.constant 0 : i32
    %c0_i32_0 = arith.constant 0 : i32
    %c0_i32_1 = arith.constant 0 : i32
    return %c0_i32, %c0_i32_0 : i32, i32
  }
  func.func @transform_4(%arg0: i32, %arg1: i32) -> (i32, i32) {
    %c0_i32 = arith.constant 0 : i32
    %c0_i32_0 = arith.constant 0 : i32
    %c0_i32_1 = arith.constant 0 : i32
    return %c0_i32, %c0_i32_0 : i32, i32
  }
  func.func @transform_5(%arg0: i32, %arg1: i32) -> (i32, i32) {
    %c0_i32 = arith.constant 0 : i32
    %c0_i32_0 = arith.constant 0 : i32
    %c0_i32_1 = arith.constant 0 : i32
    return %c0_i32, %c0_i32_0 : i32, i32
  }
  func.func @transform_6(%arg0: i32, %arg1: i32) -> (i32, i32, i32) {
    %c0_i32 = arith.constant 0 : i32
    %c0_i32_0 = arith.constant 0 : i32
    %c0_i32_1 = arith.constant 0 : i32
    %c0_i32_2 = arith.constant 0 : i32
    return %c0_i32, %c0_i32_0, %c0_i32_1 : i32, i32, i32
  }
  func.func @transform_7(%arg0: i32, %arg1: i32) -> (i32, i32) {
    %c0_i32 = arith.constant 0 : i32
    %c0_i32_0 = arith.constant 0 : i32
    %c0_i32_1 = arith.constant 0 : i32
    return %c0_i32, %c0_i32_0 : i32, i32
  }
  func.func @transform_8(%arg0: i32, %arg1: i32) -> (i32, i32) {
    %c0_i32 = arith.constant 0 : i32
    %c0_i32_0 = arith.constant 0 : i32
    %c0_i32_1 = arith.constant 0 : i32
    return %c0_i32, %c0_i32_0 : i32, i32
  }
  func.func @transform_9(%arg0: i32, %arg1: i32) -> (i32, i32) {
    %c0_i32 = arith.constant 0 : i32
    %c0_i32_0 = arith.constant 0 : i32
    %c0_i32_1 = arith.constant 0 : i32
    return %c0_i32, %c0_i32_0 : i32, i32
  }
  func.func @transform_10(%arg0: i32, %arg1: i32) -> (i32, i32) {
    %c0_i32 = arith.constant 0 : i32
    %c0_i32_0 = arith.constant 0 : i32
    %c0_i32_1 = arith.constant 0 : i32
    return %c0_i32, %c0_i32_0 : i32, i32
  }
  func.func @transform_11(%arg0: i32, %arg1: i32) -> (i32, i32) {
    %c0_i32 = arith.constant 0 : i32
    %c0_i32_0 = arith.constant 0 : i32
    %c0_i32_1 = arith.constant 0 : i32
    return %c0_i32, %c0_i32_0 : i32, i32
  }
  func.func @transform_12(%arg0: i32, %arg1: i32) -> (i32, i32) {
    %c0_i32 = arith.constant 0 : i32
    %c0_i32_0 = arith.constant 0 : i32
    %c0_i32_1 = arith.constant 0 : i32
    return %c0_i32, %c0_i32_0 : i32, i32
  }
  func.func @transform_13(%arg0: i32, %arg1: i32) -> (i32, i32) {
    %c0_i32 = arith.constant 0 : i32
    %c0_i32_0 = arith.constant 0 : i32
    %c0_i32_1 = arith.constant 0 : i32
    return %c0_i32, %c0_i32_0 : i32, i32
  }
  func.func @transform_14(%arg0: i32, %arg1: i32) -> (i32, i32, i32) {
    %c0_i32 = arith.constant 0 : i32
    %c0_i32_0 = arith.constant 0 : i32
    return %arg0, %arg1, %c0_i32 : i32, i32, i32
  }
}

module attributes {stable_mosaic.version = 11 : i64} {
  func.func @head_kernel(%arg0: i32, %arg1: i32, %arg2: memref<1x16x32xf32, #tpu.memory_space<vmem>>, %arg3: memref<1x32xf32, #tpu.memory_space<vmem>>, %arg4: memref<1x32xf32, #tpu.memory_space<vmem>>, %arg5: memref<32x32xbf16, #tpu.memory_space<vmem>>, %arg6: memref<32x1xf32, #tpu.memory_space<vmem>>, %arg7: memref<1x32x16xf32, #tpu.memory_space<vmem>>) attributes {dimension_semantics = [#tpu.dimension_semantics<parallel>, #tpu.dimension_semantics<parallel>], iteration_bounds = array<i64: 2, 1>, scalar_prefetch = 0 : i64, scratch_operands = 0 : i64, tpu.core_type = #tpu.core_type<tc>, window_params = [{transform_indices = @transform_0, window_bounds = array<i64: 1, 16, 32>}, {pipeline_mode = #tpu.pipeline_mode<synchronous>, transform_indices = @transform_1, window_bounds = array<i64: 1, 32>}, {pipeline_mode = #tpu.pipeline_mode<synchronous>, transform_indices = @transform_2, window_bounds = array<i64: 1, 32>}, {pipeline_mode = #tpu.pipeline_mode<synchronous>, transform_indices = @transform_3, window_bounds = array<i64: 32, 32>}, {pipeline_mode = #tpu.pipeline_mode<synchronous>, transform_indices = @transform_4, window_bounds = array<i64: 32, 1>}, {transform_indices = @transform_5, window_bounds = array<i64: 1, 32, 16>}]} {
    %c0 = arith.constant 0 : index
    %c0_0 = arith.constant 0 : index
    %c0_1 = arith.constant 0 : index
    %0 = vector.load %arg2[%c0, %c0_0, %c0_1] : memref<1x16x32xf32, #tpu.memory_space<vmem>>, vector<1x16x32xf32>
    %1 = vector.shape_cast %0 : vector<1x16x32xf32> to vector<16x32xf32>
    %c0_2 = arith.constant 0 : index
    %c0_3 = arith.constant 0 : index
    %2 = vector.load %arg3[%c0_2, %c0_3] : memref<1x32xf32, #tpu.memory_space<vmem>>, vector<1x32xf32>
    %c0_4 = arith.constant 0 : index
    %c0_5 = arith.constant 0 : index
    %3 = vector.load %arg4[%c0_4, %c0_5] : memref<1x32xf32, #tpu.memory_space<vmem>>, vector<1x32xf32>
    %cst = arith.constant dense<0.000000e+00> : vector<16xf32>
    %4 = vector.multi_reduction <add>, %1, %cst [1] : vector<16x32xf32> to vector<16xf32>
    %5 = vector.shape_cast %4 : vector<16xf32> to vector<16x1xf32>
    %cst_6 = arith.constant 3.200000e+01 : f32
    %6 = vector.broadcast %cst_6 : f32 to vector<16x1xf32>
    %7 = arith.divf %5, %6 : vector<16x1xf32>
    %8 = vector.broadcast %7 : vector<16x1xf32> to vector<16x32xf32>
    %9 = arith.subf %1, %8 : vector<16x32xf32>
    %10 = arith.mulf %9, %9 : vector<16x32xf32>
    %cst_7 = arith.constant dense<0.000000e+00> : vector<16xf32>
    %11 = vector.multi_reduction <add>, %10, %cst_7 [1] : vector<16x32xf32> to vector<16xf32>
    %12 = vector.shape_cast %11 : vector<16xf32> to vector<16x1xf32>
    %cst_8 = arith.constant 3.200000e+01 : f32
    %13 = vector.broadcast %cst_8 : f32 to vector<16x1xf32>
    %14 = arith.divf %12, %13 : vector<16x1xf32>
    %15 = vector.broadcast %7 : vector<16x1xf32> to vector<16x32xf32>
    %16 = arith.subf %1, %15 : vector<16x32xf32>
    %cst_9 = arith.constant 9.99999974E-6 : f32
    %17 = vector.broadcast %cst_9 : f32 to vector<16x1xf32>
    %18 = arith.addf %14, %17 : vector<16x1xf32>
    %19 = math.rsqrt %18 : vector<16x1xf32>
    %20 = vector.broadcast %19 : vector<16x1xf32> to vector<16x32xf32>
    %21 = arith.mulf %16, %20 : vector<16x32xf32>
    %22 = vector.broadcast %2 : vector<1x32xf32> to vector<16x32xf32>
    %23 = arith.mulf %21, %22 : vector<16x32xf32>
    %24 = vector.broadcast %3 : vector<1x32xf32> to vector<16x32xf32>
    %25 = arith.addf %23, %24 : vector<16x32xf32>
    %26 = arith.truncf %25 : vector<16x32xf32> to vector<16x32xbf16>
    %c0_10 = arith.constant 0 : index
    %c0_11 = arith.constant 0 : index
    %27 = vector.load %arg5[%c0_10, %c0_11] : memref<32x32xbf16, #tpu.memory_space<vmem>>, vector<32x32xbf16>
    %cst_12 = arith.constant dense<0.000000e+00> : vector<32x16xf32>
    %28 = tpu.matmul %27, %26, %cst_12 {dimension_numbers = #tpu.dot_dimension_numbers<[0], [1], [1], [0], [0, 1, 1, 0], [], []>} : vector<32x32xbf16>, vector<16x32xbf16>, vector<32x16xf32> -> vector<32x16xf32>
    %c0_13 = arith.constant 0 : index
    %c0_14 = arith.constant 0 : index
    %29 = vector.load %arg6[%c0_13, %c0_14] : memref<32x1xf32, #tpu.memory_space<vmem>>, vector<32x1xf32>
    %30 = vector.broadcast %29 : vector<32x1xf32> to vector<32x16xf32>
    %31 = arith.addf %28, %30 : vector<32x16xf32>
    %c0_15 = arith.constant 0 : index
    %c0_16 = arith.constant 0 : index
    %c0_17 = arith.constant 0 : index
    %32 = vector.load %arg7[%c0_15, %c0_16, %c0_17] : memref<1x32x16xf32, #tpu.memory_space<vmem>>, vector<1x32x16xf32>
    %33 = vector.shape_cast %32 : vector<1x32x16xf32> to vector<32x16xf32>
    %34 = vector.shape_cast %31 : vector<32x16xf32> to vector<1x32x16xf32>
    tpu.vector_store %arg7[%c0_15, %c0_16, %c0_17], %34 {strides = array<i32>} : memref<1x32x16xf32, #tpu.memory_space<vmem>>, vector<1x32x16xf32>,
    return
  }
  func.func @transform_0(%arg0: i32, %arg1: i32) -> (i32, i32, i32) {
    %c0_i32 = arith.constant 0 : i32
    %c0_i32_0 = arith.constant 0 : i32
    return %arg0, %arg1, %c0_i32 : i32, i32, i32
  }
  func.func @transform_1(%arg0: i32, %arg1: i32) -> (i32, i32) {
    %c0_i32 = arith.constant 0 : i32
    %c0_i32_0 = arith.constant 0 : i32
    %c0_i32_1 = arith.constant 0 : i32
    return %c0_i32, %c0_i32_0 : i32, i32
  }
  func.func @transform_2(%arg0: i32, %arg1: i32) -> (i32, i32) {
    %c0_i32 = arith.constant 0 : i32
    %c0_i32_0 = arith.constant 0 : i32
    %c0_i32_1 = arith.constant 0 : i32
    return %c0_i32, %c0_i32_0 : i32, i32
  }
  func.func @transform_3(%arg0: i32, %arg1: i32) -> (i32, i32) {
    %c0_i32 = arith.constant 0 : i32
    %c0_i32_0 = arith.constant 0 : i32
    %c0_i32_1 = arith.constant 0 : i32
    return %c0_i32, %c0_i32_0 : i32, i32
  }
  func.func @transform_4(%arg0: i32, %arg1: i32) -> (i32, i32) {
    %c0_i32 = arith.constant 0 : i32
    %c0_i32_0 = arith.constant 0 : i32
    %c0_i32_1 = arith.constant 0 : i32
    return %c0_i32, %c0_i32_0 : i32, i32
  }
  func.func @transform_5(%arg0: i32, %arg1: i32) -> (i32, i32, i32) {
    %c0_i32 = arith.constant 0 : i32
    %c0_i32_0 = arith.constant 0 : i32
    return %arg0, %c0_i32, %arg1 : i32, i32, i32
  }
}

</mosaic_0001>

<llo_original>
// kernel: image_domain_mri_vit2d_forward.5
$region0: #{image_domain_mri_vit2d_forward.5}
  #allocation0 [shape = 'u32[]', space=smem, size = 0x4, offset = 0x4, fixed_abs, tag = 'smem constant byte address 0x4 - core index']
  #allocation1 [shape = 'u32[72,128]{1,0:T(1,128)}', space=vmem, size = 0x9000, scoped, tag = 'internal scratch']
  %s0 = inlined_call_operand.vmem [shape: f32[2,3,256], index: 0, kind: input, shape index: {}]
  %s1 = inlined_call_operand.vmem [shape: f32[2,3,256], index: 1, kind: input, shape index: {}]
  %s2 = inlined_call_operand.vmem [shape: f32[2,3,256], index: 2, kind: input, shape index: {}]
  %s3 = inlined_call_operand.vmem [shape: f32[2,3,256], index: 3, kind: input, shape index: {}]
  %s4 = inlined_call_operand.vmem [shape: f32[2,2,256], index: 4, kind: output, shape index: {}]
  %s5 = sld [smem:[#allocation0]]
  $region49: #{image_domain_mri_vit2d_forward.5} parent=0
    _
  %s7 = ssub.s32 1, %s5
  %s8 = scalar_select 0, %s7, %s5
  loop: start=0, step=1, limit=4
  $region2: #{image_domain_mri_vit2d_forward.5} parent=0 // loop_pre_header
    _
  $region3: #{image_domain_mri_vit2d_forward.5} parent=0 // loop_header
    %s10 = sphi 0, %s14
    %p11 = scmp.ge.s32.totalorder %s10, 4
    %s17 = sphi 0, %s29
    %s18 = sphi 0, %s25
    %s19 = sphi 0, %s17
    %s20 = sphi 0, %s18
    %s21 = sphi 0, %s19
    %s22 = sphi 0, %s20
    %s34 = sphi 0, %s36
    %s37 = sphi 0, %s34
    %s38 = sphi 0, %s37
    %s54 = sphi 0, %s38
    %s62 = sphi 0, %s64
    %s65 = sphi 0, %s62
    %s66 = sphi 0, %s65
    %s82 = sphi 0, %s66
    %s90 = sphi 0, %s92
    %s93 = sphi 0, %s90
    %s94 = sphi 0, %s93
    %s110 = sphi 0, %s94
    %s118 = sphi 0, %s120
    %s121 = sphi 0, %s118
    %s122 = sphi 0, %s121
    %s138 = sphi 0, %s122
    %s146 = sphi 0, %s148
    %s149 = sphi 0, %s146
    %s150 = sphi 0, %s149
    %s166 = sphi 0, %s150
  $region4: #{image_domain_mri_vit2d_forward.5} parent=0 // loop_header_branch
    %13 = sbr.rel (%p11) target = $region8
  $region5: #{image_domain_mri_vit2d_forward.5} parent=0 // loop_body
    %s15 = ssub.s32 %s10, 1
    %s16 = ssub.s32 %s10, 2
    %s23 = sadd.s32 1, %s18
    %p24 = scmp.ge.s32.totalorder %s23, 1
    %s25 = scalar_select %p24, 0, %s23
    %s26 = sadd.s32 1, %s17
    %s27 = scalar_select %p24, %s26, %s17
    %p28 = scmp.ge.s32.totalorder %s27, 2
    %s29 = scalar_select %p28, 0, %s27
    %s30 = ssub.s32 %s17, %s29
    %s31 = ssub.s32 %s18, %s25
    %s32 = sor.u32 %s30, %s31
    %p33 = scmp.eq.s32.totalorder %s32, 0
    %s35 = sadd.s32 %s34, 1
    %s36 = scalar_select %p33, %s34, %s35
    %p39 = pneg %p33
    %p40 = scmp.eq.s32.totalorder %s10, 1
    %p41 = por %p39, %p40
    %p42 = scmp.ne.s32.totalorder %s34, %s37
    %p43 = scmp.eq.s32.totalorder %s10, 0
    %p44 = por %p42, %p43
    %p45 = scmp.ne.s32.totalorder %s34, %s37
    %p46 = scmp.eq.s32.totalorder %s15, 1
    %p47 = por %p45, %p46
    %p48 = scmp.ne.s32.totalorder %s37, %s38
    %p49 = scmp.eq.s32.totalorder %s15, 0
    %p50 = por %p48, %p49
    %p51 = scmp.ne.s32.totalorder %s37, %s38
    %p52 = scmp.eq.s32.totalorder %s16, 1
    %p53 = por %p51, %p52
    %p55 = scmp.ne.s32.totalorder %s38, %s54
    %p56 = scmp.eq.s32.totalorder %s16, 0
    %p57 = por %p55, %p56
    %s58 = ssub.s32 %s17, %s29
    %s59 = ssub.s32 %s18, %s25
    %s60 = sor.u32 %s58, %s59
    %p61 = scmp.eq.s32.totalorder %s60, 0
    %s63 = sadd.s32 %s62, 1
    %s64 = scalar_select %p61, %s62, %s63
    %p67 = pneg %p61
    %p68 = scmp.eq.s32.totalorder %s10, 1
    %p69 = por %p67, %p68
    %p70 = scmp.ne.s32.totalorder %s62, %s65
    %p71 = scmp.eq.s32.totalorder %s10, 0
    %p72 = por %p70, %p71
    %p73 = scmp.ne.s32.totalorder %s62, %s65
    %p74 = scmp.eq.s32.totalorder %s15, 1
    %p75 = por %p73, %p74
    %p76 = scmp.ne.s32.totalorder %s65, %s66
    %p77 = scmp.eq.s32.totalorder %s15, 0
    %p78 = por %p76, %p77
    %p79 = scmp.ne.s32.totalorder %s65, %s66
    %p80 = scmp.eq.s32.totalorder %s16, 1
    %p81 = por %p79, %p80
    %p83 = scmp.ne.s32.totalorder %s66, %s82
    %p84 = scmp.eq.s32.totalorder %s16, 0
    %p85 = por %p83, %p84
    %s86 = ssub.s32 %s17, %s29
    %s87 = ssub.s32 %s18, %s25
    %s88 = sor.u32 %s86, %s87
    %p89 = scmp.eq.s32.totalorder %s88, 0
    %s91 = sadd.s32 %s90, 1
    %s92 = scalar_select %p89, %s90, %s91
    %p95 = pneg %p89
    %p96 = scmp.eq.s32.totalorder %s10, 1
    %p97 = por %p95, %p96
    %p98 = scmp.ne.s32.totalorder %s90, %s93
    %p99 = scmp.eq.s32.totalorder %s10, 0
    %p100 = por %p98, %p99
    %p101 = scmp.ne.s32.totalorder %s90, %s93
    %p102 = scmp.eq.s32.totalorder %s15, 1
    %p103 = por %p101, %p102
    %p104 = scmp.ne.s32.totalorder %s93, %s94
    %p105 = scmp.eq.s32.totalorder %s15, 0
    %p106 = por %p104, %p105
    %p107 = scmp.ne.s32.totalorder %s93, %s94
    %p108 = scmp.eq.s32.totalorder %s16, 1
    %p109 = por %p107, %p108
    %p111 = scmp.ne.s32.totalorder %s94, %s110
    %p112 = scmp.eq.s32.totalorder %s16, 0
    %p113 = por %p111, %p112
    %s114 = ssub.s32 %s17, %s29
    %s115 = ssub.s32 %s18, %s25
    %s116 = sor.u32 %s114, %s115
    %p117 = scmp.eq.s32.totalorder %s116, 0
    %s119 = sadd.s32 %s118, 1
    %s120 = scalar_select %p117, %s118, %s119
    %p123 = pneg %p117
    %p124 = scmp.eq.s32.totalorder %s10, 1
    %p125 = por %p123, %p124
    %p126 = scmp.ne.s32.totalorder %s118, %s121
    %p127 = scmp.eq.s32.totalorder %s10, 0
    %p128 = por %p126, %p127
    %p129 = scmp.ne.s32.totalorder %s118, %s121
    %p130 = scmp.eq.s32.totalorder %s15, 1
    %p131 = por %p129, %p130
    %p132 = scmp.ne.s32.totalorder %s121, %s122
    %p133 = scmp.eq.s32.totalorder %s15, 0
    %p134 = por %p132, %p133
    %p135 = scmp.ne.s32.totalorder %s121, %s122
    %p136 = scmp.eq.s32.totalorder %s16, 1
    %p137 = por %p135, %p136
    %p139 = scmp.ne.s32.totalorder %s122, %s138
    %p140 = scmp.eq.s32.totalorder %s16, 0
    %p141 = por %p139, %p140
    %s142 = ssub.s32 %s17, %s29
    %s143 = ssub.s32 %s18, %s25
    %s144 = sor.u32 %s142, %s143
    %p145 = scmp.eq.s32.totalorder %s144, 0
    %s147 = sadd.s32 %s146, 1
    %s148 = scalar_select %p145, %s146, %s147
    %p151 = pneg %p145
    %p152 = scmp.eq.s32.totalorder %s10, 1
    %p153 = por %p151, %p152
    %p154 = scmp.ne.s32.totalorder %s146, %s149
    %p155 = scmp.eq.s32.totalorder %s10, 0
    %p156 = por %p154, %p155
    %p157 = scmp.ne.s32.totalorder %s146, %s149
    %p158 = scmp.eq.s32.totalorder %s15, 1
    %p159 = por %p157, %p158
    %p160 = scmp.ne.s32.totalorder %s149, %s150
    %p161 = scmp.eq.s32.totalorder %s15, 0
    %p162 = por %p160, %p161
    %p163 = scmp.ne.s32.totalorder %s149, %s150
    %p164 = scmp.eq.s32.totalorder %s16, 1
    %p165 = por %p163, %p164
    %p167 = scmp.ne.s32.totalorder %s150, %s166
    %p168 = scmp.eq.s32.totalorder %s16, 0
    %p169 = por %p167, %p168
    %p170 = scmp.le.s32.totalorder 1, %s10
    %p171 = scmp.lt.s32.totalorder %s10, 3
    %p172 = pnand %p170, %p171
    %p173 = pneg %p172
    // Predicated region
    $region9: #{image_domain_mri_vit2d_forward.5} parent=5 // pred_check
      _
    $region10: #{image_domain_mri_vit2d_forward.5} parent=5 // pred_check_branch
      %175 = sbr.rel (%p172) target = $region12
    $region11: #{image_domain_mri_vit2d_forward.5} parent=5 // pred_region
      %s176 = ssub.s32 %s10, 1
    $region12: #{image_domain_mri_vit2d_forward.5} parent=5 // pred_fallthru
      _
    %p177 = scmp.lt.s32.totalorder %s10, 2
    // Predicated region
    $region13: #{image_domain_mri_vit2d_forward.5} parent=5 // pred_check
      %p178 = pneg %p177
    $region14: #{image_domain_mri_vit2d_forward.5} parent=5 // pred_check_branch
      %180 = sbr.rel (%p178) target = $region16
    $region15: #{image_domain_mri_vit2d_forward.5} parent=5 // pred_region
      // Predicated region
      $region17: #{image_domain_mri_vit2d_forward.5} parent=15 // pred_check
        %p181 = pneg %p44
      $region18: #{image_domain_mri_vit2d_forward.5} parent=15 // pred_check_branch
        %183 = sbr.rel (%p181) target = $region20
      $region19: #{image_domain_mri_vit2d_forward.5} parent=15 // pred_region
        %s184 = smul.u32 2, %s18
        %p185 = scmp.lt.s32.totalorder %s17, 1
        %s186 = scalar_select %p185, %s17, 1
        %p187 = scmp.lt.s32.totalorder %s184, 1
        %s188 = scalar_select %p187, %s184, 1
        %s189 = smul.addr %s186, 2
        %s190 = sadd.s32 %s188, %s189
        %s191 = smul.addr %s190, 4
        %s192 = scalar_lea.vmem %s0, %s191
        %s193 = smul.u32 2, %s18
      $region20: #{image_domain_mri_vit2d_forward.5} parent=15 // pred_fallthru
        _
      // Predicated region
      $region21: #{image_domain_mri_vit2d_forward.5} parent=15 // pred_check
        %p194 = pneg %p72
      $region22: #{image_domain_mri_vit2d_forward.5} parent=15 // pred_check_branch
        %196 = sbr.rel (%p194) target = $region24
      $region23: #{image_domain_mri_vit2d_forward.5} parent=15 // pred_region
        %s197 = smul.u32 2, %s18
        %p198 = scmp.lt.s32.totalorder %s17, 1
        %s199 = scalar_select %p198, %s17, 1
        %p200 = scmp.lt.s32.totalorder %s197, 1
        %s201 = scalar_select %p200, %s197, 1
        %s202 = smul.addr %s199, 2
        %s203 = sadd.s32 %s201, %s202
        %s204 = smul.addr %s203, 4
        %s205 = scalar_lea.vmem %s1, %s204
        %s206 = smul.u32 2, %s18
      $region24: #{image_domain_mri_vit2d_forward.5} parent=15 // pred_fallthru
        _
      // Predicated region
      $region25: #{image_domain_mri_vit2d_forward.5} parent=15 // pred_check
        %p207 = pneg %p100
      $region26: #{image_domain_mri_vit2d_forward.5} parent=15 // pred_check_branch
        %209 = sbr.rel (%p207) target = $region28
      $region27: #{image_domain_mri_vit2d_forward.5} parent=15 // pred_region
        %s210 = smul.u32 2, %s18
        %p211 = scmp.lt.s32.totalorder %s17, 1
        %s212 = scalar_select %p211, %s17, 1
        %p213 = scmp.lt.s32.totalorder %s210, 1
        %s214 = scalar_select %p213, %s210, 1
        %s215 = smul.addr %s212, 2
        %s216 = sadd.s32 %s214, %s215
        %s217 = smul.addr %s216, 4
        %s218 = scalar_lea.vmem %s2, %s217
        %s219 = smul.u32 2, %s18
      $region28: #{image_domain_mri_vit2d_forward.5} parent=15 // pred_fallthru
        _
      // Predicated region
      $region29: #{image_domain_mri_vit2d_forward.5} parent=15 // pred_check
        %p220 = pneg %p128
      $region30: #{image_domain_mri_vit2d_forward.5} parent=15 // pred_check_branch
        %222 = sbr.rel (%p220) target = $region32
      $region31: #{image_domain_mri_vit2d_forward.5} parent=15 // pred_region
        %s223 = smul.u32 2, %s18
        %p224 = scmp.lt.s32.totalorder %s17, 1
        %s225 = scalar_select %p224, %s17, 1
        %p226 = scmp.lt.s32.totalorder %s223, 1
        %s227 = scalar_select %p226, %s223, 1
        %s228 = smul.addr %s225, 2
        %s229 = sadd.s32 %s227, %s228
        %s230 = smul.addr %s229, 4
        %s231 = scalar_lea.vmem %s3, %s230
        %s232 = smul.u32 2, %s18
      $region32: #{image_domain_mri_vit2d_forward.5} parent=15 // pred_fallthru
        _
    $region16: #{image_domain_mri_vit2d_forward.5} parent=5 // pred_fallthru
      _
    %p233 = scmp.le.s32.totalorder 1, %s10
    %p234 = scmp.lt.s32.totalorder %s10, 3
    %p235 = pnand %p233, %p234
    %p236 = pneg %p235
    // Predicated region
    $region33: #{image_domain_mri_vit2d_forward.5} parent=5 // pred_check
      _
    $region34: #{image_domain_mri_vit2d_forward.5} parent=5 // pred_check_branch
      %238 = sbr.rel (%p235) target = $region36
    $region35: #{image_domain_mri_vit2d_forward.5} parent=5 // pred_region
      %s239 = ssub.s32 %s10, 1
      %s240 = smul.u32 2, %s20
      %p241 = scmp.lt.s32.totalorder %s19, 1
      %s242 = scalar_select %p241, %s19, 1
      %p243 = scmp.lt.s32.totalorder %s240, 1
      %s244 = scalar_select %p243, %s240, 1
      %s245 = smul.addr %s242, 2
      %s246 = sadd.s32 %s244, %s245
      %s247 = smul.addr %s246, 4
      %s248 = scalar_lea.vmem %s0, %s247
      %p249 = pneg %p50
      %p250 = pneg %p47
      %s251 = smul.u32 2, %s20
      %p252 = scmp.lt.s32.totalorder %s19, 1
      %s253 = scalar_select %p252, %s19, 1
      %p254 = scmp.lt.s32.totalorder %s251, 1
      %s255 = scalar_select %p254, %s251, 1
      %s256 = smul.addr %s253, 2
      %s257 = sadd.s32 %s255, %s256
      %s258 = smul.addr %s257, 4
      %s259 = scalar_lea.vmem %s1, %s258
      %p260 = pneg %p78
      %p261 = pneg %p75
      %s262 = smul.u32 2, %s20
      %p263 = scmp.lt.s32.totalorder %s19, 1
      %s264 = scalar_select %p263, %s19, 1
      %p265 = scmp.lt.s32.totalorder %s262, 1
      %s266 = scalar_select %p265, %s262, 1
      %s267 = smul.addr %s264, 2
      %s268 = sadd.s32 %s266, %s267
      %s269 = smul.addr %s268, 4
      %s270 = scalar_lea.vmem %s2, %s269
      %p271 = pneg %p106
      %p272 = pneg %p103
      %s273 = smul.u32 2, %s20
      %p274 = scmp.lt.s32.totalorder %s19, 1
      %s275 = scalar_select %p274, %s19, 1
      %p276 = scmp.lt.s32.totalorder %s273, 1
      %s277 = scalar_select %p276, %s273, 1
      %s278 = smul.addr %s275, 2
      %s279 = sadd.s32 %s277, %s278
      %s280 = smul.addr %s279, 4
      %s281 = scalar_lea.vmem %s3, %s280
      %p282 = pneg %p134
      %p283 = pneg %p131
      %p284 = pneg %p162
      %p285 = pneg %p159
      %s286 = smul.u32 2, %s20
      %p287 = scmp.lt.s32.totalorder %s19, 1
      %s288 = scalar_select %p287, %s19, 1
      %p289 = scmp.lt.s32.totalorder %s286, 1
      %s290 = scalar_select %p289, %s286, 1
      %s291 = smul.addr %s288, 2
      %s292 = sadd.s32 %s290, %s291
      %s293 = smul.addr %s292, 2
      %s294 = scalar_lea.vmem %s4, %s293
      %s295 = smul.u32 2, %s20
      %p296 = scmp.lt.s32.totalorder %s19, 1
      %s297 = scalar_select %p296, %s19, 1
      %p298 = scmp.lt.s32.totalorder %s295, 1
      %s299 = scalar_select %p298, %s295, 1
      %s300 = smul.addr %s297, 2
      %s301 = sadd.s32 %s299, %s300
      %s302 = smul.addr %s301, 4
      %s303 = scalar_lea.vmem %s0, %s302
      %s304 = smul.u32 2, %s20
      %s305 = smul.u32 2, %s20
      %p306 = scmp.lt.s32.totalorder %s19, 1
      %s307 = scalar_select %p306, %s19, 1
      %p308 = scmp.lt.s32.totalorder %s305, 1
      %s309 = scalar_select %p308, %s305, 1
      %s310 = smul.addr %s307, 2
      %s311 = sadd.s32 %s309, %s310
      %s312 = smul.addr %s311, 4
      %s313 = scalar_lea.vmem %s1, %s312
      %s314 = smul.u32 2, %s20
      %s315 = smul.u32 2, %s20
      %p316 = scmp.lt.s32.totalorder %s19, 1
      %s317 = scalar_select %p316, %s19, 1
      %p318 = scmp.lt.s32.totalorder %s315, 1
      %s319 = scalar_select %p318, %s315, 1
      %s320 = smul.addr %s317, 2
      %s321 = sadd.s32 %s319, %s320
      %s322 = smul.addr %s321, 4
      %s323 = scalar_lea.vmem %s2, %s322
      %s324 = smul.u32 2, %s20
      %s325 = smul.u32 2, %s20
      %p326 = scmp.lt.s32.totalorder %s19, 1
      %s327 = scalar_select %p326, %s19, 1
      %p328 = scmp.lt.s32.totalorder %s325, 1
      %s329 = scalar_select %p328, %s325, 1
      %s330 = smul.addr %s327, 2
      %s331 = sadd.s32 %s329, %s330
      %s332 = smul.addr %s331, 4
      %s333 = scalar_lea.vmem %s3, %s332
      %s334 = smul.u32 2, %s20
      %s335 = smul.u32 2, %s20
      %p336 = scmp.lt.s32.totalorder %s19, 1
      %s337 = scalar_select %p336, %s19, 1
      %p338 = scmp.lt.s32.totalorder %s335, 1
      %s339 = scalar_select %p338, %s335, 1
      %s340 = smul.addr %s337, 2
      %s341 = sadd.s32 %s339, %s340
      %s342 = smul.addr %s341, 2
      %s343 = scalar_lea.vmem %s4, %s342
      %s344 = smul.u32 2, %s20
      %v345 = vld [vmem:[%s303] sm:$0x77]
      %v346 = vld [vmem:[%s313] sm:$0x77]
      %v347 = vld [vmem:[%s323] sm:$0x77]
      %v348 = vld [vmem:[%s333] sm:$0x77]
      %v349 = vmul.f32 %v347, %v345
      %v350 = vmul.f32 %v348, %v346
      %v351 = vadd.f32 %v349, %v350
      %353 = vst [vmem:[#allocation1] ss:$2 sm:$0xff] %v351
      %v354 = vld.sshfl [vmem:[#allocation1] sm:$0xff pattern:$0x75316420]
      %v355 = vld.sshfl [vmem:[#allocation1 + $0x8] sm:$0xff pattern:$0x75316420]
      %vm358 = vcmask 1042432
      %v359 = vsel %vm358, %v354, 0.0
      %v360 = vrot.slane %v359, 4
      %v361 = vadd.f32 %v359, %v360
      %v362 = vrot.slane %v361, 2
      %v363 = vadd.f32 %v361, %v362
      %v364 = vrot.slane %v363, 1
      %v365 = vadd.f32 %v363, %v364
      %v366 = vsel %vm358, %v355, 0.0
      %v367 = vrot.slane %v366, 4
      %v368 = vadd.f32 %v366, %v367
      %v369 = vrot.slane %v368, 2
      %v370 = vadd.f32 %v368, %v369
      %v371 = vrot.slane %v370, 1
      %v372 = vadd.f32 %v370, %v371
      %v375 = vrot.slane %v372, 7
      %vm376 = vcmask 1040384
      %v377 = vsel %vm376, %v365, %v375
      %v379 = vlaneseq
      %vm380 = vcmp.ge.s32.totalorder %v379, 0
      %vm381 = vcmp.lt.s32.totalorder %v379, 256
      %vm382 = vmand %vm380, %vm381
      %383 = vst.msk [vmem:[%s343] ss:$2 sm:$0x3] %vm382, %v377
      %v384 = vmul.f32 %v347, %v346
      %v385 = vmul.f32 %v348, %v345
      %v386 = vsub.f32 %v384, %v385
      %388 = vst [vmem:[#allocation1] ss:$2 sm:$0xff] %v386
      %v389 = vld.sshfl [vmem:[#allocation1] sm:$0xff pattern:$0x75316420]
      %v390 = vld.sshfl [vmem:[#allocation1 + $0x8] sm:$0xff pattern:$0x75316420]
      %v393 = vsel %vm358, %v389, 0.0
      %v394 = vrot.slane %v393, 4
      %v395 = vadd.f32 %v393, %v394
      %v396 = vrot.slane %v395, 2
      %v397 = vadd.f32 %v395, %v396
      %v398 = vrot.slane %v397, 1
      %v399 = vadd.f32 %v397, %v398
      %v400 = vsel %vm358, %v390, 0.0
      %v401 = vrot.slane %v400, 4
      %v402 = vadd.f32 %v400, %v401
      %v403 = vrot.slane %v402, 2
      %v404 = vadd.f32 %v402, %v403
      %v405 = vrot.slane %v404, 1
      %v406 = vadd.f32 %v404, %v405
      %v409 = vrot.slane %v406, 7
      %v410 = vsel %vm376, %v399, %v409
      %s412 = scalar_lea.vmem %s343, 1
      %413 = vst.msk [vmem:[%s412] ss:$2 sm:$0x3] %vm382, %v410
      %s414 = smul.u32 2, %s20
      %p415 = scmp.lt.s32.totalorder %s19, 1
      %s416 = scalar_select %p415, %s19, 1
      %p417 = scmp.lt.s32.totalorder %s414, 1
      %s418 = scalar_select %p417, %s414, 1
      %s419 = smul.addr %s416, 2
      %s420 = sadd.s32 %s418, %s419
      %s421 = smul.addr %s420, 2
      %s422 = scalar_lea.vmem %s4, %s421
      // Predicated region
      $region37: #{image_domain_mri_vit2d_forward.5} parent=35 // pred_check
        %p423 = pneg %p159
      $region38: #{image_domain_mri_vit2d_forward.5} parent=35 // pred_check_branch
        %425 = sbr.rel (%p423) target = $region40
      $region39: #{image_domain_mri_vit2d_forward.5} parent=35 // pred_region
        %s426 = smul.u32 2, %s20
      $region40: #{image_domain_mri_vit2d_forward.5} parent=35 // pred_fallthru
        _
    $region36: #{image_domain_mri_vit2d_forward.5} parent=5 // pred_fallthru
      _
    %p427 = scmp.le.s32.totalorder 2, %s10
    // Predicated region
    $region41: #{image_domain_mri_vit2d_forward.5} parent=5 // pred_check
      %p428 = pneg %p427
    $region42: #{image_domain_mri_vit2d_forward.5} parent=5 // pred_check_branch
      %430 = sbr.rel (%p428) target = $region44
    $region43: #{image_domain_mri_vit2d_forward.5} parent=5 // pred_region
      %s431 = ssub.s32 %s10, 2
      // Predicated region
      $region45: #{image_domain_mri_vit2d_forward.5} parent=43 // pred_check
        %p432 = pneg %p165
      $region46: #{image_domain_mri_vit2d_forward.5} parent=43 // pred_check_branch
        %434 = sbr.rel (%p432) target = $region48
      $region47: #{image_domain_mri_vit2d_forward.5} parent=43 // pred_region
        %s435 = smul.u32 2, %s22
        %p436 = scmp.lt.s32.totalorder %s21, 1
        %s437 = scalar_select %p436, %s21, 1
        %p438 = scmp.lt.s32.totalorder %s435, 1
        %s439 = scalar_select %p438, %s435, 1
        %s440 = smul.addr %s437, 2
        %s441 = sadd.s32 %s439, %s440
        %s442 = smul.addr %s441, 2
        %s443 = scalar_lea.vmem %s4, %s442
      $region48: #{image_domain_mri_vit2d_forward.5} parent=43 // pred_fallthru
        _
    $region44: #{image_domain_mri_vit2d_forward.5} parent=5 // pred_fallthru
      _
  $region6: #{image_domain_mri_vit2d_forward.5} parent=0 // loop_footer
    %s14 = sadd.s32 1, %s10
  $region7: #{image_domain_mri_vit2d_forward.5} parent=0 // loop_footer_branch
    %9 = sbr.rel target = $region3
  $region8: #{image_domain_mri_vit2d_forward.5} parent=0 // loop_exit
    _

// kernel: image_domain_mri_vit2d_forward.6
$region0: #{image_domain_mri_vit2d_forward.6}
  #allocation0 [shape = 'u32[]', space=smem, size = 0x4, offset = 0x4, fixed_abs, tag = 'smem constant byte address 0x4 - core index']
  #allocation1 [shape = 'u32[72,128]{1,0:T(1,128)}', space=vmem, size = 0x9000, scoped, tag = 'internal scratch']
  %s0 = inlined_call_operand.vmem [shape: f32[2,16,32], index: 0, kind: input, shape index: {}]
  %s1 = inlined_call_operand.vmem [shape: bf16[32,32], index: 1, kind: input, shape index: {}]
  %s2 = inlined_call_operand.vmem [shape: f32[1,32], index: 2, kind: input, shape index: {}]
  %s3 = inlined_call_operand.vmem [shape: f32[16,32], index: 3, kind: input, shape index: {}]
  %s4 = inlined_call_operand.vmem [shape: f32[2,16,32], index: 4, kind: output, shape index: {}]
  %s5 = sld [smem:[#allocation0]]
  $region49: #{image_domain_mri_vit2d_forward.6} parent=0
    _
  %s7 = ssub.s32 1, %s5
  %s8 = scalar_select 0, %s7, %s5
  loop: start=0, step=1, limit=4
  $region2: #{image_domain_mri_vit2d_forward.6} parent=0 // loop_pre_header
    _
  $region3: #{image_domain_mri_vit2d_forward.6} parent=0 // loop_header
    %s10 = sphi 0, %s14
    %p11 = scmp.ge.s32.totalorder %s10, 4
    %s17 = sphi 0, %s29
    %s18 = sphi 0, %s25
    %s19 = sphi 0, %s17
    %s20 = sphi 0, %s18
    %s21 = sphi 0, %s19
    %s22 = sphi 0, %s20
    %s34 = sphi 0, %s36
    %s37 = sphi 0, %s34
    %s38 = sphi 0, %s37
    %s54 = sphi 0, %s38
    %s58 = sphi 0, %s58
    %s60 = sphi 0, %s58
    %s61 = sphi 0, %s60
    %s75 = sphi 0, %s61
    %s79 = sphi 0, %s79
    %s81 = sphi 0, %s79
    %s82 = sphi 0, %s81
    %s96 = sphi 0, %s82
    %s102 = sphi 0, %s104
    %s105 = sphi 0, %s102
    %s106 = sphi 0, %s105
    %s122 = sphi 0, %s106
    %s130 = sphi 0, %s132
    %s133 = sphi 0, %s130
    %s134 = sphi 0, %s133
    %s150 = sphi 0, %s134
  $region4: #{image_domain_mri_vit2d_forward.6} parent=0 // loop_header_branch
    %13 = sbr.rel (%p11) target = $region8
  $region5: #{image_domain_mri_vit2d_forward.6} parent=0 // loop_body
    %s15 = ssub.s32 %s10, 1
    %s16 = ssub.s32 %s10, 2
    %s23 = sadd.s32 1, %s18
    %p24 = scmp.ge.s32.totalorder %s23, 1
    %s25 = scalar_select %p24, 0, %s23
    %s26 = sadd.s32 1, %s17
    %s27 = scalar_select %p24, %s26, %s17
    %p28 = scmp.ge.s32.totalorder %s27, 2
    %s29 = scalar_select %p28, 0, %s27
    %s30 = ssub.s32 %s17, %s29
    %s31 = ssub.s32 %s18, %s25
    %s32 = sor.u32 %s30, %s31
    %p33 = scmp.eq.s32.totalorder %s32, 0
    %s35 = sadd.s32 %s34, 1
    %s36 = scalar_select %p33, %s34, %s35
    %p39 = pneg %p33
    %p40 = scmp.eq.s32.totalorder %s10, 1
    %p41 = por %p39, %p40
    %p42 = scmp.ne.s32.totalorder %s34, %s37
    %p43 = scmp.eq.s32.totalorder %s10, 0
    %p44 = por %p42, %p43
    %p45 = scmp.ne.s32.totalorder %s34, %s37
    %p46 = scmp.eq.s32.totalorder %s15, 1
    %p47 = por %p45, %p46
    %p48 = scmp.ne.s32.totalorder %s37, %s38
    %p49 = scmp.eq.s32.totalorder %s15, 0
    %p50 = por %p48, %p49
    %p51 = scmp.ne.s32.totalorder %s37, %s38
    %p52 = scmp.eq.s32.totalorder %s16, 1
    %p53 = por %p51, %p52
    %p55 = scmp.ne.s32.totalorder %s38, %s54
    %p56 = scmp.eq.s32.totalorder %s16, 0
    %p57 = por %p55, %p56
    %s59 = sadd.s32 %s58, 1
    %p62 = scmp.eq.s32.totalorder %s10, 1
    %p63 = scmp.ne.s32.totalorder %s58, %s60
    %p64 = scmp.eq.s32.totalorder %s10, 0
    %p65 = por %p63, %p64
    %p66 = scmp.ne.s32.totalorder %s58, %s60
    %p67 = scmp.eq.s32.totalorder %s15, 1
    %p68 = por %p66, %p67
    %p69 = scmp.ne.s32.totalorder %s60, %s61
    %p70 = scmp.eq.s32.totalorder %s15, 0
    %p71 = por %p69, %p70
    %p72 = scmp.ne.s32.totalorder %s60, %s61
    %p73 = scmp.eq.s32.totalorder %s16, 1
    %p74 = por %p72, %p73
    %p76 = scmp.ne.s32.totalorder %s61, %s75
    %p77 = scmp.eq.s32.totalorder %s16, 0
    %p78 = por %p76, %p77
    %s80 = sadd.s32 %s79, 1
    %p83 = scmp.eq.s32.totalorder %s10, 1
    %p84 = scmp.ne.s32.totalorder %s79, %s81
    %p85 = scmp.eq.s32.totalorder %s10, 0
    %p86 = por %p84, %p85
    %p87 = scmp.ne.s32.totalorder %s79, %s81
    %p88 = scmp.eq.s32.totalorder %s15, 1
    %p89 = por %p87, %p88
    %p90 = scmp.ne.s32.totalorder %s81, %s82
    %p91 = scmp.eq.s32.totalorder %s15, 0
    %p92 = por %p90, %p91
    %p93 = scmp.ne.s32.totalorder %s81, %s82
    %p94 = scmp.eq.s32.totalorder %s16, 1
    %p95 = por %p93, %p94
    %p97 = scmp.ne.s32.totalorder %s82, %s96
    %p98 = scmp.eq.s32.totalorder %s16, 0
    %p99 = por %p97, %p98
    %s100 = ssub.s32 %s18, %s25
    %p101 = scmp.eq.s32.totalorder %s100, 0
    %s103 = sadd.s32 %s102, 1
    %s104 = scalar_select %p101, %s102, %s103
    %p107 = pneg %p101
    %p108 = scmp.eq.s32.totalorder %s10, 1
    %p109 = por %p107, %p108
    %p110 = scmp.ne.s32.totalorder %s102, %s105
    %p111 = scmp.eq.s32.totalorder %s10, 0
    %p112 = por %p110, %p111
    %p113 = scmp.ne.s32.totalorder %s102, %s105
    %p114 = scmp.eq.s32.totalorder %s15, 1
    %p115 = por %p113, %p114
    %p116 = scmp.ne.s32.totalorder %s105, %s106
    %p117 = scmp.eq.s32.totalorder %s15, 0
    %p118 = por %p116, %p117
    %p119 = scmp.ne.s32.totalorder %s105, %s106
    %p120 = scmp.eq.s32.totalorder %s16, 1
    %p121 = por %p119, %p120
    %p123 = scmp.ne.s32.totalorder %s106, %s122
    %p124 = scmp.eq.s32.totalorder %s16, 0
    %p125 = por %p123, %p124
    %s126 = ssub.s32 %s17, %s29
    %s127 = ssub.s32 %s18, %s25
    %s128 = sor.u32 %s126, %s127
    %p129 = scmp.eq.s32.totalorder %s128, 0
    %s131 = sadd.s32 %s130, 1
    %s132 = scalar_select %p129, %s130, %s131
    %p135 = pneg %p129
    %p136 = scmp.eq.s32.totalorder %s10, 1
    %p137 = por %p135, %p136
    %p138 = scmp.ne.s32.totalorder %s130, %s133
    %p139 = scmp.eq.s32.totalorder %s10, 0
    %p140 = por %p138, %p139
    %p141 = scmp.ne.s32.totalorder %s130, %s133
    %p142 = scmp.eq.s32.totalorder %s15, 1
    %p143 = por %p141, %p142
    %p144 = scmp.ne.s32.totalorder %s133, %s134
    %p145 = scmp.eq.s32.totalorder %s15, 0
    %p146 = por %p144, %p145
    %p147 = scmp.ne.s32.totalorder %s133, %s134
    %p148 = scmp.eq.s32.totalorder %s16, 1
    %p149 = por %p147, %p148
    %p151 = scmp.ne.s32.totalorder %s134, %s150
    %p152 = scmp.eq.s32.totalorder %s16, 0
    %p153 = por %p151, %p152
    %p154 = scmp.le.s32.totalorder 1, %s10
    %p155 = scmp.lt.s32.totalorder %s10, 3
    %p156 = pnand %p154, %p155
    %p157 = pneg %p156
    // Predicated region
    $region9: #{image_domain_mri_vit2d_forward.6} parent=5 // pred_check
      _
    $region10: #{image_domain_mri_vit2d_forward.6} parent=5 // pred_check_branch
      %159 = sbr.rel (%p156) target = $region12
    $region11: #{image_domain_mri_vit2d_forward.6} parent=5 // pred_region
      %s160 = ssub.s32 %s10, 1
      // Predicated region
      $region13: #{image_domain_mri_vit2d_forward.6} parent=11 // pred_check
        %p161 = pneg %p71
      $region14: #{image_domain_mri_vit2d_forward.6} parent=11 // pred_check_branch
        %163 = sbr.rel (%p161) target = $region16
      $region15: #{image_domain_mri_vit2d_forward.6} parent=11 // pred_region
        _
      $region16: #{image_domain_mri_vit2d_forward.6} parent=11 // pred_fallthru
        _
      // Predicated region
      $region17: #{image_domain_mri_vit2d_forward.6} parent=11 // pred_check
        %p164 = pneg %p92
      $region18: #{image_domain_mri_vit2d_forward.6} parent=11 // pred_check_branch
        %166 = sbr.rel (%p164) target = $region20
      $region19: #{image_domain_mri_vit2d_forward.6} parent=11 // pred_region
        _
      $region20: #{image_domain_mri_vit2d_forward.6} parent=11 // pred_fallthru
        _
      // Predicated region
      $region21: #{image_domain_mri_vit2d_forward.6} parent=11 // pred_check
        %p167 = pneg %p118
      $region22: #{image_domain_mri_vit2d_forward.6} parent=11 // pred_check_branch
        %169 = sbr.rel (%p167) target = $region24
      $region23: #{image_domain_mri_vit2d_forward.6} parent=11 // pred_region
        %s170 = smul.u32 2, %s20
        %p171 = scmp.lt.s32.totalorder %s170, 1
        %s172 = scalar_select %p171, %s170, 1
        %s173 = smul.addr %s172, 8
        %s174 = scalar_lea.vmem %s3, %s173
        %s175 = smul.u32 2, %s20
      $region24: #{image_domain_mri_vit2d_forward.6} parent=11 // pred_fallthru
        _
    $region12: #{image_domain_mri_vit2d_forward.6} parent=5 // pred_fallthru
      _
    %p176 = scmp.lt.s32.totalorder %s10, 2
    // Predicated region
    $region25: #{image_domain_mri_vit2d_forward.6} parent=5 // pred_check
      %p177 = pneg %p176
    $region26: #{image_domain_mri_vit2d_forward.6} parent=5 // pred_check_branch
      %179 = sbr.rel (%p177) target = $region28
    $region27: #{image_domain_mri_vit2d_forward.6} parent=5 // pred_region
      // Predicated region
      $region29: #{image_domain_mri_vit2d_forward.6} parent=27 // pred_check
        %p180 = pneg %p44
      $region30: #{image_domain_mri_vit2d_forward.6} parent=27 // pred_check_branch
        %182 = sbr.rel (%p180) target = $region32
      $region31: #{image_domain_mri_vit2d_forward.6} parent=27 // pred_region
        %s183 = smul.u32 2, %s18
        %p184 = scmp.lt.s32.totalorder %s17, 1
        %s185 = scalar_select %p184, %s17, 1
        %p186 = scmp.lt.s32.totalorder %s183, 1
        %s187 = scalar_select %p186, %s183, 1
        %s188 = smul.addr %s185, 2
        %s189 = sadd.s32 %s187, %s188
        %s190 = smul.addr %s189, 8
        %s191 = scalar_lea.vmem %s0, %s190
        %s192 = smul.u32 2, %s18
      $region32: #{image_domain_mri_vit2d_forward.6} parent=27 // pred_fallthru
        _
    $region28: #{image_domain_mri_vit2d_forward.6} parent=5 // pred_fallthru
      _
    %p193 = scmp.le.s32.totalorder 1, %s10
    %p194 = scmp.lt.s32.totalorder %s10, 3
    %p195 = pnand %p193, %p194
    %p196 = pneg %p195
    // Predicated region
    $region33: #{image_domain_mri_vit2d_forward.6} parent=5 // pred_check
      _
    $region34: #{image_domain_mri_vit2d_forward.6} parent=5 // pred_check_branch
      %198 = sbr.rel (%p195) target = $region36
    $region35: #{image_domain_mri_vit2d_forward.6} parent=5 // pred_region
      %s199 = ssub.s32 %s10, 1
      %s200 = smul.u32 2, %s20
      %p201 = scmp.lt.s32.totalorder %s19, 1
      %s202 = scalar_select %p201, %s19, 1
      %p203 = scmp.lt.s32.totalorder %s200, 1
      %s204 = scalar_select %p203, %s200, 1
      %s205 = smul.addr %s202, 2
      %s206 = sadd.s32 %s204, %s205
      %s207 = smul.addr %s206, 8
      %s208 = scalar_lea.vmem %s0, %s207
      %p209 = pneg %p50
      %p210 = pneg %p47
      %p211 = pneg %p71
      %p212 = pneg %p68
      %p213 = pneg %p92
      %p214 = pneg %p89
      %s215 = smul.u32 2, %s20
      %p216 = scmp.lt.s32.totalorder %s215, 1
      %s217 = scalar_select %p216, %s215, 1
      %s218 = smul.addr %s217, 8
      %s219 = scalar_lea.vmem %s3, %s218
      %p220 = pneg %p118
      %p221 = pneg %p115
      %p222 = pneg %p146
      %p223 = pneg %p143
      %s224 = smul.u32 2, %s20
      %p225 = scmp.lt.s32.totalorder %s19, 1
      %s226 = scalar_select %p225, %s19, 1
      %p227 = scmp.lt.s32.totalorder %s224, 1
      %s228 = scalar_select %p227, %s224, 1
      %s229 = smul.addr %s226, 2
      %s230 = sadd.s32 %s228, %s229
      %s231 = smul.addr %s230, 8
      %s232 = scalar_lea.vmem %s4, %s231
      %s233 = smul.u32 2, %s20
      %p234 = scmp.lt.s32.totalorder %s19, 1
      %s235 = scalar_select %p234, %s19, 1
      %p236 = scmp.lt.s32.totalorder %s233, 1
      %s237 = scalar_select %p236, %s233, 1
      %s238 = smul.addr %s235, 2
      %s239 = sadd.s32 %s237, %s238
      %s240 = smul.addr %s239, 8
      %s241 = scalar_lea.vmem %s0, %s240
      %s242 = smul.u32 2, %s20
      %s243 = smul.u32 2, %s20
      %p244 = scmp.lt.s32.totalorder %s243, 1
      %s245 = scalar_select %p244, %s243, 1
      %s246 = smul.addr %s245, 8
      %s247 = scalar_lea.vmem %s3, %s246
      %s248 = smul.u32 2, %s20
      %s249 = smul.u32 2, %s20
      %p250 = scmp.lt.s32.totalorder %s19, 1
      %s251 = scalar_select %p250, %s19, 1
      %p252 = scmp.lt.s32.totalorder %s249, 1
      %s253 = scalar_select %p252, %s249, 1
      %s254 = smul.addr %s251, 2
      %s255 = sadd.s32 %s253, %s254
      %s256 = smul.addr %s255, 8
      %s257 = scalar_lea.vmem %s4, %s256
      %s258 = smul.u32 2, %s20
      %v260 = vld [vmem:[%s241] sm:$0xff]
      %v261 = vld [vmem:[%s241 + $0x8] sm:$0xff]
      %v262 = vpack.c.bf16 %v261, %v260
      %v263 = vld [vmem:[%s1] sm:$0xf]
      %v264 = vld [vmem:[%s1 + $0x4] sm:$0xf]
      %v265 = vld [vmem:[%s1 + $0x8] sm:$0xf]
      %v266 = vld [vmem:[%s1 + $0xc] sm:$0xf]
      %v267 = vld [vmem:[%s2] sm:$0x1]
      %v269 = vperm.slane %v267, 0
      %v275 = vunpack.c.l.b16 %v263
      %v276 = vunpack.c.l.b16 %v264
      %v277 = vunpack.c.l.b16 %v265
      %v278 = vunpack.c.l.b16 %v266
      %v279 = vpack.c.b16 %v276, %v275
      %v280 = vpack.c.b16 %v278, %v277
      %vm283 = vcmask 261120
      %v285 = vsel %vm283, %v262, 0
      %287 = vmatpush.bf16.msra.mxu0 0
      %288 = vmatpush.bf16.msra.mxu0 0
      %289 = vmatpush.bf16.msra.mxu0 0
      %290 = vmatpush.bf16.msra.mxu0 0
      %291 = vmatpush.bf16.msra.mxu0 0
      %292 = vmatpush.bf16.msra.mxu0 0
      %293 = vmatpush.bf16.msra.mxu0 %v280
      %294 = vmatpush.bf16.msra.mxu0 %v279
      %295 = vmatmul.bf16.gmra.mxu0 %v285
      %v296 = vpop.f32.mrf.mxu0
      %v297 = vadd.f32 %v269, %v296
      %v298 = vpop.f32.mrf.mxu0
      %v299 = vadd.f32 %v269, %v298
      %300 = vdwg.mxu0
      %v301 = vld [vmem:[%s247] sm:$0xff]
      %v302 = vld [vmem:[%s247 + $0x8] sm:$0xff]
      %v303 = vadd.f32 %v297, %v301
      %v304 = vadd.f32 %v299, %v302
      %305 = vst.msk [vmem:[%s257] sm:$0xff] %vm283, %v303
      %306 = vst.msk [vmem:[%s257 + $0x8] sm:$0xff] %vm283, %v304
      %s307 = smul.u32 2, %s20
      %p308 = scmp.lt.s32.totalorder %s19, 1
      %s309 = scalar_select %p308, %s19, 1
      %p310 = scmp.lt.s32.totalorder %s307, 1
      %s311 = scalar_select %p310, %s307, 1
      %s312 = smul.addr %s309, 2
      %s313 = sadd.s32 %s311, %s312
      %s314 = smul.addr %s313, 8
      %s315 = scalar_lea.vmem %s4, %s314
      // Predicated region
      $region37: #{image_domain_mri_vit2d_forward.6} parent=35 // pred_check
        %p316 = pneg %p143
      $region38: #{image_domain_mri_vit2d_forward.6} parent=35 // pred_check_branch
        %318 = sbr.rel (%p316) target = $region40
      $region39: #{image_domain_mri_vit2d_forward.6} parent=35 // pred_region
        %s319 = smul.u32 2, %s20
      $region40: #{image_domain_mri_vit2d_forward.6} parent=35 // pred_fallthru
        _
    $region36: #{image_domain_mri_vit2d_forward.6} parent=5 // pred_fallthru
      _
    %p320 = scmp.le.s32.totalorder 2, %s10
    // Predicated region
    $region41: #{image_domain_mri_vit2d_forward.6} parent=5 // pred_check
      %p321 = pneg %p320
    $region42: #{image_domain_mri_vit2d_forward.6} parent=5 // pred_check_branch
      %323 = sbr.rel (%p321) target = $region44
    $region43: #{image_domain_mri_vit2d_forward.6} parent=5 // pred_region
      %s324 = ssub.s32 %s10, 2
      // Predicated region
      $region45: #{image_domain_mri_vit2d_forward.6} parent=43 // pred_check
        %p325 = pneg %p149
      $region46: #{image_domain_mri_vit2d_forward.6} parent=43 // pred_check_branch
        %327 = sbr.rel (%p325) target = $region48
      $region47: #{image_domain_mri_vit2d_forward.6} parent=43 // pred_region
        %s328 = smul.u32 2, %s22
        %p329 = scmp.lt.s32.totalorder %s21, 1
        %s330 = scalar_select %p329, %s21, 1
        %p331 = scmp.lt.s32.totalorder %s328, 1
        %s332 = scalar_select %p331, %s328, 1
        %s333 = smul.addr %s330, 2
        %s334 = sadd.s32 %s332, %s333
        %s335 = smul.addr %s334, 8
        %s336 = scalar_lea.vmem %s4, %s335
      $region48: #{image_domain_mri_vit2d_forward.6} parent=43 // pred_fallthru
        _
    $region44: #{image_domain_mri_vit2d_forward.6} parent=5 // pred_fallthru
      _
  $region6: #{image_domain_mri_vit2d_forward.6} parent=0 // loop_footer
    %s14 = sadd.s32 1, %s10
  $region7: #{image_domain_mri_vit2d_forward.6} parent=0 // loop_footer_branch
    %9 = sbr.rel target = $region3
  $region8: #{image_domain_mri_vit2d_forward.6} parent=0 // loop_exit
    _

// kernel: image_domain_mri_vit2d_forward.9
$region0: #{image_domain_mri_vit2d_forward.9}
  #allocation0 [shape = 'u32[]', space=smem, size = 0x4, offset = 0x4, fixed_abs, tag = 'smem constant byte address 0x4 - core index']
  #allocation1 [shape = 'u32[72,128]{1,0:T(1,128)}', space=vmem, size = 0x9000, scoped, tag = 'internal scratch']
  %s0 = inlined_call_operand.vmem [shape: f32[2,16,32], index: 0, kind: input, shape index: {}]
  %s1 = inlined_call_operand.vmem [shape: f32[1,32], index: 1, kind: input, shape index: {}]
  %s2 = inlined_call_operand.vmem [shape: f32[1,32], index: 2, kind: input, shape index: {}]
  %s3 = inlined_call_operand.vmem [shape: bf16[32,32], index: 3, kind: input, shape index: {}]
  %s4 = inlined_call_operand.vmem [shape: f32[32,1], index: 4, kind: input, shape index: {}]
  %s5 = inlined_call_operand.vmem [shape: f32[2,32,16], index: 5, kind: output, shape index: {}]
  %s6 = sld [smem:[#allocation0]]
  $region53: #{image_domain_mri_vit2d_forward.9} parent=0
    _
  %s8 = ssub.s32 1, %s6
  %s9 = scalar_select 0, %s8, %s6
  loop: start=0, step=1, limit=4
  $region2: #{image_domain_mri_vit2d_forward.9} parent=0 // loop_pre_header
    _
  $region3: #{image_domain_mri_vit2d_forward.9} parent=0 // loop_header
    %s11 = sphi 0, %s15
    %p12 = scmp.ge.s32.totalorder %s11, 4
    %s18 = sphi 0, %s30
    %s19 = sphi 0, %s26
    %s20 = sphi 0, %s18
    %s21 = sphi 0, %s19
    %s22 = sphi 0, %s20
    %s23 = sphi 0, %s21
    %s35 = sphi 0, %s37
    %s38 = sphi 0, %s35
    %s39 = sphi 0, %s38
    %s55 = sphi 0, %s39
    %s59 = sphi 0, %s59
    %s61 = sphi 0, %s59
    %s62 = sphi 0, %s61
    %s76 = sphi 0, %s62
    %s80 = sphi 0, %s80
    %s82 = sphi 0, %s80
    %s83 = sphi 0, %s82
    %s97 = sphi 0, %s83
    %s101 = sphi 0, %s101
    %s103 = sphi 0, %s101
    %s104 = sphi 0, %s103
    %s118 = sphi 0, %s104
    %s122 = sphi 0, %s122
    %s124 = sphi 0, %s122
    %s125 = sphi 0, %s124
    %s139 = sphi 0, %s125
    %s147 = sphi 0, %s149
    %s150 = sphi 0, %s147
    %s151 = sphi 0, %s150
    %s167 = sphi 0, %s151
  $region4: #{image_domain_mri_vit2d_forward.9} parent=0 // loop_header_branch
    %14 = sbr.rel (%p12) target = $region8
  $region5: #{image_domain_mri_vit2d_forward.9} parent=0 // loop_body
    %s16 = ssub.s32 %s11, 1
    %s17 = ssub.s32 %s11, 2
    %s24 = sadd.s32 1, %s19
    %p25 = scmp.ge.s32.totalorder %s24, 1
    %s26 = scalar_select %p25, 0, %s24
    %s27 = sadd.s32 1, %s18
    %s28 = scalar_select %p25, %s27, %s18
    %p29 = scmp.ge.s32.totalorder %s28, 2
    %s30 = scalar_select %p29, 0, %s28
    %s31 = ssub.s32 %s18, %s30
    %s32 = ssub.s32 %s19, %s26
    %s33 = sor.u32 %s31, %s32
    %p34 = scmp.eq.s32.totalorder %s33, 0
    %s36 = sadd.s32 %s35, 1
    %s37 = scalar_select %p34, %s35, %s36
    %p40 = pneg %p34
    %p41 = scmp.eq.s32.totalorder %s11, 1
    %p42 = por %p40, %p41
    %p43 = scmp.ne.s32.totalorder %s35, %s38
    %p44 = scmp.eq.s32.totalorder %s11, 0
    %p45 = por %p43, %p44
    %p46 = scmp.ne.s32.totalorder %s35, %s38
    %p47 = scmp.eq.s32.totalorder %s16, 1
    %p48 = por %p46, %p47
    %p49 = scmp.ne.s32.totalorder %s38, %s39
    %p50 = scmp.eq.s32.totalorder %s16, 0
    %p51 = por %p49, %p50
    %p52 = scmp.ne.s32.totalorder %s38, %s39
    %p53 = scmp.eq.s32.totalorder %s17, 1
    %p54 = por %p52, %p53
    %p56 = scmp.ne.s32.totalorder %s39, %s55
    %p57 = scmp.eq.s32.totalorder %s17, 0
    %p58 = por %p56, %p57
    %s60 = sadd.s32 %s59, 1
    %p63 = scmp.eq.s32.totalorder %s11, 1
    %p64 = scmp.ne.s32.totalorder %s59, %s61
    %p65 = scmp.eq.s32.totalorder %s11, 0
    %p66 = por %p64, %p65
    %p67 = scmp.ne.s32.totalorder %s59, %s61
    %p68 = scmp.eq.s32.totalorder %s16, 1
    %p69 = por %p67, %p68
    %p70 = scmp.ne.s32.totalorder %s61, %s62
    %p71 = scmp.eq.s32.totalorder %s16, 0
    %p72 = por %p70, %p71
    %p73 = scmp.ne.s32.totalorder %s61, %s62
    %p74 = scmp.eq.s32.totalorder %s17, 1
    %p75 = por %p73, %p74
    %p77 = scmp.ne.s32.totalorder %s62, %s76
    %p78 = scmp.eq.s32.totalorder %s17, 0
    %p79 = por %p77, %p78
    %s81 = sadd.s32 %s80, 1
    %p84 = scmp.eq.s32.totalorder %s11, 1
    %p85 = scmp.ne.s32.totalorder %s80, %s82
    %p86 = scmp.eq.s32.totalorder %s11, 0
    %p87 = por %p85, %p86
    %p88 = scmp.ne.s32.totalorder %s80, %s82
    %p89 = scmp.eq.s32.totalorder %s16, 1
    %p90 = por %p88, %p89
    %p91 = scmp.ne.s32.totalorder %s82, %s83
    %p92 = scmp.eq.s32.totalorder %s16, 0
    %p93 = por %p91, %p92
    %p94 = scmp.ne.s32.totalorder %s82, %s83
    %p95 = scmp.eq.s32.totalorder %s17, 1
    %p96 = por %p94, %p95
    %p98 = scmp.ne.s32.totalorder %s83, %s97
    %p99 = scmp.eq.s32.totalorder %s17, 0
    %p100 = por %p98, %p99
    %s102 = sadd.s32 %s101, 1
    %p105 = scmp.eq.s32.totalorder %s11, 1
    %p106 = scmp.ne.s32.totalorder %s101, %s103
    %p107 = scmp.eq.s32.totalorder %s11, 0
    %p108 = por %p106, %p107
    %p109 = scmp.ne.s32.totalorder %s101, %s103
    %p110 = scmp.eq.s32.totalorder %s16, 1
    %p111 = por %p109, %p110
    %p112 = scmp.ne.s32.totalorder %s103, %s104
    %p113 = scmp.eq.s32.totalorder %s16, 0
    %p114 = por %p112, %p113
    %p115 = scmp.ne.s32.totalorder %s103, %s104
    %p116 = scmp.eq.s32.totalorder %s17, 1
    %p117 = por %p115, %p116
    %p119 = scmp.ne.s32.totalorder %s104, %s118
    %p120 = scmp.eq.s32.totalorder %s17, 0
    %p121 = por %p119, %p120
    %s123 = sadd.s32 %s122, 1
    %p126 = scmp.eq.s32.totalorder %s11, 1
    %p127 = scmp.ne.s32.totalorder %s122, %s124
    %p128 = scmp.eq.s32.totalorder %s11, 0
    %p129 = por %p127, %p128
    %p130 = scmp.ne.s32.totalorder %s122, %s124
    %p131 = scmp.eq.s32.totalorder %s16, 1
    %p132 = por %p130, %p131
    %p133 = scmp.ne.s32.totalorder %s124, %s125
    %p134 = scmp.eq.s32.totalorder %s16, 0
    %p135 = por %p133, %p134
    %p136 = scmp.ne.s32.totalorder %s124, %s125
    %p137 = scmp.eq.s32.totalorder %s17, 1
    %p138 = por %p136, %p137
    %p140 = scmp.ne.s32.totalorder %s125, %s139
    %p141 = scmp.eq.s32.totalorder %s17, 0
    %p142 = por %p140, %p141
    %s143 = ssub.s32 %s18, %s30
    %s144 = ssub.s32 %s19, %s26
    %s145 = sor.u32 %s143, %s144
    %p146 = scmp.eq.s32.totalorder %s145, 0
    %s148 = sadd.s32 %s147, 1
    %s149 = scalar_select %p146, %s147, %s148
    %p152 = pneg %p146
    %p153 = scmp.eq.s32.totalorder %s11, 1
    %p154 = por %p152, %p153
    %p155 = scmp.ne.s32.totalorder %s147, %s150
    %p156 = scmp.eq.s32.totalorder %s11, 0
    %p157 = por %p155, %p156
    %p158 = scmp.ne.s32.totalorder %s147, %s150
    %p159 = scmp.eq.s32.totalorder %s16, 1
    %p160 = por %p158, %p159
    %p161 = scmp.ne.s32.totalorder %s150, %s151
    %p162 = scmp.eq.s32.totalorder %s16, 0
    %p163 = por %p161, %p162
    %p164 = scmp.ne.s32.totalorder %s150, %s151
    %p165 = scmp.eq.s32.totalorder %s17, 1
    %p166 = por %p164, %p165
    %p168 = scmp.ne.s32.totalorder %s151, %s167
    %p169 = scmp.eq.s32.totalorder %s17, 0
    %p170 = por %p168, %p169
    %p171 = scmp.le.s32.totalorder 1, %s11
    %p172 = scmp.lt.s32.totalorder %s11, 3
    %p173 = pnand %p171, %p172
    %p174 = pneg %p173
    // Predicated region
    $region9: #{image_domain_mri_vit2d_forward.9} parent=5 // pred_check
      _
    $region10: #{image_domain_mri_vit2d_forward.9} parent=5 // pred_check_branch
      %176 = sbr.rel (%p173) target = $region12
    $region11: #{image_domain_mri_vit2d_forward.9} parent=5 // pred_region
      %s177 = ssub.s32 %s11, 1
      // Predicated region
      $region13: #{image_domain_mri_vit2d_forward.9} parent=11 // pred_check
        %p178 = pneg %p72
      $region14: #{image_domain_mri_vit2d_forward.9} parent=11 // pred_check_branch
        %180 = sbr.rel (%p178) target = $region16
      $region15: #{image_domain_mri_vit2d_forward.9} parent=11 // pred_region
        _
      $region16: #{image_domain_mri_vit2d_forward.9} parent=11 // pred_fallthru
        _
      // Predicated region
      $region17: #{image_domain_mri_vit2d_forward.9} parent=11 // pred_check
        %p181 = pneg %p93
      $region18: #{image_domain_mri_vit2d_forward.9} parent=11 // pred_check_branch
        %183 = sbr.rel (%p181) target = $region20
      $region19: #{image_domain_mri_vit2d_forward.9} parent=11 // pred_region
        _
      $region20: #{image_domain_mri_vit2d_forward.9} parent=11 // pred_fallthru
        _
      // Predicated region
      $region21: #{image_domain_mri_vit2d_forward.9} parent=11 // pred_check
        %p184 = pneg %p114
      $region22: #{image_domain_mri_vit2d_forward.9} parent=11 // pred_check_branch
        %186 = sbr.rel (%p184) target = $region24
      $region23: #{image_domain_mri_vit2d_forward.9} parent=11 // pred_region
        _
      $region24: #{image_domain_mri_vit2d_forward.9} parent=11 // pred_fallthru
        _
      // Predicated region
      $region25: #{image_domain_mri_vit2d_forward.9} parent=11 // pred_check
        %p187 = pneg %p135
      $region26: #{image_domain_mri_vit2d_forward.9} parent=11 // pred_check_branch
        %189 = sbr.rel (%p187) target = $region28
      $region27: #{image_domain_mri_vit2d_forward.9} parent=11 // pred_region
        _
      $region28: #{image_domain_mri_vit2d_forward.9} parent=11 // pred_fallthru
        _
    $region12: #{image_domain_mri_vit2d_forward.9} parent=5 // pred_fallthru
      _
    %p190 = scmp.lt.s32.totalorder %s11, 2
    // Predicated region
    $region29: #{image_domain_mri_vit2d_forward.9} parent=5 // pred_check
      %p191 = pneg %p190
    $region30: #{image_domain_mri_vit2d_forward.9} parent=5 // pred_check_branch
      %193 = sbr.rel (%p191) target = $region32
    $region31: #{image_domain_mri_vit2d_forward.9} parent=5 // pred_region
      // Predicated region
      $region33: #{image_domain_mri_vit2d_forward.9} parent=31 // pred_check
        %p194 = pneg %p45
      $region34: #{image_domain_mri_vit2d_forward.9} parent=31 // pred_check_branch
        %196 = sbr.rel (%p194) target = $region36
      $region35: #{image_domain_mri_vit2d_forward.9} parent=31 // pred_region
        %s197 = smul.u32 2, %s19
        %p198 = scmp.lt.s32.totalorder %s18, 1
        %s199 = scalar_select %p198, %s18, 1
        %p200 = scmp.lt.s32.totalorder %s197, 1
        %s201 = scalar_select %p200, %s197, 1
        %s202 = smul.addr %s199, 2
        %s203 = sadd.s32 %s201, %s202
        %s204 = smul.addr %s203, 8
        %s205 = scalar_lea.vmem %s0, %s204
        %s206 = smul.u32 2, %s19
      $region36: #{image_domain_mri_vit2d_forward.9} parent=31 // pred_fallthru
        _
    $region32: #{image_domain_mri_vit2d_forward.9} parent=5 // pred_fallthru
      _
    %p207 = scmp.le.s32.totalorder 1, %s11
    %p208 = scmp.lt.s32.totalorder %s11, 3
    %p209 = pnand %p207, %p208
    %p210 = pneg %p209
    // Predicated region
    $region37: #{image_domain_mri_vit2d_forward.9} parent=5 // pred_check
      _
    $region38: #{image_domain_mri_vit2d_forward.9} parent=5 // pred_check_branch
      %212 = sbr.rel (%p209) target = $region40
    $region39: #{image_domain_mri_vit2d_forward.9} parent=5 // pred_region
      %s213 = ssub.s32 %s11, 1
      %s214 = smul.u32 2, %s21
      %p215 = scmp.lt.s32.totalorder %s20, 1
      %s216 = scalar_select %p215, %s20, 1
      %p217 = scmp.lt.s32.totalorder %s214, 1
      %s218 = scalar_select %p217, %s214, 1
      %s219 = smul.addr %s216, 2
      %s220 = sadd.s32 %s218, %s219
      %s221 = smul.addr %s220, 8
      %s222 = scalar_lea.vmem %s0, %s221
      %p223 = pneg %p51
      %p224 = pneg %p48
      %p225 = pneg %p72
      %p226 = pneg %p69
      %p227 = pneg %p93
      %p228 = pneg %p90
      %p229 = pneg %p114
      %p230 = pneg %p111
      %p231 = pneg %p135
      %p232 = pneg %p132
      %p233 = pneg %p163
      %p234 = pneg %p160
      %p235 = scmp.lt.s32.totalorder %s20, 1
      %s236 = scalar_select %p235, %s20, 1
      %p237 = scmp.lt.s32.totalorder %s21, 0
      %s238 = scalar_select %p237, %s21, 0
      %s239 = smul.addr %s236, 4
      %s240 = sadd.s32 %s238, %s239
      %s241 = smul.addr %s240, 8
      %s242 = scalar_lea.vmem %s5, %s241
      %s243 = smul.u32 2, %s21
      %p244 = scmp.lt.s32.totalorder %s20, 1
      %s245 = scalar_select %p244, %s20, 1
      %p246 = scmp.lt.s32.totalorder %s243, 1
      %s247 = scalar_select %p246, %s243, 1
      %s248 = smul.addr %s245, 2
      %s249 = sadd.s32 %s247, %s248
      %s250 = smul.addr %s249, 8
      %s251 = scalar_lea.vmem %s0, %s250
      %s252 = smul.u32 2, %s21
      %p253 = scmp.lt.s32.totalorder %s20, 1
      %s254 = scalar_select %p253, %s20, 1
      %p255 = scmp.lt.s32.totalorder %s21, 0
      %s256 = scalar_select %p255, %s21, 0
      %s257 = smul.addr %s254, 4
      %s258 = sadd.s32 %s256, %s257
      %s259 = smul.addr %s258, 8
      %s260 = scalar_lea.vmem %s5, %s259
      %v262 = vld [vmem:[%s251] sm:$0xff]
      %v263 = vld [vmem:[%s251 + $0x8] sm:$0xff]
      %v264 = vld [vmem:[%s1] sm:$0x1]
      %v265 = vld [vmem:[%s2] sm:$0x1]
      %vm266 = vcmask 261120
      %v267 = vsel %vm266, %v262, 0.0
      %268 = vadd.xlane.f32.xlu0 %v267
      %v269 = vpop.xlane.xlu0 %268
      %v270 = vsel %vm266, %v263, 0.0
      %271 = vadd.xlane.f32.xlu0 %v270
      %v272 = vpop.xlane.xlu0 %271
      %v273 = vrcp.pop 32.0
      %v274 = vmul.f32 32.0, %v273
      %v275 = vsub.f32 1.0, %v274
      %v276 = vmul.f32 %v273, %v275
      %v277 = vadd.f32 %v273, %v276
      %vm278 = vweird.f32 %v273
      %v279 = vsel %vm278, %v273, %v277
      %v280 = vmul.f32 %v269, %v279
      %v281 = vmul.f32 %v272, %v279
      %v282 = vsub.f32 %v262, %v280
      %v283 = vsub.f32 %v263, %v281
      %v284 = vmul.f32 %v282, %v282
      %v285 = vmul.f32 %v283, %v283
      %v286 = vsel %vm266, %v284, 0.0
      %287 = vadd.xlane.f32.xlu0 %v286
      %v288 = vpop.xlane.xlu0 %287
      %v289 = vsel %vm266, %v285, 0.0
      %290 = vadd.xlane.f32.xlu0 %v289
      %v291 = vpop.xlane.xlu0 %290
      %v292 = vmul.f32 %v288, %v279
      %v293 = vmul.f32 %v291, %v279
      %v294 = vadd.f32 %v292, 1e-05
      %v295 = vadd.f32 %v293, 1e-05
      %v296 = vrsqrt.pop %v294
      %v297 = vmul.f32 %v296, %v294
      %v298 = vmul.f32 %v297, %v296
      %v299 = vmul.f32 0.5, %v298
      %v300 = vsub.f32 1.5, %v299
      %v301 = vmul.f32 %v296, %v300
      %vm302 = vweird.f32 %v294
      %vm303 = vweird.f32 %v296
      %vm304 = vmor %vm302, %vm303
      %v305 = vsel %vm304, %v296, %v301
      %v306 = vrsqrt.pop %v295
      %v307 = vmul.f32 %v306, %v295
      %v308 = vmul.f32 %v307, %v306
      %v309 = vmul.f32 0.5, %v308
      %v310 = vsub.f32 1.5, %v309
      %v311 = vmul.f32 %v306, %v310
      %vm312 = vweird.f32 %v295
      %vm313 = vweird.f32 %v306
      %vm314 = vmor %vm312, %vm313
      %v315 = vsel %vm314, %v306, %v311
      %v316 = vmul.f32 %v282, %v305
      %v317 = vmul.f32 %v283, %v315
      %v319 = vperm.slane %v264, 0
      %v321 = vmul.f32 %v316, %v319
      %v322 = vmul.f32 %v317, %v319
      %v324 = vperm.slane %v265, 0
      %v326 = vadd.f32 %v321, %v324
      %v327 = vadd.f32 %v322, %v324
      %v328 = vpack.c.bf16 %v327, %v326
      %v329 = vld [vmem:[%s3] sm:$0xf]
      %v330 = vld [vmem:[%s3 + $0x4] sm:$0xf]
      %v331 = vld [vmem:[%s3 + $0x8] sm:$0xf]
      %v332 = vld [vmem:[%s3 + $0xc] sm:$0xf]
      %v333 = vld [vmem:[%s4] sm:$0xff]
      %v334 = vld [vmem:[%s4 + $0x8] sm:$0xff]
      %v335 = vld [vmem:[%s4 + $0x10] sm:$0xff]
      %v336 = vld [vmem:[%s4 + $0x18] sm:$0xff]
      %338 = vset.pattern.permute.xlu0 0
      %339 = vperm.xlu0 %338, %v333
      %v340 = vpop.permute.xlu0 %339
      %343 = vset.pattern.permute.xlu0 0
      %344 = vperm.xlu0 %343, %v334
      %v345 = vpop.permute.xlu0 %344
      %348 = vset.pattern.permute.xlu0 0
      %349 = vperm.xlu0 %348, %v335
      %v350 = vpop.permute.xlu0 %349
      %353 = vset.pattern.permute.xlu0 0
      %354 = vperm.xlu0 %353, %v336
      %v355 = vpop.permute.xlu0 %354
      %v361 = vunpack.c.l.b16 %v329
      %v362 = vunpack.c.l.b16 %v330
      %v363 = vunpack.c.l.b16 %v331
      %v364 = vunpack.c.l.b16 %v332
      %v365 = vpack.c.b16 %v362, %v361
      %v366 = vpack.c.b16 %v364, %v363
      %369 = vxpose.xlu0.c.b16.start [1/8] %v365, 128
      %370 = vxpose.xlu0.c.b16.cont [2/8] %v366, 128
      %371 = vxpose.xlu0.c.b16.cont [3/8] 0, 128
      %372 = vxpose.xlu0.c.b16.cont [4/8] 0, 128
      %373 = vxpose.xlu0.c.b16.cont [5/8] 0, 128
      %374 = vxpose.xlu0.c.b16.cont [6/8] 0, 128
      %375 = vxpose.xlu0.c.b16.cont [7/8] 0, 128
      %376 = vxpose.xlu0.c.b16.end [8/8] 0, 128
      %v377 = vpop.trf.xlu0
      %v378 = vpop.trf.xlu0
      %v379 = vpop.trf.xlu0
      %v380 = vpop.trf.xlu0
      %v381 = vpop.trf.xlu0
      %v382 = vpop.trf.xlu0
      %v383 = vpop.trf.xlu0
      %v384 = vpop.trf.xlu0
      %v386 = vsel %vm266, %v377, 0
      %v389 = vsel %vm266, %v378, 0
      %v392 = vsel %vm266, %v328, 0
      %394 = vmatpush.bf16.xpose.msra.mxu0 0
      %395 = vmatpush.bf16.xpose.msra.mxu0 0
      %396 = vmatpush.bf16.xpose.msra.mxu0 0
      %397 = vmatpush.bf16.xpose.msra.mxu0 0
      %398 = vmatpush.bf16.xpose.msra.mxu0 0
      %399 = vmatpush.bf16.xpose.msra.mxu0 0
      %400 = vmatpush.bf16.xpose.msra.mxu0 0
      %401 = vmatpush.bf16.xpose.msra.mxu0 %v392
      %402 = vmatmul.bf16.gmra.mxu0 %v386
      %v403 = vpop.f32.mrf.mxu0
      %v404 = vadd.f32 %v340, %v403
      %v405 = vpop.f32.mrf.mxu0
      %v406 = vadd.f32 %v345, %v405
      %407 = vmatmul.bf16.gmra.mxu0 %v389
      %v408 = vpop.f32.mrf.mxu0
      %v409 = vadd.f32 %v350, %v408
      %v410 = vpop.f32.mrf.mxu0
      %v411 = vadd.f32 %v355, %v410
      %412 = vdwg.mxu0
      %vm413 = vcmask 130048
      %414 = vst.msk [vmem:[%s260] sm:$0xff] %vm413, %v404
      %415 = vst.msk [vmem:[%s260 + $0x8] sm:$0xff] %vm413, %v406
      %416 = vst.msk [vmem:[%s260 + $0x10] sm:$0xff] %vm413, %v409
      %417 = vst.msk [vmem:[%s260 + $0x18] sm:$0xff] %vm413, %v411
      %p418 = scmp.lt.s32.totalorder %s20, 1
      %s419 = scalar_select %p418, %s20, 1
      %p420 = scmp.lt.s32.totalorder %s21, 0
      %s421 = scalar_select %p420, %s21, 0
      %s422 = smul.addr %s419, 4
      %s423 = sadd.s32 %s421, %s422
      %s424 = smul.addr %s423, 8
      %s425 = scalar_lea.vmem %s5, %s424
      // Predicated region
      $region41: #{image_domain_mri_vit2d_forward.9} parent=39 // pred_check
        %p426 = pneg %p160
      $region42: #{image_domain_mri_vit2d_forward.9} parent=39 // pred_check_branch
        %428 = sbr.rel (%p426) target = $region44
      $region43: #{image_domain_mri_vit2d_forward.9} parent=39 // pred_region
        _
      $region44: #{image_domain_mri_vit2d_forward.9} parent=39 // pred_fallthru
        _
    $region40: #{image_domain_mri_vit2d_forward.9} parent=5 // pred_fallthru
      _
    %p429 = scmp.le.s32.totalorder 2, %s11
    // Predicated region
    $region45: #{image_domain_mri_vit2d_forward.9} parent=5 // pred_check
      %p430 = pneg %p429
    $region46: #{image_domain_mri_vit2d_forward.9} parent=5 // pred_check_branch
      %432 = sbr.rel (%p430) target = $region48
    $region47: #{image_domain_mri_vit2d_forward.9} parent=5 // pred_region
      %s433 = ssub.s32 %s11, 2
      // Predicated region
      $region49: #{image_domain_mri_vit2d_forward.9} parent=47 // pred_check
        %p434 = pneg %p166
      $region50: #{image_domain_mri_vit2d_forward.9} parent=47 // pred_check_branch
        %436 = sbr.rel (%p434) target = $region52
      $region51: #{image_domain_mri_vit2d_forward.9} parent=47 // pred_region
        %p437 = scmp.lt.s32.totalorder %s22, 1
        %s438 = scalar_select %p437, %s22, 1
        %p439 = scmp.lt.s32.totalorder %s23, 0
        %s440 = scalar_select %p439, %s23, 0
        %s441 = smul.addr %s438, 4
        %s442 = sadd.s32 %s440, %s441
        %s443 = smul.addr %s442, 8
        %s444 = scalar_lea.vmem %s5, %s443
      $region52: #{image_domain_mri_vit2d_forward.9} parent=47 // pred_fallthru
        _
    $region48: #{image_domain_mri_vit2d_forward.9} parent=5 // pred_fallthru
      _
  $region6: #{image_domain_mri_vit2d_forward.9} parent=0 // loop_footer
    %s15 = sadd.s32 1, %s11
  $region7: #{image_domain_mri_vit2d_forward.9} parent=0 // loop_footer_branch
    %10 = sbr.rel target = $region3
  $region8: #{image_domain_mri_vit2d_forward.9} parent=0 // loop_exit
    _

// kernel: image_domain_mri_vit2d_forward.7
$region0: #{image_domain_mri_vit2d_forward.7}
  #allocation0 [shape = 'u32[]', space=smem, size = 0x4, offset = 0x4, fixed_abs, tag = 'smem constant byte address 0x4 - core index']
  #allocation1 [shape = 'u32[72,128]{1,0:T(1,128)}', space=vmem, size = 0x9000, scoped, tag = 'internal scratch']
  %s0 = inlined_call_operand.vmem [shape: f32[2,16,32], index: 0, kind: input, shape index: {}]
  %s1 = inlined_call_operand.vmem [shape: f32[1,32], index: 1, kind: input, shape index: {}]
  %s2 = inlined_call_operand.vmem [shape: f32[1,32], index: 2, kind: input, shape index: {}]
  %s3 = inlined_call_operand.vmem [shape: bf16[32,32], index: 3, kind: input, shape index: {}]
  %s4 = inlined_call_operand.vmem [shape: bf16[32,32], index: 4, kind: input, shape index: {}]
  %s5 = inlined_call_operand.vmem [shape: bf16[32,32], index: 5, kind: input, shape index: {}]
  %s6 = inlined_call_operand.vmem [shape: bf16[4,8,32], index: 6, kind: input, shape index: {}]
  %s7 = inlined_call_operand.vmem [shape: f32[1,32], index: 7, kind: input, shape index: {}]
  %s8 = inlined_call_operand.vmem [shape: f32[1,32], index: 8, kind: input, shape index: {}]
  %s9 = inlined_call_operand.vmem [shape: f32[1,32], index: 9, kind: input, shape index: {}]
  %s10 = inlined_call_operand.vmem [shape: bf16[32,128], index: 10, kind: input, shape index: {}]
  %s11 = inlined_call_operand.vmem [shape: f32[1,128], index: 11, kind: input, shape index: {}]
  %s12 = inlined_call_operand.vmem [shape: bf16[128,32], index: 12, kind: input, shape index: {}]
  %s13 = inlined_call_operand.vmem [shape: f32[1,32], index: 13, kind: input, shape index: {}]
  %s14 = inlined_call_operand.vmem [shape: f32[2,16,32], index: 14, kind: output, shape index: {}]
  %s15 = sld [smem:[#allocation0]]
  $region89: #{image_domain_mri_vit2d_forward.7} parent=0
    _
  %s17 = ssub.s32 1, %s15
  %s18 = scalar_select 0, %s17, %s15
  loop: start=0, step=1, limit=4
  $region2: #{image_domain_mri_vit2d_forward.7} parent=0 // loop_pre_header
    _
  $region3: #{image_domain_mri_vit2d_forward.7} parent=0 // loop_header
    %s20 = sphi 0, %s24
    %p21 = scmp.ge.s32.totalorder %s20, 4
    %s27 = sphi 0, %s39
    %s28 = sphi 0, %s35
    %s29 = sphi 0, %s27
    %s30 = sphi 0, %s28
    %s31 = sphi 0, %s29
    %s32 = sphi 0, %s30
    %s42 = sphi 0, %s44
    %s45 = sphi 0, %s42
    %s46 = sphi 0, %s45
    %s62 = sphi 0, %s46
    %s66 = sphi 0, %s66
    %s68 = sphi 0, %s66
    %s69 = sphi 0, %s68
    %s83 = sphi 0, %s69
    %s87 = sphi 0, %s87
    %s89 = sphi 0, %s87
    %s90 = sphi 0, %s89
    %s104 = sphi 0, %s90
    %s108 = sphi 0, %s108
    %s110 = sphi 0, %s108
    %s111 = sphi 0, %s110
    %s125 = sphi 0, %s111
    %s129 = sphi 0, %s129
    %s131 = sphi 0, %s129
    %s132 = sphi 0, %s131
    %s146 = sphi 0, %s132
    %s150 = sphi 0, %s150
    %s152 = sphi 0, %s150
    %s153 = sphi 0, %s152
    %s167 = sphi 0, %s153
    %s171 = sphi 0, %s171
    %s173 = sphi 0, %s171
    %s174 = sphi 0, %s173
    %s188 = sphi 0, %s174
    %s192 = sphi 0, %s192
    %s194 = sphi 0, %s192
    %s195 = sphi 0, %s194
    %s209 = sphi 0, %s195
    %s213 = sphi 0, %s213
    %s215 = sphi 0, %s213
    %s216 = sphi 0, %s215
    %s230 = sphi 0, %s216
    %s234 = sphi 0, %s234
    %s236 = sphi 0, %s234
    %s237 = sphi 0, %s236
    %s251 = sphi 0, %s237
    %s255 = sphi 0, %s255
    %s257 = sphi 0, %s255
    %s258 = sphi 0, %s257
    %s272 = sphi 0, %s258
    %s276 = sphi 0, %s276
    %s278 = sphi 0, %s276
    %s279 = sphi 0, %s278
    %s293 = sphi 0, %s279
    %s297 = sphi 0, %s297
    %s299 = sphi 0, %s297
    %s300 = sphi 0, %s299
    %s314 = sphi 0, %s300
    %s318 = sphi 0, %s318
    %s320 = sphi 0, %s318
    %s321 = sphi 0, %s320
    %s335 = sphi 0, %s321
    %s343 = sphi 0, %s345
    %s346 = sphi 0, %s343
    %s347 = sphi 0, %s346
    %s363 = sphi 0, %s347
  $region4: #{image_domain_mri_vit2d_forward.7} parent=0 // loop_header_branch
    %23 = sbr.rel (%p21) target = $region8
  $region5: #{image_domain_mri_vit2d_forward.7} parent=0 // loop_body
    %s25 = ssub.s32 %s20, 1
    %s26 = ssub.s32 %s20, 2
    %s33 = sadd.s32 1, %s28
    %p34 = scmp.ge.s32.totalorder %s33, 1
    %s35 = scalar_select %p34, 0, %s33
    %s36 = sadd.s32 1, %s27
    %s37 = scalar_select %p34, %s36, %s27
    %p38 = scmp.ge.s32.totalorder %s37, 2
    %s39 = scalar_select %p38, 0, %s37
    %s40 = ssub.s32 %s27, %s39
    %p41 = scmp.eq.s32.totalorder %s40, 0
    %s43 = sadd.s32 %s42, 1
    %s44 = scalar_select %p41, %s42, %s43
    %p47 = pneg %p41
    %p48 = scmp.eq.s32.totalorder %s20, 1
    %p49 = por %p47, %p48
    %p50 = scmp.ne.s32.totalorder %s42, %s45
    %p51 = scmp.eq.s32.totalorder %s20, 0
    %p52 = por %p50, %p51
    %p53 = scmp.ne.s32.totalorder %s42, %s45
    %p54 = scmp.eq.s32.totalorder %s25, 1
    %p55 = por %p53, %p54
    %p56 = scmp.ne.s32.totalorder %s45, %s46
    %p57 = scmp.eq.s32.totalorder %s25, 0
    %p58 = por %p56, %p57
    %p59 = scmp.ne.s32.totalorder %s45, %s46
    %p60 = scmp.eq.s32.totalorder %s26, 1
    %p61 = por %p59, %p60
    %p63 = scmp.ne.s32.totalorder %s46, %s62
    %p64 = scmp.eq.s32.totalorder %s26, 0
    %p65 = por %p63, %p64
    %s67 = sadd.s32 %s66, 1
    %p70 = scmp.eq.s32.totalorder %s20, 1
    %p71 = scmp.ne.s32.totalorder %s66, %s68
    %p72 = scmp.eq.s32.totalorder %s20, 0
    %p73 = por %p71, %p72
    %p74 = scmp.ne.s32.totalorder %s66, %s68
    %p75 = scmp.eq.s32.totalorder %s25, 1
    %p76 = por %p74, %p75
    %p77 = scmp.ne.s32.totalorder %s68, %s69
    %p78 = scmp.eq.s32.totalorder %s25, 0
    %p79 = por %p77, %p78
    %p80 = scmp.ne.s32.totalorder %s68, %s69
    %p81 = scmp.eq.s32.totalorder %s26, 1
    %p82 = por %p80, %p81
    %p84 = scmp.ne.s32.totalorder %s69, %s83
    %p85 = scmp.eq.s32.totalorder %s26, 0
    %p86 = por %p84, %p85
    %s88 = sadd.s32 %s87, 1
    %p91 = scmp.eq.s32.totalorder %s20, 1
    %p92 = scmp.ne.s32.totalorder %s87, %s89
    %p93 = scmp.eq.s32.totalorder %s20, 0
    %p94 = por %p92, %p93
    %p95 = scmp.ne.s32.totalorder %s87, %s89
    %p96 = scmp.eq.s32.totalorder %s25, 1
    %p97 = por %p95, %p96
    %p98 = scmp.ne.s32.totalorder %s89, %s90
    %p99 = scmp.eq.s32.totalorder %s25, 0
    %p100 = por %p98, %p99
    %p101 = scmp.ne.s32.totalorder %s89, %s90
    %p102 = scmp.eq.s32.totalorder %s26, 1
    %p103 = por %p101, %p102
    %p105 = scmp.ne.s32.totalorder %s90, %s104
    %p106 = scmp.eq.s32.totalorder %s26, 0
    %p107 = por %p105, %p106
    %s109 = sadd.s32 %s108, 1
    %p112 = scmp.eq.s32.totalorder %s20, 1
    %p113 = scmp.ne.s32.totalorder %s108, %s110
    %p114 = scmp.eq.s32.totalorder %s20, 0
    %p115 = por %p113, %p114
    %p116 = scmp.ne.s32.totalorder %s108, %s110
    %p117 = scmp.eq.s32.totalorder %s25, 1
    %p118 = por %p116, %p117
    %p119 = scmp.ne.s32.totalorder %s110, %s111
    %p120 = scmp.eq.s32.totalorder %s25, 0
    %p121 = por %p119, %p120
    %p122 = scmp.ne.s32.totalorder %s110, %s111
    %p123 = scmp.eq.s32.totalorder %s26, 1
    %p124 = por %p122, %p123
    %p126 = scmp.ne.s32.totalorder %s111, %s125
    %p127 = scmp.eq.s32.totalorder %s26, 0
    %p128 = por %p126, %p127
    %s130 = sadd.s32 %s129, 1
    %p133 = scmp.eq.s32.totalorder %s20, 1
    %p134 = scmp.ne.s32.totalorder %s129, %s131
    %p135 = scmp.eq.s32.totalorder %s20, 0
    %p136 = por %p134, %p135
    %p137 = scmp.ne.s32.totalorder %s129, %s131
    %p138 = scmp.eq.s32.totalorder %s25, 1
    %p139 = por %p137, %p138
    %p140 = scmp.ne.s32.totalorder %s131, %s132
    %p141 = scmp.eq.s32.totalorder %s25, 0
    %p142 = por %p140, %p141
    %p143 = scmp.ne.s32.totalorder %s131, %s132
    %p144 = scmp.eq.s32.totalorder %s26, 1
    %p145 = por %p143, %p144
    %p147 = scmp.ne.s32.totalorder %s132, %s146
    %p148 = scmp.eq.s32.totalorder %s26, 0
    %p149 = por %p147, %p148
    %s151 = sadd.s32 %s150, 1
    %p154 = scmp.eq.s32.totalorder %s20, 1
    %p155 = scmp.ne.s32.totalorder %s150, %s152
    %p156 = scmp.eq.s32.totalorder %s20, 0
    %p157 = por %p155, %p156
    %p158 = scmp.ne.s32.totalorder %s150, %s152
    %p159 = scmp.eq.s32.totalorder %s25, 1
    %p160 = por %p158, %p159
    %p161 = scmp.ne.s32.totalorder %s152, %s153
    %p162 = scmp.eq.s32.totalorder %s25, 0
    %p163 = por %p161, %p162
    %p164 = scmp.ne.s32.totalorder %s152, %s153
    %p165 = scmp.eq.s32.totalorder %s26, 1
    %p166 = por %p164, %p165
    %p168 = scmp.ne.s32.totalorder %s153, %s167
    %p169 = scmp.eq.s32.totalorder %s26, 0
    %p170 = por %p168, %p169
    %s172 = sadd.s32 %s171, 1
    %p175 = scmp.eq.s32.totalorder %s20, 1
    %p176 = scmp.ne.s32.totalorder %s171, %s173
    %p177 = scmp.eq.s32.totalorder %s20, 0
    %p178 = por %p176, %p177
    %p179 = scmp.ne.s32.totalorder %s171, %s173
    %p180 = scmp.eq.s32.totalorder %s25, 1
    %p181 = por %p179, %p180
    %p182 = scmp.ne.s32.totalorder %s173, %s174
    %p183 = scmp.eq.s32.totalorder %s25, 0
    %p184 = por %p182, %p183
    %p185 = scmp.ne.s32.totalorder %s173, %s174
    %p186 = scmp.eq.s32.totalorder %s26, 1
    %p187 = por %p185, %p186
    %p189 = scmp.ne.s32.totalorder %s174, %s188
    %p190 = scmp.eq.s32.totalorder %s26, 0
    %p191 = por %p189, %p190
    %s193 = sadd.s32 %s192, 1
    %p196 = scmp.eq.s32.totalorder %s20, 1
    %p197 = scmp.ne.s32.totalorder %s192, %s194
    %p198 = scmp.eq.s32.totalorder %s20, 0
    %p199 = por %p197, %p198
    %p200 = scmp.ne.s32.totalorder %s192, %s194
    %p201 = scmp.eq.s32.totalorder %s25, 1
    %p202 = por %p200, %p201
    %p203 = scmp.ne.s32.totalorder %s194, %s195
    %p204 = scmp.eq.s32.totalorder %s25, 0
    %p205 = por %p203, %p204
    %p206 = scmp.ne.s32.totalorder %s194, %s195
    %p207 = scmp.eq.s32.totalorder %s26, 1
    %p208 = por %p206, %p207
    %p210 = scmp.ne.s32.totalorder %s195, %s209
    %p211 = scmp.eq.s32.totalorder %s26, 0
    %p212 = por %p210, %p211
    %s214 = sadd.s32 %s213, 1
    %p217 = scmp.eq.s32.totalorder %s20, 1
    %p218 = scmp.ne.s32.totalorder %s213, %s215
    %p219 = scmp.eq.s32.totalorder %s20, 0
    %p220 = por %p218, %p219
    %p221 = scmp.ne.s32.totalorder %s213, %s215
    %p222 = scmp.eq.s32.totalorder %s25, 1
    %p223 = por %p221, %p222
    %p224 = scmp.ne.s32.totalorder %s215, %s216
    %p225 = scmp.eq.s32.totalorder %s25, 0
    %p226 = por %p224, %p225
    %p227 = scmp.ne.s32.totalorder %s215, %s216
    %p228 = scmp.eq.s32.totalorder %s26, 1
    %p229 = por %p227, %p228
    %p231 = scmp.ne.s32.totalorder %s216, %s230
    %p232 = scmp.eq.s32.totalorder %s26, 0
    %p233 = por %p231, %p232
    %s235 = sadd.s32 %s234, 1
    %p238 = scmp.eq.s32.totalorder %s20, 1
    %p239 = scmp.ne.s32.totalorder %s234, %s236
    %p240 = scmp.eq.s32.totalorder %s20, 0
    %p241 = por %p239, %p240
    %p242 = scmp.ne.s32.totalorder %s234, %s236
    %p243 = scmp.eq.s32.totalorder %s25, 1
    %p244 = por %p242, %p243
    %p245 = scmp.ne.s32.totalorder %s236, %s237
    %p246 = scmp.eq.s32.totalorder %s25, 0
    %p247 = por %p245, %p246
    %p248 = scmp.ne.s32.totalorder %s236, %s237
    %p249 = scmp.eq.s32.totalorder %s26, 1
    %p250 = por %p248, %p249
    %p252 = scmp.ne.s32.totalorder %s237, %s251
    %p253 = scmp.eq.s32.totalorder %s26, 0
    %p254 = por %p252, %p253
    %s256 = sadd.s32 %s255, 1
    %p259 = scmp.eq.s32.totalorder %s20, 1
    %p260 = scmp.ne.s32.totalorder %s255, %s257
    %p261 = scmp.eq.s32.totalorder %s20, 0
    %p262 = por %p260, %p261
    %p263 = scmp.ne.s32.totalorder %s255, %s257
    %p264 = scmp.eq.s32.totalorder %s25, 1
    %p265 = por %p263, %p264
    %p266 = scmp.ne.s32.totalorder %s257, %s258
    %p267 = scmp.eq.s32.totalorder %s25, 0
    %p268 = por %p266, %p267
    %p269 = scmp.ne.s32.totalorder %s257, %s258
    %p270 = scmp.eq.s32.totalorder %s26, 1
    %p271 = por %p269, %p270
    %p273 = scmp.ne.s32.totalorder %s258, %s272
    %p274 = scmp.eq.s32.totalorder %s26, 0
    %p275 = por %p273, %p274
    %s277 = sadd.s32 %s276, 1
    %p280 = scmp.eq.s32.totalorder %s20, 1
    %p281 = scmp.ne.s32.totalorder %s276, %s278
    %p282 = scmp.eq.s32.totalorder %s20, 0
    %p283 = por %p281, %p282
    %p284 = scmp.ne.s32.totalorder %s276, %s278
    %p285 = scmp.eq.s32.totalorder %s25, 1
    %p286 = por %p284, %p285
    %p287 = scmp.ne.s32.totalorder %s278, %s279
    %p288 = scmp.eq.s32.totalorder %s25, 0
    %p289 = por %p287, %p288
    %p290 = scmp.ne.s32.totalorder %s278, %s279
    %p291 = scmp.eq.s32.totalorder %s26, 1
    %p292 = por %p290, %p291
    %p294 = scmp.ne.s32.totalorder %s279, %s293
    %p295 = scmp.eq.s32.totalorder %s26, 0
    %p296 = por %p294, %p295
    %s298 = sadd.s32 %s297, 1
    %p301 = scmp.eq.s32.totalorder %s20, 1
    %p302 = scmp.ne.s32.totalorder %s297, %s299
    %p303 = scmp.eq.s32.totalorder %s20, 0
    %p304 = por %p302, %p303
    %p305 = scmp.ne.s32.totalorder %s297, %s299
    %p306 = scmp.eq.s32.totalorder %s25, 1
    %p307 = por %p305, %p306
    %p308 = scmp.ne.s32.totalorder %s299, %s300
    %p309 = scmp.eq.s32.totalorder %s25, 0
    %p310 = por %p308, %p309
    %p311 = scmp.ne.s32.totalorder %s299, %s300
    %p312 = scmp.eq.s32.totalorder %s26, 1
    %p313 = por %p311, %p312
    %p315 = scmp.ne.s32.totalorder %s300, %s314
    %p316 = scmp.eq.s32.totalorder %s26, 0
    %p317 = por %p315, %p316
    %s319 = sadd.s32 %s318, 1
    %p322 = scmp.eq.s32.totalorder %s20, 1
    %p323 = scmp.ne.s32.totalorder %s318, %s320
    %p324 = scmp.eq.s32.totalorder %s20, 0
    %p325 = por %p323, %p324
    %p326 = scmp.ne.s32.totalorder %s318, %s320
    %p327 = scmp.eq.s32.totalorder %s25, 1
    %p328 = por %p326, %p327
    %p329 = scmp.ne.s32.totalorder %s320, %s321
    %p330 = scmp.eq.s32.totalorder %s25, 0
    %p331 = por %p329, %p330
    %p332 = scmp.ne.s32.totalorder %s320, %s321
    %p333 = scmp.eq.s32.totalorder %s26, 1
    %p334 = por %p332, %p333
    %p336 = scmp.ne.s32.totalorder %s321, %s335
    %p337 = scmp.eq.s32.totalorder %s26, 0
    %p338 = por %p336, %p337
    %s339 = ssub.s32 %s27, %s39
    %s340 = ssub.s32 %s28, %s35
    %s341 = sor.u32 %s339, %s340
    %p342 = scmp.eq.s32.totalorder %s341, 0
    %s344 = sadd.s32 %s343, 1
    %s345 = scalar_select %p342, %s343, %s344
    %p348 = pneg %p342
    %p349 = scmp.eq.s32.totalorder %s20, 1
    %p350 = por %p348, %p349
    %p351 = scmp.ne.s32.totalorder %s343, %s346
    %p352 = scmp.eq.s32.totalorder %s20, 0
    %p353 = por %p351, %p352
    %p354 = scmp.ne.s32.totalorder %s343, %s346
    %p355 = scmp.eq.s32.totalorder %s25, 1
    %p356 = por %p354, %p355
    %p357 = scmp.ne.s32.totalorder %s346, %s347
    %p358 = scmp.eq.s32.totalorder %s25, 0
    %p359 = por %p357, %p358
    %p360 = scmp.ne.s32.totalorder %s346, %s347
    %p361 = scmp.eq.s32.totalorder %s26, 1
    %p362 = por %p360, %p361
    %p364 = scmp.ne.s32.totalorder %s347, %s363
    %p365 = scmp.eq.s32.totalorder %s26, 0
    %p366 = por %p364, %p365
    %p367 = scmp.le.s32.totalorder 1, %s20
    %p368 = scmp.lt.s32.totalorder %s20, 3
    %p369 = pnand %p367, %p368
    %p370 = pneg %p369
    // Predicated region
    $region9: #{image_domain_mri_vit2d_forward.7} parent=5 // pred_check
      _
    $region10: #{image_domain_mri_vit2d_forward.7} parent=5 // pred_check_branch
      %372 = sbr.rel (%p369) target = $region12
    $region11: #{image_domain_mri_vit2d_forward.7} parent=5 // pred_region
      %s373 = ssub.s32 %s20, 1
      // Predicated region
      $region13: #{image_domain_mri_vit2d_forward.7} parent=11 // pred_check
        %p374 = pneg %p79
      $region14: #{image_domain_mri_vit2d_forward.7} parent=11 // pred_check_branch
        %376 = sbr.rel (%p374) target = $region16
      $region15: #{image_domain_mri_vit2d_forward.7} parent=11 // pred_region
        _
      $region16: #{image_domain_mri_vit2d_forward.7} parent=11 // pred_fallthru
        _
      // Predicated region
      $region17: #{image_domain_mri_vit2d_forward.7} parent=11 // pred_check
        %p377 = pneg %p100
      $region18: #{image_domain_mri_vit2d_forward.7} parent=11 // pred_check_branch
        %379 = sbr.rel (%p377) target = $region20
      $region19: #{image_domain_mri_vit2d_forward.7} parent=11 // pred_region
        _
      $region20: #{image_domain_mri_vit2d_forward.7} parent=11 // pred_fallthru
        _
      // Predicated region
      $region21: #{image_domain_mri_vit2d_forward.7} parent=11 // pred_check
        %p380 = pneg %p121
      $region22: #{image_domain_mri_vit2d_forward.7} parent=11 // pred_check_branch
        %382 = sbr.rel (%p380) target = $region24
      $region23: #{image_domain_mri_vit2d_forward.7} parent=11 // pred_region
        _
      $region24: #{image_domain_mri_vit2d_forward.7} parent=11 // pred_fallthru
        _
      // Predicated region
      $region25: #{image_domain_mri_vit2d_forward.7} parent=11 // pred_check
        %p383 = pneg %p142
      $region26: #{image_domain_mri_vit2d_forward.7} parent=11 // pred_check_branch
        %385 = sbr.rel (%p383) target = $region28
      $region27: #{image_domain_mri_vit2d_forward.7} parent=11 // pred_region
        _
      $region28: #{image_domain_mri_vit2d_forward.7} parent=11 // pred_fallthru
        _
      // Predicated region
      $region29: #{image_domain_mri_vit2d_forward.7} parent=11 // pred_check
        %p386 = pneg %p163
      $region30: #{image_domain_mri_vit2d_forward.7} parent=11 // pred_check_branch
        %388 = sbr.rel (%p386) target = $region32
      $region31: #{image_domain_mri_vit2d_forward.7} parent=11 // pred_region
        _
      $region32: #{image_domain_mri_vit2d_forward.7} parent=11 // pred_fallthru
        _
      // Predicated region
      $region33: #{image_domain_mri_vit2d_forward.7} parent=11 // pred_check
        %p389 = pneg %p184
      $region34: #{image_domain_mri_vit2d_forward.7} parent=11 // pred_check_branch
        %391 = sbr.rel (%p389) target = $region36
      $region35: #{image_domain_mri_vit2d_forward.7} parent=11 // pred_region
        _
      $region36: #{image_domain_mri_vit2d_forward.7} parent=11 // pred_fallthru
        _
      // Predicated region
      $region37: #{image_domain_mri_vit2d_forward.7} parent=11 // pred_check
        %p392 = pneg %p205
      $region38: #{image_domain_mri_vit2d_forward.7} parent=11 // pred_check_branch
        %394 = sbr.rel (%p392) target = $region40
      $region39: #{image_domain_mri_vit2d_forward.7} parent=11 // pred_region
        _
      $region40: #{image_domain_mri_vit2d_forward.7} parent=11 // pred_fallthru
        _
      // Predicated region
      $region41: #{image_domain_mri_vit2d_forward.7} parent=11 // pred_check
        %p395 = pneg %p226
      $region42: #{image_domain_mri_vit2d_forward.7} parent=11 // pred_check_branch
        %397 = sbr.rel (%p395) target = $region44
      $region43: #{image_domain_mri_vit2d_forward.7} parent=11 // pred_region
        _
      $region44: #{image_domain_mri_vit2d_forward.7} parent=11 // pred_fallthru
        _
      // Predicated region
      $region45: #{image_domain_mri_vit2d_forward.7} parent=11 // pred_check
        %p398 = pneg %p247
      $region46: #{image_domain_mri_vit2d_forward.7} parent=11 // pred_check_branch
        %400 = sbr.rel (%p398) target = $region48
      $region47: #{image_domain_mri_vit2d_forward.7} parent=11 // pred_region
        _
      $region48: #{image_domain_mri_vit2d_forward.7} parent=11 // pred_fallthru
        _
      // Predicated region
      $region49: #{image_domain_mri_vit2d_forward.7} parent=11 // pred_check
        %p401 = pneg %p268
      $region50: #{image_domain_mri_vit2d_forward.7} parent=11 // pred_check_branch
        %403 = sbr.rel (%p401) target = $region52
      $region51: #{image_domain_mri_vit2d_forward.7} parent=11 // pred_region
        _
      $region52: #{image_domain_mri_vit2d_forward.7} parent=11 // pred_fallthru
        _
      // Predicated region
      $region53: #{image_domain_mri_vit2d_forward.7} parent=11 // pred_check
        %p404 = pneg %p289
      $region54: #{image_domain_mri_vit2d_forward.7} parent=11 // pred_check_branch
        %406 = sbr.rel (%p404) target = $region56
      $region55: #{image_domain_mri_vit2d_forward.7} parent=11 // pred_region
        _
      $region56: #{image_domain_mri_vit2d_forward.7} parent=11 // pred_fallthru
        _
      // Predicated region
      $region57: #{image_domain_mri_vit2d_forward.7} parent=11 // pred_check
        %p407 = pneg %p310
      $region58: #{image_domain_mri_vit2d_forward.7} parent=11 // pred_check_branch
        %409 = sbr.rel (%p407) target = $region60
      $region59: #{image_domain_mri_vit2d_forward.7} parent=11 // pred_region
        _
      $region60: #{image_domain_mri_vit2d_forward.7} parent=11 // pred_fallthru
        _
      // Predicated region
      $region61: #{image_domain_mri_vit2d_forward.7} parent=11 // pred_check
        %p410 = pneg %p331
      $region62: #{image_domain_mri_vit2d_forward.7} parent=11 // pred_check_branch
        %412 = sbr.rel (%p410) target = $region64
      $region63: #{image_domain_mri_vit2d_forward.7} parent=11 // pred_region
        _
      $region64: #{image_domain_mri_vit2d_forward.7} parent=11 // pred_fallthru
        _
    $region12: #{image_domain_mri_vit2d_forward.7} parent=5 // pred_fallthru
      _
    %p413 = scmp.lt.s32.totalorder %s20, 2
    // Predicated region
    $region65: #{image_domain_mri_vit2d_forward.7} parent=5 // pred_check
      %p414 = pneg %p413
    $region66: #{image_domain_mri_vit2d_forward.7} parent=5 // pred_check_branch
      %416 = sbr.rel (%p414) target = $region68
    $region67: #{image_domain_mri_vit2d_forward.7} parent=5 // pred_region
      // Predicated region
      $region69: #{image_domain_mri_vit2d_forward.7} parent=67 // pred_check
        %p417 = pneg %p52
      $region70: #{image_domain_mri_vit2d_forward.7} parent=67 // pred_check_branch
        %419 = sbr.rel (%p417) target = $region72
      $region71: #{image_domain_mri_vit2d_forward.7} parent=67 // pred_region
        %p420 = scmp.lt.s32.totalorder %s27, 1
        %s421 = scalar_select %p420, %s27, 1
        %s422 = smul.addr %s421, 2
        %s423 = smul.addr %s422, 8
        %s424 = scalar_lea.vmem %s0, %s423
      $region72: #{image_domain_mri_vit2d_forward.7} parent=67 // pred_fallthru
        _
    $region68: #{image_domain_mri_vit2d_forward.7} parent=5 // pred_fallthru
      _
    %p425 = scmp.le.s32.totalorder 1, %s20
    %p426 = scmp.lt.s32.totalorder %s20, 3
    %p427 = pnand %p425, %p426
    %p428 = pneg %p427
    // Predicated region
    $region73: #{image_domain_mri_vit2d_forward.7} parent=5 // pred_check
      _
    $region74: #{image_domain_mri_vit2d_forward.7} parent=5 // pred_check_branch
      %430 = sbr.rel (%p427) target = $region76
    $region75: #{image_domain_mri_vit2d_forward.7} parent=5 // pred_region
      %s431 = ssub.s32 %s20, 1
      %p432 = scmp.lt.s32.totalorder %s29, 1
      %s433 = scalar_select %p432, %s29, 1
      %s434 = smul.addr %s433, 2
      %s435 = smul.addr %s434, 8
      %s436 = scalar_lea.vmem %s0, %s435
      %p437 = pneg %p58
      %p438 = pneg %p55
      %p439 = pneg %p79
      %p440 = pneg %p76
      %p441 = pneg %p100
      %p442 = pneg %p97
      %p443 = pneg %p121
      %p444 = pneg %p118
      %p445 = pneg %p142
      %p446 = pneg %p139
      %p447 = pneg %p163
      %p448 = pneg %p160
      %p449 = pneg %p184
      %p450 = pneg %p181
      %p451 = pneg %p205
      %p452 = pneg %p202
      %p453 = pneg %p226
      %p454 = pneg %p223
      %p455 = pneg %p247
      %p456 = pneg %p244
      %p457 = pneg %p268
      %p458 = pneg %p265
      %p459 = pneg %p289
      %p460 = pneg %p286
      %p461 = pneg %p310
      %p462 = pneg %p307
      %p463 = pneg %p331
      %p464 = pneg %p328
      %p465 = pneg %p359
      %p466 = pneg %p356
      %s467 = smul.u32 2, %s30
      %p468 = scmp.lt.s32.totalorder %s29, 1
      %s469 = scalar_select %p468, %s29, 1
      %p470 = scmp.lt.s32.totalorder %s467, 1
      %s471 = scalar_select %p470, %s467, 1
      %s472 = smul.addr %s469, 2
      %s473 = sadd.s32 %s471, %s472
      %s474 = smul.addr %s473, 8
      %s475 = scalar_lea.vmem %s14, %s474
      %p476 = scmp.lt.s32.totalorder %s29, 1
      %s477 = scalar_select %p476, %s29, 1
      %s478 = smul.addr %s477, 2
      %s479 = smul.addr %s478, 8
      %s480 = scalar_lea.vmem %s0, %s479
      %s481 = smul.u32 2, %s30
      %p482 = scmp.lt.s32.totalorder %s29, 1
      %s483 = scalar_select %p482, %s29, 1
      %p484 = scmp.lt.s32.totalorder %s481, 1
      %s485 = scalar_select %p484, %s481, 1
      %s486 = smul.addr %s483, 2
      %s487 = sadd.s32 %s485, %s486
      %s488 = smul.addr %s487, 8
      %s489 = scalar_lea.vmem %s14, %s488
      %s490 = smul.u32 2, %s30
      %v492 = vld [vmem:[%s480] sm:$0xff]
      %v493 = vld [vmem:[%s480 + $0x8] sm:$0xff]
      %v494 = vld [vmem:[%s1] sm:$0x1]
      %v495 = vld [vmem:[%s2] sm:$0x1]
      %vm496 = vcmask 261120
      %v497 = vsel %vm496, %v492, 0.0
      %498 = vadd.xlane.f32.xlu0 %v497
      %v499 = vpop.xlane.xlu0 %498
      %v500 = vsel %vm496, %v493, 0.0
      %501 = vadd.xlane.f32.xlu0 %v500
      %v502 = vpop.xlane.xlu0 %501
      %v503 = vrcp.pop 32.0
      %v504 = vmul.f32 32.0, %v503
      %v505 = vsub.f32 1.0, %v504
      %v506 = vmul.f32 %v503, %v505
      %v507 = vadd.f32 %v503, %v506
      %vm508 = vweird.f32 %v503
      %v509 = vsel %vm508, %v503, %v507
      %v510 = vmul.f32 %v499, %v509
      %v511 = vmul.f32 %v502, %v509
      %v512 = vsub.f32 %v492, %v510
      %v513 = vsub.f32 %v493, %v511
      %v514 = vmul.f32 %v512, %v512
      %v515 = vmul.f32 %v513, %v513
      %v516 = vsel %vm496, %v514, 0.0
      %517 = vadd.xlane.f32.xlu0 %v516
      %v518 = vpop.xlane.xlu0 %517
      %v519 = vsel %vm496, %v515, 0.0
      %520 = vadd.xlane.f32.xlu0 %v519
      %v521 = vpop.xlane.xlu0 %520
      %v522 = vmul.f32 %v518, %v509
      %v523 = vmul.f32 %v521, %v509
      %v524 = vadd.f32 %v522, 1e-05
      %v525 = vadd.f32 %v523, 1e-05
      %v526 = vrsqrt.pop %v524
      %v527 = vmul.f32 %v526, %v524
      %v528 = vmul.f32 %v527, %v526
      %v529 = vmul.f32 0.5, %v528
      %v530 = vsub.f32 1.5, %v529
      %v531 = vmul.f32 %v526, %v530
      %vm532 = vweird.f32 %v524
      %vm533 = vweird.f32 %v526
      %vm534 = vmor %vm532, %vm533
      %v535 = vsel %vm534, %v526, %v531
      %v536 = vrsqrt.pop %v525
      %v537 = vmul.f32 %v536, %v525
      %v538 = vmul.f32 %v537, %v536
      %v539 = vmul.f32 0.5, %v538
      %v540 = vsub.f32 1.5, %v539
      %v541 = vmul.f32 %v536, %v540
      %vm542 = vweird.f32 %v525
      %vm543 = vweird.f32 %v536
      %vm544 = vmor %vm542, %vm543
      %v545 = vsel %vm544, %v536, %v541
      %v546 = vmul.f32 %v512, %v535
      %v547 = vmul.f32 %v513, %v545
      %v549 = vperm.slane %v494, 0
      %v551 = vmul.f32 %v546, %v549
      %v552 = vmul.f32 %v547, %v549
      %v554 = vperm.slane %v495, 0
      %v556 = vadd.f32 %v551, %v554
      %v557 = vadd.f32 %v552, %v554
      %v558 = vpack.c.bf16 %v557, %v556
      %v559 = vld [vmem:[%s4] sm:$0xf]
      %v560 = vld [vmem:[%s4 + $0x4] sm:$0xf]
      %v561 = vld [vmem:[%s4 + $0x8] sm:$0xf]
      %v562 = vld [vmem:[%s4 + $0xc] sm:$0xf]
      %v567 = vunpack.c.l.b16 %v559
      %v568 = vunpack.c.l.b16 %v560
      %v569 = vunpack.c.l.b16 %v561
      %v570 = vunpack.c.l.b16 %v562
      %v571 = vpack.c.b16 %v568, %v567
      %v572 = vpack.c.b16 %v570, %v569
      %v576 = vsel %vm496, %v558, 0
      %578 = vmatpush.bf16.msra.mxu0 0
      %579 = vmatpush.bf16.msra.mxu0 0
      %580 = vmatpush.bf16.msra.mxu0 0
      %581 = vmatpush.bf16.msra.mxu0 0
      %582 = vmatpush.bf16.msra.mxu0 0
      %583 = vmatpush.bf16.msra.mxu0 0
      %584 = vmatpush.bf16.msra.mxu0 %v572
      %585 = vmatpush.bf16.msra.mxu0 %v571
      %586 = vmatmul.bf16.gmra.mxu0 %v576
      %v587 = vpop.f32.mrf.mxu0
      %v588 = vadd.f32 0.0, %v587
      %v589 = vpop.f32.mrf.mxu0
      %v590 = vadd.f32 0.0, %v589
      %591 = vdwg.mxu0
      %v592 = vpack.c.bf16 %v588, %v588
      %v593 = vpack.c.bf16 %v590, %v590
      %v594 = vld [vmem:[%s5] sm:$0xf]
      %v595 = vld [vmem:[%s5 + $0x4] sm:$0xf]
      %v596 = vld [vmem:[%s5 + $0x8] sm:$0xf]
      %v597 = vld [vmem:[%s5 + $0xc] sm:$0xf]
      %v602 = vunpack.c.l.b16 %v594
      %v603 = vunpack.c.l.b16 %v595
      %v604 = vunpack.c.l.b16 %v596
      %v605 = vunpack.c.l.b16 %v597
      %v606 = vpack.c.b16 %v603, %v602
      %v607 = vpack.c.b16 %v605, %v604
      %610 = vmatpush.bf16.msra.mxu0 0
      %611 = vmatpush.bf16.msra.mxu0 0
      %612 = vmatpush.bf16.msra.mxu0 0
      %613 = vmatpush.bf16.msra.mxu0 0
      %614 = vmatpush.bf16.msra.mxu0 0
      %615 = vmatpush.bf16.msra.mxu0 0
      %616 = vmatpush.bf16.msra.mxu0 %v607
      %617 = vmatpush.bf16.msra.mxu0 %v606
      %618 = vmatmul.bf16.gmra.mxu0 %v576
      %v619 = vpop.f32.mrf.mxu0
      %v620 = vadd.f32 0.0, %v619
      %v621 = vpop.f32.mrf.mxu0
      %v622 = vadd.f32 0.0, %v621
      %623 = vdwg.mxu0
      %v624 = vpack.c.bf16 %v620, %v620
      %v625 = vpack.c.bf16 %v622, %v622
      %s626 = smul.u32 %s30, 16
      %s627 = scalar_lea.vmem %s480, %s626
      %v628 = vld [vmem:[%s627] sm:$0xff]
      %v629 = vld [vmem:[%s627 + $0x8] sm:$0xff]
      %v630 = vsel %vm496, %v628, 0.0
      %631 = vadd.xlane.f32.xlu0 %v630
      %v632 = vpop.xlane.xlu0 %631
      %v633 = vsel %vm496, %v629, 0.0
      %634 = vadd.xlane.f32.xlu0 %v633
      %v635 = vpop.xlane.xlu0 %634
      %v636 = vmul.f32 %v632, %v509
      %v637 = vmul.f32 %v635, %v509
      %v638 = vsub.f32 %v628, %v636
      %v639 = vsub.f32 %v629, %v637
      %v640 = vmul.f32 %v638, %v638
      %v641 = vmul.f32 %v639, %v639
      %v642 = vsel %vm496, %v640, 0.0
      %643 = vadd.xlane.f32.xlu0 %v642
      %v644 = vpop.xlane.xlu0 %643
      %v645 = vsel %vm496, %v641, 0.0
      %646 = vadd.xlane.f32.xlu0 %v645
      %v647 = vpop.xlane.xlu0 %646
      %v648 = vmul.f32 %v644, %v509
      %v649 = vmul.f32 %v647, %v509
      %v650 = vadd.f32 %v648, 1e-05
      %v651 = vadd.f32 %v649, 1e-05
      %v652 = vrsqrt.pop %v650
      %v653 = vmul.f32 %v652, %v650
      %v654 = vmul.f32 %v653, %v652
      %v655 = vmul.f32 0.5, %v654
      %v656 = vsub.f32 1.5, %v655
      %v657 = vmul.f32 %v652, %v656
      %vm658 = vweird.f32 %v650
      %vm659 = vweird.f32 %v652
      %vm660 = vmor %vm658, %vm659
      %v661 = vsel %vm660, %v652, %v657
      %v662 = vrsqrt.pop %v651
      %v663 = vmul.f32 %v662, %v651
      %v664 = vmul.f32 %v663, %v662
      %v665 = vmul.f32 0.5, %v664
      %v666 = vsub.f32 1.5, %v665
      %v667 = vmul.f32 %v662, %v666
      %vm668 = vweird.f32 %v651
      %vm669 = vweird.f32 %v662
      %vm670 = vmor %vm668, %vm669
      %v671 = vsel %vm670, %v662, %v667
      %v672 = vmul.f32 %v638, %v661
      %v673 = vmul.f32 %v639, %v671
      %v674 = vmul.f32 %v672, %v549
      %v675 = vmul.f32 %v673, %v549
      %v676 = vadd.f32 %v674, %v554
      %v677 = vadd.f32 %v675, %v554
      %v678 = vpack.c.bf16 %v677, %v676
      %v679 = vld [vmem:[%s3] sm:$0xf]
      %v680 = vld [vmem:[%s3 + $0x4] sm:$0xf]
      %v681 = vld [vmem:[%s3 + $0x8] sm:$0xf]
      %v682 = vld [vmem:[%s3 + $0xc] sm:$0xf]
      %v687 = vunpack.c.l.b16 %v679
      %v688 = vunpack.c.l.b16 %v680
      %v689 = vunpack.c.l.b16 %v681
      %v690 = vunpack.c.l.b16 %v682
      %v691 = vpack.c.b16 %v688, %v687
      %v692 = vpack.c.b16 %v690, %v689
      %v696 = vsel %vm496, %v678, 0
      %698 = vmatpush.bf16.msra.mxu0 0
      %699 = vmatpush.bf16.msra.mxu0 0
      %700 = vmatpush.bf16.msra.mxu0 0
      %701 = vmatpush.bf16.msra.mxu0 0
      %702 = vmatpush.bf16.msra.mxu0 0
      %703 = vmatpush.bf16.msra.mxu0 0
      %704 = vmatpush.bf16.msra.mxu0 %v692
      %705 = vmatpush.bf16.msra.mxu0 %v691
      %706 = vmatmul.bf16.gmra.mxu0 %v696
      %v707 = vpop.f32.mrf.mxu0
      %v708 = vadd.f32 0.0, %v707
      %v709 = vpop.f32.mrf.mxu0
      %v710 = vadd.f32 0.0, %v709
      %711 = vdwg.mxu0
      %v712 = vpack.c.bf16 %v708, %v708
      %v713 = vpack.c.bf16 %v710, %v710
      %v716 = vunpack.c.l.b16 %v712
      %v717 = vunpack.c.l.b16 %v713
      %v718 = vpack.c.b16 %v717, %v716
      %v721 = vunpack.c.l.b16 %v592
      %v722 = vunpack.c.l.b16 %v593
      %v723 = vpack.c.b16 %v722, %v721
      %vm724 = vcmask 64512
      %v726 = vsel %vm724, %v718, 0
      %v729 = vsel %vm724, %v723, 0
      %731 = vmatpush.bf16.xpose.msra.mxu0 0
      %732 = vmatpush.bf16.xpose.msra.mxu0 0
      %733 = vmatpush.bf16.xpose.msra.mxu0 0
      %734 = vmatpush.bf16.xpose.msra.mxu0 0
      %735 = vmatpush.bf16.xpose.msra.mxu0 0
      %736 = vmatpush.bf16.xpose.msra.mxu0 0
      %737 = vmatpush.bf16.xpose.msra.mxu0 0
      %738 = vmatpush.bf16.xpose.msra.mxu0 %v729
      %739 = vmatmul.bf16.gmra.mxu0 %v726
      %v740 = vpop.f32.mrf.mxu0
      %v741 = vadd.f32 0.0, %v740
      %v742 = vpop.f32.mrf.mxu0
      %v743 = vadd.f32 0.0, %v742
      %744 = vdwg.mxu0
      %vm745 = vcmask 130048
      %v746 = vsel %vm745, %v741, -inf
      %747 = vmax.xlane.f32.xlu0 %v746
      %v748 = vpop.xlane.xlu0 %747
      %v749 = vsel %vm745, %v743, -inf
      %750 = vmax.xlane.f32.xlu0 %v749
      %v751 = vpop.xlane.xlu0 %750
      %v752 = vsub.f32 -inf, %v748
      %v753 = vsub.f32 -inf, %v751
      %v754 = vmul.f32 %v752, 1.442695
      %v755 = vpow.pop %v754
      %v756 = vmul.f32 %v753, 1.442695
      %v757 = vpow.pop %v756
      %v758 = vsub.f32 %v741, %v748
      %v759 = vsub.f32 %v743, %v751
      %v760 = vmul.f32 %v758, 1.442695
      %v761 = vpow.pop %v760
      %v762 = vmul.f32 %v759, 1.442695
      %v763 = vpow.pop %v762
      %v764 = vmul.f32 %v755, 0.0
      %v765 = vmul.f32 %v757, 0.0
      %v766 = vsel %vm745, %v761, 0.0
      %767 = vadd.xlane.f32.xlu0 %v766
      %v768 = vpop.xlane.xlu0 %767
      %v769 = vsel %vm745, %v763, 0.0
      %770 = vadd.xlane.f32.xlu0 %v769
      %v771 = vpop.xlane.xlu0 %770
      %v772 = vadd.f32 %v764, %v768
      %v773 = vadd.f32 %v765, %v771
      %v774 = vpack.c.bf16 %v763, %v761
      %v777 = vunpack.c.l.b16 %v624
      %v778 = vunpack.c.l.b16 %v625
      %v779 = vpack.c.b16 %v778, %v777
      %v782 = vsel %vm745, %v774, 0
      %784 = vmatpush.bf16.msra.mxu0 0
      %785 = vmatpush.bf16.msra.mxu0 0
      %786 = vmatpush.bf16.msra.mxu0 0
      %787 = vmatpush.bf16.msra.mxu0 0
      %788 = vmatpush.bf16.msra.mxu0 0
      %789 = vmatpush.bf16.msra.mxu0 0
      %790 = vmatpush.bf16.msra.mxu0 0
      %791 = vmatpush.bf16.msra.mxu0 %v779
      %792 = vmatmul.bf16.gmra.mxu0 %v782
      %v793 = vpop.f32.mrf.mxu0
      %v794 = vadd.f32 0.0, %v793
      %v795 = vpop.f32.mrf.mxu0
      %v796 = vadd.f32 0.0, %v795
      %797 = vdwg.mxu0
      %v798 = vadd.f32 %v764, %v794
      %v799 = vadd.f32 %v765, %v796
      %v800 = vrcp.pop %v772
      %v801 = vrcp.pop %v773
      %v802 = vmul.f32 %v798, %v800
      %v803 = vmul.f32 %v799, %v801
      %v804 = vpack.c.bf16 %v803, %v802
      %v805 = vld [vmem:[%s6] sm:$0xf]
      %806 = vrot.lane.b32.xlu0 %v718, 120
      %v807 = vpop.permute.xlu0 %806
      %808 = vrot.lane.b32.xlu0 %v723, 120
      %v809 = vpop.permute.xlu0 %808
      %v811 = vsel %vm724, %v807, 0
      %v814 = vsel %vm724, %v809, 0
      %816 = vmatpush.bf16.xpose.msra.mxu0 0
      %817 = vmatpush.bf16.xpose.msra.mxu0 0
      %818 = vmatpush.bf16.xpose.msra.mxu0 0
      %819 = vmatpush.bf16.xpose.msra.mxu0 0
      %820 = vmatpush.bf16.xpose.msra.mxu0 0
      %821 = vmatpush.bf16.xpose.msra.mxu0 0
      %822 = vmatpush.bf16.xpose.msra.mxu0 0
      %823 = vmatpush.bf16.xpose.msra.mxu0 %v814
      %824 = vmatmul.bf16.gmra.mxu0 %v811
      %v825 = vpop.f32.mrf.mxu0
      %v826 = vadd.f32 0.0, %v825
      %v827 = vpop.f32.mrf.mxu0
      %v828 = vadd.f32 0.0, %v827
      %829 = vdwg.mxu0
      %v830 = vsel %vm745, %v826, -inf
      %831 = vmax.xlane.f32.xlu0 %v830
      %v832 = vpop.xlane.xlu0 %831
      %v833 = vsel %vm745, %v828, -inf
      %834 = vmax.xlane.f32.xlu0 %v833
      %v835 = vpop.xlane.xlu0 %834
      %v836 = vsub.f32 -inf, %v832
      %v837 = vsub.f32 -inf, %v835
      %v838 = vmul.f32 %v836, 1.442695
      %v839 = vpow.pop %v838
      %v840 = vmul.f32 %v837, 1.442695
      %v841 = vpow.pop %v840
      %v842 = vsub.f32 %v826, %v832
      %v843 = vsub.f32 %v828, %v835
      %v844 = vmul.f32 %v842, 1.442695
      %v845 = vpow.pop %v844
      %v846 = vmul.f32 %v843, 1.442695
      %v847 = vpow.pop %v846
      %v848 = vmul.f32 %v839, 0.0
      %v849 = vmul.f32 %v841, 0.0
      %v850 = vsel %vm745, %v845, 0.0
      %851 = vadd.xlane.f32.xlu0 %v850
      %v852 = vpop.xlane.xlu0 %851
      %v853 = vsel %vm745, %v847, 0.0
      %854 = vadd.xlane.f32.xlu0 %v853
      %v855 = vpop.xlane.xlu0 %854
      %v856 = vadd.f32 %v848, %v852
      %v857 = vadd.f32 %v849, %v855
      %v858 = vpack.c.bf16 %v847, %v845
      %859 = vrot.lane.b32.xlu0 %v779, 120
      %v860 = vpop.permute.xlu0 %859
      %v863 = vsel %vm745, %v858, 0
      %865 = vmatpush.bf16.msra.mxu0 0
      %866 = vmatpush.bf16.msra.mxu0 0
      %867 = vmatpush.bf16.msra.mxu0 0
      %868 = vmatpush.bf16.msra.mxu0 0
      %869 = vmatpush.bf16.msra.mxu0 0
      %870 = vmatpush.bf16.msra.mxu0 0
      %871 = vmatpush.bf16.msra.mxu0 0
      %872 = vmatpush.bf16.msra.mxu0 %v860
      %873 = vmatmul.bf16.gmra.mxu0 %v863
      %v874 = vpop.f32.mrf.mxu0
      %v875 = vadd.f32 0.0, %v874
      %v876 = vpop.f32.mrf.mxu0
      %v877 = vadd.f32 0.0, %v876
      %878 = vdwg.mxu0
      %v879 = vadd.f32 %v848, %v875
      %v880 = vadd.f32 %v849, %v877
      %v881 = vrcp.pop %v856
      %v882 = vrcp.pop %v857
      %v883 = vmul.f32 %v879, %v881
      %v884 = vmul.f32 %v880, %v882
      %v885 = vpack.c.bf16 %v884, %v883
      %s886 = scalar_lea.vmem %s6, 4
      %v887 = vld [vmem:[%s886] sm:$0xf]
      %v889 = vsel %vm724, %v885, 0
      %vm891 = vcmask 1043456
      %v893 = vsel %vm891, %v887, 0
      %895 = vmatpush.bf16.msra.mxu0 0
      %896 = vmatpush.bf16.msra.mxu0 0
      %897 = vmatpush.bf16.msra.mxu0 0
      %898 = vmatpush.bf16.msra.mxu0 0
      %899 = vmatpush.bf16.msra.mxu0 0
      %900 = vmatpush.bf16.msra.mxu0 0
      %901 = vmatpush.bf16.msra.mxu0 0
      %902 = vmatpush.bf16.msra.mxu0 %v893
      %903 = vmatmul.bf16.gmra.mxu0 %v889
      %v904 = vpop.f32.mrf.mxu0
      %v905 = vadd.f32 0.0, %v904
      %v906 = vpop.f32.mrf.mxu0
      %v907 = vadd.f32 0.0, %v906
      %908 = vdwg.mxu0
      %v910 = vsel %vm724, %v804, 0
      %v913 = vsel %vm891, %v805, 0
      %915 = vmatpush.bf16.msra.mxu0 0
      %916 = vmatpush.bf16.msra.mxu0 0
      %917 = vmatpush.bf16.msra.mxu0 0
      %918 = vmatpush.bf16.msra.mxu0 0
      %919 = vmatpush.bf16.msra.mxu0 0
      %920 = vmatpush.bf16.msra.mxu0 0
      %921 = vmatpush.bf16.msra.mxu0 0
      %922 = vmatpush.bf16.msra.mxu0 %v913
      %923 = vmatmul.bf16.gmra.mxu0 %v910
      %v924 = vpop.f32.mrf.mxu0
      %v925 = vadd.f32 %v905, %v924
      %v926 = vpop.f32.mrf.mxu0
      %v927 = vadd.f32 %v907, %v926
      %928 = vdwg.mxu0
      %929 = vrot.lane.b32.xlu0 %v718, 112
      %v930 = vpop.permute.xlu0 %929
      %931 = vrot.lane.b32.xlu0 %v723, 112
      %v932 = vpop.permute.xlu0 %931
      %v934 = vsel %vm724, %v930, 0
      %v937 = vsel %vm724, %v932, 0
      %939 = vmatpush.bf16.xpose.msra.mxu0 0
      %940 = vmatpush.bf16.xpose.msra.mxu0 0
      %941 = vmatpush.bf16.xpose.msra.mxu0 0
      %942 = vmatpush.bf16.xpose.msra.mxu0 0
      %943 = vmatpush.bf16.xpose.msra.mxu0 0
      %944 = vmatpush.bf16.xpose.msra.mxu0 0
      %945 = vmatpush.bf16.xpose.msra.mxu0 0
      %946 = vmatpush.bf16.xpose.msra.mxu0 %v937
      %947 = vmatmul.bf16.gmra.mxu0 %v934
      %v948 = vpop.f32.mrf.mxu0
      %v949 = vadd.f32 0.0, %v948
      %v950 = vpop.f32.mrf.mxu0
      %v951 = vadd.f32 0.0, %v950
      %952 = vdwg.mxu0
      %v953 = vsel %vm745, %v949, -inf
      %954 = vmax.xlane.f32.xlu0 %v953
      %v955 = vpop.xlane.xlu0 %954
      %v956 = vsel %vm745, %v951, -inf
      %957 = vmax.xlane.f32.xlu0 %v956
      %v958 = vpop.xlane.xlu0 %957
      %v959 = vsub.f32 -inf, %v955
      %v960 = vsub.f32 -inf, %v958
      %v961 = vmul.f32 %v959, 1.442695
      %v962 = vpow.pop %v961
      %v963 = vmul.f32 %v960, 1.442695
      %v964 = vpow.pop %v963
      %v965 = vsub.f32 %v949, %v955
      %v966 = vsub.f32 %v951, %v958
      %v967 = vmul.f32 %v965, 1.442695
      %v968 = vpow.pop %v967
      %v969 = vmul.f32 %v966, 1.442695
      %v970 = vpow.pop %v969
      %v971 = vmul.f32 %v962, 0.0
      %v972 = vmul.f32 %v964, 0.0
      %v973 = vsel %vm745, %v968, 0.0
      %974 = vadd.xlane.f32.xlu0 %v973
      %v975 = vpop.xlane.xlu0 %974
      %v976 = vsel %vm745, %v970, 0.0
      %977 = vadd.xlane.f32.xlu0 %v976
      %v978 = vpop.xlane.xlu0 %977
      %v979 = vadd.f32 %v971, %v975
      %v980 = vadd.f32 %v972, %v978
      %v981 = vpack.c.bf16 %v970, %v968
      %982 = vrot.lane.b32.xlu0 %v779, 112
      %v983 = vpop.permute.xlu0 %982
      %v986 = vsel %vm745, %v981, 0
      %988 = vmatpush.bf16.msra.mxu0 0
      %989 = vmatpush.bf16.msra.mxu0 0
      %990 = vmatpush.bf16.msra.mxu0 0
      %991 = vmatpush.bf16.msra.mxu0 0
      %992 = vmatpush.bf16.msra.mxu0 0
      %993 = vmatpush.bf16.msra.mxu0 0
      %994 = vmatpush.bf16.msra.mxu0 0
      %995 = vmatpush.bf16.msra.mxu0 %v983
      %996 = vmatmul.bf16.gmra.mxu0 %v986
      %v997 = vpop.f32.mrf.mxu0
      %v998 = vadd.f32 0.0, %v997
      %v999 = vpop.f32.mrf.mxu0
      %v1000 = vadd.f32 0.0, %v999
      %1001 = vdwg.mxu0
      %v1002 = vadd.f32 %v971, %v998
      %v1003 = vadd.f32 %v972, %v1000
      %v1004 = vrcp.pop %v979
      %v1005 = vrcp.pop %v980
      %v1006 = vmul.f32 %v1002, %v1004
      %v1007 = vmul.f32 %v1003, %v1005
      %v1008 = vpack.c.bf16 %v1007, %v1006
      %s1009 = scalar_lea.vmem %s6, 8
      %v1010 = vld [vmem:[%s1009] sm:$0xf]
      %v1012 = vsel %vm724, %v1008, 0
      %v1015 = vsel %vm891, %v1010, 0
      %1017 = vmatpush.bf16.msra.mxu0 0
      %1018 = vmatpush.bf16.msra.mxu0 0
      %1019 = vmatpush.bf16.msra.mxu0 0
      %1020 = vmatpush.bf16.msra.mxu0 0
      %1021 = vmatpush.bf16.msra.mxu0 0
      %1022 = vmatpush.bf16.msra.mxu0 0
      %1023 = vmatpush.bf16.msra.mxu0 0
      %1024 = vmatpush.bf16.msra.mxu0 %v1015
      %1025 = vmatmul.bf16.gmra.mxu0 %v1012
      %v1026 = vpop.f32.mrf.mxu0
      %v1027 = vadd.f32 0.0, %v1026
      %v1028 = vpop.f32.mrf.mxu0
      %v1029 = vadd.f32 0.0, %v1028
      %1030 = vdwg.mxu0
      %v1031 = vadd.f32 %v925, %v1027
      %v1032 = vadd.f32 %v927, %v1029
      %1033 = vrot.lane.b32.xlu0 %v718, 104
      %v1034 = vpop.permute.xlu0 %1033
      %1035 = vrot.lane.b32.xlu0 %v723, 104
      %v1036 = vpop.permute.xlu0 %1035
      %v1038 = vsel %vm724, %v1034, 0
      %v1041 = vsel %vm724, %v1036, 0
      %1043 = vmatpush.bf16.xpose.msra.mxu0 0
      %1044 = vmatpush.bf16.xpose.msra.mxu0 0
      %1045 = vmatpush.bf16.xpose.msra.mxu0 0
      %1046 = vmatpush.bf16.xpose.msra.mxu0 0
      %1047 = vmatpush.bf16.xpose.msra.mxu0 0
      %1048 = vmatpush.bf16.xpose.msra.mxu0 0
      %1049 = vmatpush.bf16.xpose.msra.mxu0 0
      %1050 = vmatpush.bf16.xpose.msra.mxu0 %v1041
      %1051 = vmatmul.bf16.gmra.mxu0 %v1038
      %v1052 = vpop.f32.mrf.mxu0
      %v1053 = vadd.f32 0.0, %v1052
      %v1054 = vpop.f32.mrf.mxu0
      %v1055 = vadd.f32 0.0, %v1054
      %1056 = vdwg.mxu0
      %v1057 = vsel %vm745, %v1053, -inf
      %1058 = vmax.xlane.f32.xlu0 %v1057
      %v1059 = vpop.xlane.xlu0 %1058
      %v1060 = vsel %vm745, %v1055, -inf
      %1061 = vmax.xlane.f32.xlu0 %v1060
      %v1062 = vpop.xlane.xlu0 %1061
      %v1063 = vsub.f32 -inf, %v1059
      %v1064 = vsub.f32 -inf, %v1062
      %v1065 = vmul.f32 %v1063, 1.442695
      %v1066 = vpow.pop %v1065
      %v1067 = vmul.f32 %v1064, 1.442695
      %v1068 = vpow.pop %v1067
      %v1069 = vsub.f32 %v1053, %v1059
      %v1070 = vsub.f32 %v1055, %v1062
      %v1071 = vmul.f32 %v1069, 1.442695
      %v1072 = vpow.pop %v1071
      %v1073 = vmul.f32 %v1070, 1.442695
      %v1074 = vpow.pop %v1073
      %v1075 = vmul.f32 %v1066, 0.0
      %v1076 = vmul.f32 %v1068, 0.0
      %v1077 = vsel %vm745, %v1072, 0.0
      %1078 = vadd.xlane.f32.xlu0 %v1077
      %v1079 = vpop.xlane.xlu0 %1078
      %v1080 = vsel %vm745, %v1074, 0.0
      %1081 = vadd.xlane.f32.xlu0 %v1080
      %v1082 = vpop.xlane.xlu0 %1081
      %v1083 = vadd.f32 %v1075, %v1079
      %v1084 = vadd.f32 %v1076, %v1082
      %v1085 = vpack.c.bf16 %v1074, %v1072
      %1086 = vrot.lane.b32.xlu0 %v779, 104
      %v1087 = vpop.permute.xlu0 %1086
      %v1090 = vsel %vm745, %v1085, 0
      %1092 = vmatpush.bf16.msra.mxu0 0
      %1093 = vmatpush.bf16.msra.mxu0 0
      %1094 = vmatpush.bf16.msra.mxu0 0
      %1095 = vmatpush.bf16.msra.mxu0 0
      %1096 = vmatpush.bf16.msra.mxu0 0
      %1097 = vmatpush.bf16.msra.mxu0 0
      %1098 = vmatpush.bf16.msra.mxu0 0
      %1099 = vmatpush.bf16.msra.mxu0 %v1087
      %1100 = vmatmul.bf16.gmra.mxu0 %v1090
      %v1101 = vpop.f32.mrf.mxu0
      %v1102 = vadd.f32 0.0, %v1101
      %v1103 = vpop.f32.mrf.mxu0
      %v1104 = vadd.f32 0.0, %v1103
      %1105 = vdwg.mxu0
      %v1106 = vadd.f32 %v1075, %v1102
      %v1107 = vadd.f32 %v1076, %v1104
      %v1108 = vrcp.pop %v1083
      %v1109 = vrcp.pop %v1084
      %v1110 = vmul.f32 %v1106, %v1108
      %v1111 = vmul.f32 %v1107, %v1109
      %v1112 = vpack.c.bf16 %v1111, %v1110
      %s1113 = scalar_lea.vmem %s6, 12
      %v1114 = vld [vmem:[%s1113] sm:$0xf]
      %v1116 = vsel %vm724, %v1112, 0
      %v1119 = vsel %vm891, %v1114, 0
      %1121 = vmatpush.bf16.msra.mxu0 0
      %1122 = vmatpush.bf16.msra.mxu0 0
      %1123 = vmatpush.bf16.msra.mxu0 0
      %1124 = vmatpush.bf16.msra.mxu0 0
      %1125 = vmatpush.bf16.msra.mxu0 0
      %1126 = vmatpush.bf16.msra.mxu0 0
      %1127 = vmatpush.bf16.msra.mxu0 0
      %1128 = vmatpush.bf16.msra.mxu0 %v1119
      %1129 = vmatmul.bf16.gmra.mxu0 %v1116
      %v1130 = vpop.f32.mrf.mxu0
      %v1131 = vadd.f32 0.0, %v1130
      %v1132 = vpop.f32.mrf.mxu0
      %v1133 = vadd.f32 0.0, %v1132
      %1134 = vdwg.mxu0
      %v1135 = vadd.f32 %v1031, %v1131
      %v1136 = vadd.f32 %v1032, %v1133
      %v1137 = vadd.f32 %v628, %v1135
      %v1138 = vadd.f32 %v629, %v1136
      %v1139 = vld [vmem:[%s7] sm:$0x1]
      %v1141 = vperm.slane %v1139, 0
      %v1143 = vadd.f32 %v1137, %v1141
      %v1144 = vadd.f32 %v1138, %v1141
      %v1145 = vld [vmem:[%s8] sm:$0x1]
      %v1146 = vld [vmem:[%s9] sm:$0x1]
      %v1147 = vsel %vm496, %v1143, 0.0
      %1148 = vadd.xlane.f32.xlu0 %v1147
      %v1149 = vpop.xlane.xlu0 %1148
      %v1150 = vsel %vm496, %v1144, 0.0
      %1151 = vadd.xlane.f32.xlu0 %v1150
      %v1152 = vpop.xlane.xlu0 %1151
      %v1153 = vmul.f32 %v1149, %v509
      %v1154 = vmul.f32 %v1152, %v509
      %v1155 = vsub.f32 %v1143, %v1153
      %v1156 = vsub.f32 %v1144, %v1154
      %v1157 = vmul.f32 %v1155, %v1155
      %v1158 = vmul.f32 %v1156, %v1156
      %v1159 = vsel %vm496, %v1157, 0.0
      %1160 = vadd.xlane.f32.xlu0 %v1159
      %v1161 = vpop.xlane.xlu0 %1160
      %v1162 = vsel %vm496, %v1158, 0.0
      %1163 = vadd.xlane.f32.xlu0 %v1162
      %v1164 = vpop.xlane.xlu0 %1163
      %v1165 = vmul.f32 %v1161, %v509
      %v1166 = vmul.f32 %v1164, %v509
      %v1167 = vadd.f32 %v1165, 1e-05
      %v1168 = vadd.f32 %v1166, 1e-05
      %v1169 = vrsqrt.pop %v1167
      %v1170 = vmul.f32 %v1169, %v1167
      %v1171 = vmul.f32 %v1170, %v1169
      %v1172 = vmul.f32 0.5, %v1171
      %v1173 = vsub.f32 1.5, %v1172
      %v1174 = vmul.f32 %v1169, %v1173
      %vm1175 = vweird.f32 %v1167
      %vm1176 = vweird.f32 %v1169
      %vm1177 = vmor %vm1175, %vm1176
      %v1178 = vsel %vm1177, %v1169, %v1174
      %v1179 = vrsqrt.pop %v1168
      %v1180 = vmul.f32 %v1179, %v1168
      %v1181 = vmul.f32 %v1180, %v1179
      %v1182 = vmul.f32 0.5, %v1181
      %v1183 = vsub.f32 1.5, %v1182
      %v1184 = vmul.f32 %v1179, %v1183
      %vm1185 = vweird.f32 %v1168
      %vm1186 = vweird.f32 %v1179
      %vm1187 = vmor %vm1185, %vm1186
      %v1188 = vsel %vm1187, %v1179, %v1184
      %v1189 = vmul.f32 %v1155, %v1178
      %v1190 = vmul.f32 %v1156, %v1188
      %v1192 = vperm.slane %v1145, 0
      %v1194 = vmul.f32 %v1189, %v1192
      %v1195 = vmul.f32 %v1190, %v1192
      %v1197 = vperm.slane %v1146, 0
      %v1199 = vadd.f32 %v1194, %v1197
      %v1200 = vadd.f32 %v1195, %v1197
      %v1201 = vpack.c.bf16 %v1200, %v1199
      %v1202 = vld [vmem:[%s10] sm:$0xf]
      %v1203 = vld [vmem:[%s10 + $0x4] sm:$0xf]
      %v1204 = vld [vmem:[%s10 + $0x8] sm:$0xf]
      %v1205 = vld [vmem:[%s10 + $0xc] sm:$0xf]
      %v1206 = vld [vmem:[%s11] sm:$0x1]
      %v1208 = vperm.slane %v1206, 0
      %v1214 = vunpack.c.l.b16 %v1202
      %v1215 = vunpack.c.l.b16 %v1203
      %v1216 = vunpack.c.l.b16 %v1204
      %v1217 = vunpack.c.l.b16 %v1205
      %v1218 = vpack.c.b16 %v1215, %v1214
      %v1219 = vpack.c.b16 %v1217, %v1216
      %v1223 = vsel %vm496, %v1201, 0
      %1225 = vmatpush.bf16.msra.mxu0 0
      %1226 = vmatpush.bf16.msra.mxu0 0
      %1227 = vmatpush.bf16.msra.mxu0 0
      %1228 = vmatpush.bf16.msra.mxu0 0
      %1229 = vmatpush.bf16.msra.mxu0 0
      %1230 = vmatpush.bf16.msra.mxu0 0
      %1231 = vmatpush.bf16.msra.mxu0 %v1219
      %1232 = vmatpush.bf16.msra.mxu0 %v1218
      %1233 = vmatmul.bf16.gmra.mxu0 %v1223
      %v1234 = vpop.f32.mrf.mxu0
      %v1235 = vadd.f32 %v1208, %v1234
      %v1236 = vpop.f32.mrf.mxu0
      %v1237 = vadd.f32 %v1208, %v1236
      %1238 = vdwg.mxu0
      %v1239 = vmul.f32 %v1235, 0.5
      %v1240 = vmul.f32 %v1237, 0.5
      %v1241 = vmul.f32 %v1235, 0.70710677
      %v1242 = vmul.f32 %v1237, 0.70710677
      %v1243 = vand.u32 2147483647, %v1241
      %v1244 = vand.u32 2147483647, %v1242
      %v1245 = vmul.f32 %v1243, 0.3275911
      %v1246 = vmul.f32 %v1244, 0.3275911
      %v1247 = vadd.f32 %v1245, 1.0
      %v1248 = vadd.f32 %v1246, 1.0
      %v1249 = vrcp.pop %v1247
      %v1250 = vmul.f32 %v1247, %v1249
      %v1251 = vsub.f32 1.0, %v1250
      %v1252 = vmul.f32 %v1249, %v1251
      %v1253 = vadd.f32 %v1249, %v1252
      %vm1254 = vweird.f32 %v1247
      %vm1255 = vweird.f32 %v1249
      %vm1256 = vmor %vm1254, %vm1255
      %v1257 = vsel %vm1256, %v1249, %v1253
      %v1258 = vand.u32 2147483647, %v1247
      %vm1259 = vcmp.eq.f32.partialorder %v1258, 8.507059e+37
      %v1260 = vand.u32 %v1247, 2147483648
      %v1261 = vor.u32 1.1754944e-38, %v1260
      %v1262 = vsel %vm1259, %v1261, %v1257
      %v1263 = vmul.f32 1.0, %v1262
      %v1264 = vrcp.pop %v1248
      %v1265 = vmul.f32 %v1248, %v1264
      %v1266 = vsub.f32 1.0, %v1265
      %v1267 = vmul.f32 %v1264, %v1266
      %v1268 = vadd.f32 %v1264, %v1267
      %vm1269 = vweird.f32 %v1248
      %vm1270 = vweird.f32 %v1264
      %vm1271 = vmor %vm1269, %vm1270
      %v1272 = vsel %vm1271, %v1264, %v1268
      %v1273 = vand.u32 2147483647, %v1248
      %vm1274 = vcmp.eq.f32.partialorder %v1273, 8.507059e+37
      %v1275 = vand.u32 %v1248, 2147483648
      %v1276 = vor.u32 1.1754944e-38, %v1275
      %v1277 = vsel %vm1274, %v1276, %v1272
      %v1278 = vmul.f32 1.0, %v1277
      %v1279 = vmul.f32 %v1263, 1.0614054
      %v1280 = vmul.f32 %v1278, 1.0614054
      %v1281 = vadd.f32 %v1279, -1.4531521
      %v1282 = vadd.f32 %v1280, -1.4531521
      %v1283 = vmul.f32 %v1281, %v1263
      %v1284 = vmul.f32 %v1282, %v1278
      %v1285 = vadd.f32 %v1283, 1.4214138
      %v1286 = vadd.f32 %v1284, 1.4214138
      %v1287 = vmul.f32 %v1285, %v1263
      %v1288 = vmul.f32 %v1286, %v1278
      %v1289 = vadd.f32 %v1287, -0.28449672
      %v1290 = vadd.f32 %v1288, -0.28449672
      %v1291 = vmul.f32 %v1289, %v1263
      %v1292 = vmul.f32 %v1290, %v1278
      %v1293 = vadd.f32 %v1291, 0.2548296
      %v1294 = vadd.f32 %v1292, 0.2548296
      %v1295 = vmul.f32 %v1293, %v1263
      %v1296 = vmul.f32 %v1294, %v1278
      %v1297 = vsub.f32 0.0, %v1243
      %v1298 = vsub.f32 0.0, %v1244
      %v1299 = vmul.f32 %v1297, %v1243
      %v1300 = vmul.f32 %v1298, %v1244
      %v1301 = vmul.f32 %v1299, 1.442695
      %v1302 = vpow.pop %v1301
      %v1303 = vmul.f32 %v1300, 1.442695
      %v1304 = vpow.pop %v1303
      %v1305 = vmul.f32 %v1295, %v1302
      %v1306 = vmul.f32 %v1296, %v1304
      %v1307 = vsub.f32 1.0, %v1305
      %v1308 = vsub.f32 1.0, %v1306
      %vm1309 = vcmp.ge.f32.partialorder %v1241, 0.0
      %vm1310 = vcmp.ge.f32.partialorder %v1242, 0.0
      %v1311 = vsub.f32 0.0, %v1307
      %v1312 = vsub.f32 0.0, %v1308
      %v1313 = vsel %vm1309, %v1307, %v1311
      %v1314 = vsel %vm1310, %v1308, %v1312
      %v1315 = vadd.f32 %v1313, 1.0
      %v1316 = vadd.f32 %v1314, 1.0
      %v1317 = vmul.f32 %v1239, %v1315
      %v1318 = vmul.f32 %v1240, %v1316
      %v1319 = vpack.c.bf16 %v1318, %v1317
      %v1320 = vld [vmem:[%s12] sm:$0xf]
      %v1321 = vld [vmem:[%s12 + $0x4] sm:$0xf]
      %v1322 = vld [vmem:[%s12 + $0x8] sm:$0xf]
      %v1323 = vld [vmem:[%s12 + $0xc] sm:$0xf]
      %v1324 = vld [vmem:[%s12 + $0x10] sm:$0xf]
      %v1325 = vld [vmem:[%s12 + $0x14] sm:$0xf]
      %v1326 = vld [vmem:[%s12 + $0x18] sm:$0xf]
      %v1327 = vld [vmem:[%s12 + $0x1c] sm:$0xf]
      %v1328 = vld [vmem:[%s12 + $0x20] sm:$0xf]
      %v1329 = vld [vmem:[%s12 + $0x24] sm:$0xf]
      %v1330 = vld [vmem:[%s12 + $0x28] sm:$0xf]
      %v1331 = vld [vmem:[%s12 + $0x2c] sm:$0xf]
      %v1332 = vld [vmem:[%s12 + $0x30] sm:$0xf]
      %v1333 = vld [vmem:[%s12 + $0x34] sm:$0xf]
      %v1334 = vld [vmem:[%s12 + $0x38] sm:$0xf]
      %v1335 = vld [vmem:[%s12 + $0x3c] sm:$0xf]
      %v1336 = vld [vmem:[%s13] sm:$0x1]
      %v1338 = vperm.slane %v1336, 0
      %v1356 = vunpack.c.l.b16 %v1320
      %v1357 = vunpack.c.l.b16 %v1321
      %v1358 = vunpack.c.l.b16 %v1322
      %v1359 = vunpack.c.l.b16 %v1323
      %v1360 = vunpack.c.l.b16 %v1324
      %v1361 = vunpack.c.l.b16 %v1325
      %v1362 = vunpack.c.l.b16 %v1326
      %v1363 = vunpack.c.l.b16 %v1327
      %v1364 = vunpack.c.l.b16 %v1328
      %v1365 = vunpack.c.l.b16 %v1329
      %v1366 = vunpack.c.l.b16 %v1330
      %v1367 = vunpack.c.l.b16 %v1331
      %v1368 = vunpack.c.l.b16 %v1332
      %v1369 = vunpack.c.l.b16 %v1333
      %v1370 = vunpack.c.l.b16 %v1334
      %v1371 = vunpack.c.l.b16 %v1335
      %v1372 = vpack.c.b16 %v1357, %v1356
      %v1373 = vpack.c.b16 %v1359, %v1358
      %v1374 = vpack.c.b16 %v1361, %v1360
      %v1375 = vpack.c.b16 %v1363, %v1362
      %v1376 = vpack.c.b16 %v1365, %v1364
      %v1377 = vpack.c.b16 %v1367, %v1366
      %v1378 = vpack.c.b16 %v1369, %v1368
      %v1379 = vpack.c.b16 %v1371, %v1370
      %1388 = vmatpush.bf16.msra.mxu0 %v1379
      %1389 = vmatpush.bf16.msra.mxu0 %v1378
      %1390 = vmatpush.bf16.msra.mxu0 %v1377
      %1391 = vmatpush.bf16.msra.mxu0 %v1376
      %1392 = vmatpush.bf16.msra.mxu0 %v1375
      %1393 = vmatpush.bf16.msra.mxu0 %v1374
      %1394 = vmatpush.bf16.msra.mxu0 %v1373
      %1395 = vmatpush.bf16.msra.mxu0 %v1372
      %1396 = vmatmul.bf16.gmra.mxu0 %v1319
      %v1397 = vpop.f32.mrf.mxu0
      %v1398 = vadd.f32 %v1338, %v1397
      %v1399 = vpop.f32.mrf.mxu0
      %v1400 = vadd.f32 %v1338, %v1399
      %1401 = vdwg.mxu0
      %v1402 = vadd.f32 %v1143, %v1398
      %v1403 = vadd.f32 %v1144, %v1400
      %1404 = vst.msk [vmem:[%s489] sm:$0xff] %vm496, %v1402
      %1405 = vst.msk [vmem:[%s489 + $0x8] sm:$0xff] %vm496, %v1403
      %s1406 = smul.u32 2, %s30
      %p1407 = scmp.lt.s32.totalorder %s29, 1
      %s1408 = scalar_select %p1407, %s29, 1
      %p1409 = scmp.lt.s32.totalorder %s1406, 1
      %s1410 = scalar_select %p1409, %s1406, 1
      %s1411 = smul.addr %s1408, 2
      %s1412 = sadd.s32 %s1410, %s1411
      %s1413 = smul.addr %s1412, 8
      %s1414 = scalar_lea.vmem %s14, %s1413
      // Predicated region
      $region77: #{image_domain_mri_vit2d_forward.7} parent=75 // pred_check
        %p1415 = pneg %p356
      $region78: #{image_domain_mri_vit2d_forward.7} parent=75 // pred_check_branch
        %1417 = sbr.rel (%p1415) target = $region80
      $region79: #{image_domain_mri_vit2d_forward.7} parent=75 // pred_region
        %s1418 = smul.u32 2, %s30
      $region80: #{image_domain_mri_vit2d_forward.7} parent=75 // pred_fallthru
        _
    $region76: #{image_domain_mri_vit2d_forward.7} parent=5 // pred_fallthru
      _
    %p1419 = scmp.le.s32.totalorder 2, %s20
    // Predicated region
    $region81: #{image_domain_mri_vit2d_forward.7} parent=5 // pred_check
      %p1420 = pneg %p1419
    $region82: #{image_domain_mri_vit2d_forward.7} parent=5 // pred_check_branch
      %1422 = sbr.rel (%p1420) target = $region84
    $region83: #{image_domain_mri_vit2d_forward.7} parent=5 // pred_region
      %s1423 = ssub.s32 %s20, 2
      // Predicated region
      $region85: #{image_domain_mri_vit2d_forward.7} parent=83 // pred_check
        %p1424 = pneg %p362
      $region86: #{image_domain_mri_vit2d_forward.7} parent=83 // pred_check_branch
        %1426 = sbr.rel (%p1424) target = $region88
      $region87: #{image_domain_mri_vit2d_forward.7} parent=83 // pred_region
        %s1427 = smul.u32 2, %s32
        %p1428 = scmp.lt.s32.totalorder %s31, 1
        %s1429 = scalar_select %p1428, %s31, 1
        %p1430 = scmp.lt.s32.totalorder %s1427, 1
        %s1431 = scalar_select %p1430, %s1427, 1
        %s1432 = smul.addr %s1429, 2
        %s1433 = sadd.s32 %s1431, %s1432
        %s1434 = smul.addr %s1433, 8
        %s1435 = scalar_lea.vmem %s14, %s1434
      $region88: #{image_domain_mri_vit2d_forward.7} parent=83 // pred_fallthru
        _
    $region84: #{image_domain_mri_vit2d_forward.7} parent=5 // pred_fallthru
      _
  $region6: #{image_domain_mri_vit2d_forward.7} parent=0 // loop_footer
    %s24 = sadd.s32 1, %s20
  $region7: #{image_domain_mri_vit2d_forward.7} parent=0 // loop_footer_branch
    %19 = sbr.rel target = $region3
  $region8: #{image_domain_mri_vit2d_forward.7} parent=0 // loop_exit
    _

</llo_original>
